<compile_context>
chip_gen: v7x
topology: tpu7x:2x2x1
jax: 0.10.0
libtpu: 0.0.40
codegen_flags: <defaults>
</compile_context>

<pallas_src>
import math
import functools

import numpy as np
import jax
import jax.numpy as jnp
from jax import lax
from jax.experimental import pallas as pl
from jax.experimental.pallas import tpu as pltpu

# bf16 MXU operands (v6e/v7x native, half the weight DMA); accumulation is f32.
# Set to jnp.float32 for bit-closer parity with the PyTorch float32 forward.
_MXU_DTYPE = jnp.bfloat16

_NEG_INF = -1e30   # large-negative additive mask (finite: no exp(-inf) NaN risk)
_LN_EPS = 1e-5     # PyTorch LayerNorm eps


# ----------------------------------------------------------------------------
# Small helpers
# ----------------------------------------------------------------------------

def _nbytes(a):
    return int(a.size) * int(a.dtype.itemsize)


def _vmem_limit(block_bytes, extra=0):
    est = 2 * int(block_bytes) + int(extra) + (2 << 20)
    return int(min(max(est, 16 << 20), 64 << 20))   # 64 MiB cap: valid on v7x


def _row_tile(m, target=256):
    """Largest divisor of m <= target that is a multiple of 8, preferring >=2 blocks."""
    best = None
    for t in range(min(m, target), 7, -1):
        if m % t == 0 and t % 8 == 0:
            if m // t >= 2:
                return t
            if best is None:
                best = t
    return best if best is not None else m


def _f_tile(f, target=512):
    """d_ff reduction tile: a multiple of 128 dividing f, else the full f."""
    if f <= target:
        return f
    for t in range(target, 127, -128):
        if f % t == 0 and t % 128 == 0:
            return t
    return f


# ----------------------------------------------------------------------------
# In-kernel math helpers
# ----------------------------------------------------------------------------

def _mxu_dot(a, b):
    return jnp.dot(a.astype(_MXU_DTYPE), b.astype(_MXU_DTYPE),
                   preferred_element_type=jnp.float32)


def _mxu_dot_t(a, b):  # a @ b.T, contracting last dims (no explicit transpose)
    return lax.dot_general(a.astype(_MXU_DTYPE), b.astype(_MXU_DTYPE),
                           (((1,), (1,)), ((), ())),
                           preferred_element_type=jnp.float32)


def _layernorm(y, g, b):  # y: f32 (rows, D); g/b: (1, D); PyTorch eps, biased var
    mean = jnp.mean(y, axis=-1, keepdims=True)
    var = jnp.mean(jnp.square(y - mean), axis=-1, keepdims=True)
    return (y - mean) * lax.rsqrt(var + _LN_EPS) * g + b


def _softmax_rows(s):  # f32, exact divide for parity with torch.softmax
    m = jnp.max(s, axis=-1, keepdims=True)
    p = jnp.exp(s - m)
    return p / jnp.sum(p, axis=-1, keepdims=True)


# ----------------------------------------------------------------------------
# Kernels
# ----------------------------------------------------------------------------

def _embed_kernel(x_ref, pe_ref, w_ref, b_ref, out_ref):
    # out = x @ W_embed + b_embed + pe   (sqrt(d_model) folded into W/b at init)
    x = x_ref[0]                                        # (ts, input_dim) f32
    y = _mxu_dot(x, w_ref[...]) + b_ref[...] + pe_ref[...]
    out_ref[0] = y.astype(out_ref.dtype)


def _attn_block_kernel(x_ref, wqkv_ref, bqkv_ref, wo_ref, bo_ref, g_ref, beta_ref,
                       out_ref, *, nhead, causal):
    """Full self-attention sublayer for one batch element:
       LayerNorm(x + MHA(x) @ Wo + bo).  Fused QKV, per-head loop (no cross-head
       work), in-kernel iota causal mask, lane-dense (S, D) output."""
    x = x_ref[0]                                        # (S, D) f32
    S, D = x.shape
    dh = D // nhead
    qkv = _mxu_dot(x, wqkv_ref[...]) + bqkv_ref[...]    # (S, 3D) f32; q pre-scaled 1/sqrt(dh)
    if causal:
        row = lax.broadcasted_iota(jnp.int32, (S, S), 0)
        col = lax.broadcasted_iota(jnp.int32, (S, S), 1)
        mask = jnp.where(col <= row, 0.0, _NEG_INF).astype(jnp.float32)
    heads = []
    for h in range(nhead):                              # static unroll
        q = qkv[:, h * dh:(h + 1) * dh]
        k = qkv[:, D + h * dh:D + (h + 1) * dh]
        v = qkv[:, 2 * D + h * dh:2 * D + (h + 1) * dh]
        s = _mxu_dot_t(q, k)                            # (S, S) f32
        if causal:
            s = s + mask
        p = _softmax_rows(s)
        heads.append(_mxu_dot(p, v))                    # (S, dh) f32
    o = jnp.concatenate(heads, axis=-1)                 # (S, D) lane-dense
    y = x + _mxu_dot(o, wo_ref[...]) + bo_ref[...]
    out_ref[0] = _layernorm(y, g_ref[...], beta_ref[...]).astype(out_ref.dtype)


def _cross_attn_block_kernel(x_ref, mem_ref, wq_ref, bq_ref, wkv_ref, bkv_ref,
                             wo_ref, bo_ref, g_ref, beta_ref, out_ref, *, nhead):
    """Full cross-attention sublayer for one batch element (no mask)."""
    x = x_ref[0]                                        # (Sq, D) f32
    m = mem_ref[0]                                      # (Sk, D) f32
    _, D = x.shape
    dh = D // nhead
    q = _mxu_dot(x, wq_ref[...]) + bq_ref[...]          # (Sq, D); pre-scaled 1/sqrt(dh)
    kv = _mxu_dot(m, wkv_ref[...]) + bkv_ref[...]       # (Sk, 2D)
    heads = []
    for h in range(nhead):
        qh = q[:, h * dh:(h + 1) * dh]
        kh = kv[:, h * dh:(h + 1) * dh]
        vh = kv[:, D + h * dh:D + (h + 1) * dh]
        p = _softmax_rows(_mxu_dot_t(qh, kh))
        heads.append(_mxu_dot(p, vh))
    o = jnp.concatenate(heads, axis=-1)
    y = x + _mxu_dot(o, wo_ref[...]) + bo_ref[...]
    out_ref[0] = _layernorm(y, g_ref[...], beta_ref[...]).astype(out_ref.dtype)


def _ffn_addnorm_kernel(x_ref, w1_ref, b1_ref, w2_ref, b2_ref, g_ref, beta_ref,
                        out_ref, acc_ref):
    """LayerNorm(x + relu(x @ W1 + b1) @ W2 + b2).  d_ff is tiled over grid axis 1
       with a VMEM accumulator, so W1/W2 are streamed, never whole-in-VMEM."""
    f = pl.program_id(1)

    @pl.when(f == 0)
    def _():
        acc_ref[...] = jnp.zeros_like(acc_ref)

    x = x_ref[...]                                      # (tm, D) f32
    h = jnp.maximum(_mxu_dot(x, w1_ref[...]) + b1_ref[...], 0.0)
    acc_ref[...] += _mxu_dot(h, w2_ref[...])

    @pl.when(f == pl.num_programs(1) - 1)
    def _():
        y = x + acc_ref[...] + b2_ref[...]
        out_ref[...] = _layernorm(y, g_ref[...], beta_ref[...]).astype(out_ref.dtype)


def _norm_kernel(x_ref, g_ref, b_ref, out_ref):
    out_ref[...] = _layernorm(x_ref[...], g_ref[...], b_ref[...]).astype(out_ref.dtype)


def _norm_linear_kernel(x_ref, g_ref, b_ref, w_ref, bo_ref, out_ref):
    # final decoder LayerNorm fused with decoder_output_layer
    y = _layernorm(x_ref[...], g_ref[...], b_ref[...])
    out_ref[...] = (_mxu_dot(y, w_ref[...]) + bo_ref[...]).astype(out_ref.dtype)


# ----------------------------------------------------------------------------
# pallas_call wrappers
# ----------------------------------------------------------------------------

def pallas_embed(x_bs, pe, w, b):
    """(B, S, input_dim) -> (B, S, D): input linear (sqrt(d_model) folded) + pos enc."""
    B, S, Din = x_bs.shape
    D = w.shape[1]
    ts = _row_tile(S)
    blk = 4 * (ts * Din + 2 * ts * D + D) + _nbytes(w)
    cost = pl.CostEstimate(flops=2 * B * S * Din * D + 2 * B * S * D,
                           transcendentals=0,
                           bytes_accessed=4 * (B * S * Din + B * S * D + S * D) + _nbytes(w))
    return pl.pallas_call(
        _embed_kernel,
        out_shape=jax.ShapeDtypeStruct((B, S, D), jnp.float32),
        grid=(B, S // ts),
        in_specs=[
            pl.BlockSpec((1, ts, Din), lambda bb, ss: (bb, ss, 0)),
            pl.BlockSpec((ts, D), lambda bb, ss: (ss, 0)),
            pl.BlockSpec((Din, D), lambda bb, ss: (0, 0)),
            pl.BlockSpec((1, D), lambda bb, ss: (0, 0)),
        ],
        out_specs=pl.BlockSpec((1, ts, D), lambda bb, ss: (bb, ss, 0)),
        compiler_params=pltpu.CompilerParams(
            dimension_semantics=("parallel", "parallel"),
            vmem_limit_bytes=_vmem_limit(blk)),
        cost_estimate=cost,
    )(x_bs, pe, w, b.reshape(1, D))


def pallas_self_attn_block(x, p, ln, nhead, causal):
    """Fused self-attention sublayer; grid over batch elements."""
    B, S, D = x.shape
    kern = functools.partial(_attn_block_kernel, nhead=nhead, causal=causal)
    blk = 4 * (2 * S * D + 6 * D) + _nbytes(p["w_qkv"]) + _nbytes(p["w_o"])
    extra = 4 * (3 * S * D + 2 * S * S + 2 * S * D)
    cost = pl.CostEstimate(
        flops=B * (8 * S * D * D + 4 * S * S * D),
        transcendentals=B * nhead * S * S,
        bytes_accessed=8 * B * S * D + _nbytes(p["w_qkv"]) + _nbytes(p["w_o"]))
    return pl.pallas_call(
        kern,
        out_shape=jax.ShapeDtypeStruct((B, S, D), x.dtype),
        grid=(B,),
        in_specs=[
            pl.BlockSpec((1, S, D), lambda bb: (bb, 0, 0)),
            pl.BlockSpec((D, 3 * D), lambda bb: (0, 0)),
            pl.BlockSpec((1, 3 * D), lambda bb: (0, 0)),
            pl.BlockSpec((D, D), lambda bb: (0, 0)),
            pl.BlockSpec((1, D), lambda bb: (0, 0)),
            pl.BlockSpec((1, D), lambda bb: (0, 0)),
            pl.BlockSpec((1, D), lambda bb: (0, 0)),
        ],
        out_specs=pl.BlockSpec((1, S, D), lambda bb: (bb, 0, 0)),
        compiler_params=pltpu.CompilerParams(
            dimension_semantics=("parallel",),
            vmem_limit_bytes=_vmem_limit(blk, extra)),
        cost_estimate=cost,
    )(x, p["w_qkv"], p["b_qkv"].reshape(1, 3 * D), p["w_o"], p["b_o"].reshape(1, D),
      ln["g"].reshape(1, D), ln["b"].reshape(1, D))


def pallas_cross_attn_block(x, mem, p, ln, nhead):
    """Fused cross-attention sublayer; grid over batch elements."""
    B, Sq, D = x.shape
    Sk = mem.shape[1]
    kern = functools.partial(_cross_attn_block_kernel, nhead=nhead)
    blk = (4 * (2 * Sq * D + Sk * D + 8 * D)
           + _nbytes(p["w_q"]) + _nbytes(p["w_kv"]) + _nbytes(p["w_o"]))
    extra = 4 * (3 * Sq * D + 2 * Sk * D + 2 * Sq * Sk)
    cost = pl.CostEstimate(
        flops=B * (8 * Sq * D * D + 4 * Sq * Sk * D),
        transcendentals=B * nhead * Sq * Sk,
        bytes_accessed=(4 * B * (3 * Sq * D + Sk * D)
                        + _nbytes(p["w_q"]) + _nbytes(p["w_kv"]) + _nbytes(p["w_o"])))
    return pl.pallas_call(
        kern,
        out_shape=jax.ShapeDtypeStruct((B, Sq, D), x.dtype),
        grid=(B,),
        in_specs=[
            pl.BlockSpec((1, Sq, D), lambda bb: (bb, 0, 0)),
            pl.BlockSpec((1, Sk, D), lambda bb: (bb, 0, 0)),
            pl.BlockSpec((D, D), lambda bb: (0, 0)),
            pl.BlockSpec((1, D), lambda bb: (0, 0)),
            pl.BlockSpec((D, 2 * D), lambda bb: (0, 0)),
            pl.BlockSpec((1, 2 * D), lambda bb: (0, 0)),
            pl.BlockSpec((D, D), lambda bb: (0, 0)),
            pl.BlockSpec((1, D), lambda bb: (0, 0)),
            pl.BlockSpec((1, D), lambda bb: (0, 0)),
            pl.BlockSpec((1, D), lambda bb: (0, 0)),
        ],
        out_specs=pl.BlockSpec((1, Sq, D), lambda bb: (bb, 0, 0)),
        compiler_params=pltpu.CompilerParams(
            dimension_semantics=("parallel",),
            vmem_limit_bytes=_vmem_limit(blk, extra)),
        cost_estimate=cost,
    )(x, mem, p["w_q"], p["b_q"].reshape(1, D), p["w_kv"], p["b_kv"].reshape(1, 2 * D),
      p["w_o"], p["b_o"].reshape(1, D), ln["g"].reshape(1, D), ln["b"].reshape(1, D))


def pallas_ffn_block(x, p, ln):
    """Fused FFN sublayer: LN(x + relu(xW1+b1)W2 + b2), d_ff tiled over grid axis 1."""
    B, S, D = x.shape
    M = B * S
    F = p["ff1_w"].shape[1]
    x2 = x.reshape(M, D)
    tm = _row_tile(M)
    tf = _f_tile(F)
    w1_blk = _nbytes(p["ff1_w"]) * tf // F
    w2_blk = _nbytes(p["ff2_w"]) * tf // F
    blk = 4 * (2 * tm * D + tf + 3 * D) + w1_blk + w2_blk
    extra = 4 * (tm * tf + tm * D)
    cost = pl.CostEstimate(flops=4 * M * D * F + 12 * M * D,
                           transcendentals=0,
                           bytes_accessed=8 * M * D + _nbytes(p["ff1_w"]) + _nbytes(p["ff2_w"]))
    y = pl.pallas_call(
        _ffn_addnorm_kernel,
        out_shape=jax.ShapeDtypeStruct((M, D), x.dtype),
        grid=(M // tm, F // tf),
        in_specs=[
            pl.BlockSpec((tm, D), lambda i, f: (i, 0)),
            pl.BlockSpec((D, tf), lambda i, f: (0, f)),
            pl.BlockSpec((1, tf), lambda i, f: (0, f)),
            pl.BlockSpec((tf, D), lambda i, f: (f, 0)),
            pl.BlockSpec((1, D), lambda i, f: (0, 0)),
            pl.BlockSpec((1, D), lambda i, f: (0, 0)),
            pl.BlockSpec((1, D), lambda i, f: (0, 0)),
        ],
        out_specs=pl.BlockSpec((tm, D), lambda i, f: (i, 0)),
        scratch_shapes=[pltpu.VMEM((tm, D), jnp.float32)],
        compiler_params=pltpu.CompilerParams(
            dimension_semantics=("parallel", "arbitrary"),
            vmem_limit_bytes=_vmem_limit(blk, extra)),
        cost_estimate=cost,
    )(x2, p["ff1_w"], p["ff1_b"].reshape(1, F), p["ff2_w"], p["ff2_b"].reshape(1, D),
      ln["g"].reshape(1, D), ln["b"].reshape(1, D))
    return y.reshape(B, S, D)


def pallas_layernorm(x, ln):
    B, S, D = x.shape
    M = B * S
    x2 = x.reshape(M, D)
    tm = _row_tile(M)
    cost = pl.CostEstimate(flops=10 * M * D, transcendentals=0,
                           bytes_accessed=8 * M * D + 8 * D)
    y = pl.pallas_call(
        _norm_kernel,
        out_shape=jax.ShapeDtypeStruct((M, D), x.dtype),
        grid=(M // tm,),
        in_specs=[
            pl.BlockSpec((tm, D), lambda i: (i, 0)),
            pl.BlockSpec((1, D), lambda i: (0, 0)),
            pl.BlockSpec((1, D), lambda i: (0, 0)),
        ],
        out_specs=pl.BlockSpec((tm, D), lambda i: (i, 0)),
        compiler_params=pltpu.CompilerParams(
            dimension_semantics=("parallel",),
            vmem_limit_bytes=_vmem_limit(8 * tm * D + 8 * D)),
        cost_estimate=cost,
    )(x2, ln["g"].reshape(1, D), ln["b"].reshape(1, D))
    return y.reshape(B, S, D)


def pallas_norm_linear(x, ln, w, bo):
    """Final decoder LayerNorm fused with decoder_output_layer."""
    B, S, D = x.shape
    M = B * S
    N = w.shape[1]
    x2 = x.reshape(M, D)
    tm = _row_tile(M)
    cost = pl.CostEstimate(flops=2 * M * D * N + 10 * M * D, transcendentals=0,
                           bytes_accessed=4 * (M * D + M * N) + _nbytes(w))
    y = pl.pallas_call(
        _norm_linear_kernel,
        out_shape=jax.ShapeDtypeStruct((M, N), x.dtype),
        grid=(M // tm,),
        in_specs=[
            pl.BlockSpec((tm, D), lambda i: (i, 0)),
            pl.BlockSpec((1, D), lambda i: (0, 0)),
            pl.BlockSpec((1, D), lambda i: (0, 0)),
            pl.BlockSpec((D, N), lambda i: (0, 0)),
            pl.BlockSpec((1, N), lambda i: (0, 0)),
        ],
        out_specs=pl.BlockSpec((tm, N), lambda i: (i, 0)),
        compiler_params=pltpu.CompilerParams(
            dimension_semantics=("parallel",),
            vmem_limit_bytes=_vmem_limit(4 * tm * (D + N) + _nbytes(w) + 12 * D)),
        cost_estimate=cost,
    )(x2, ln["g"].reshape(1, D), ln["b"].reshape(1, D), w, bo.reshape(1, N))
    return y.reshape(B, S, N)


# ----------------------------------------------------------------------------
# Host-side constants
# ----------------------------------------------------------------------------

def positional_encoding(max_len, d_model):
    position = np.arange(max_len, dtype=np.float32)[:, None]
    div_term = np.exp(np.arange(0, d_model, 2, dtype=np.float32)
                      * (-math.log(10000.0) / d_model))
    pe = np.zeros((max_len, d_model), np.float32)
    pe[:, 0::2] = np.sin(position * div_term)
    pe[:, 1::2] = np.cos(position * div_term)
    return jnp.asarray(pe)  # (max_len, d_model)


# ----------------------------------------------------------------------------
# Model glue
# ----------------------------------------------------------------------------

def transformer_model_forward(params, src, pe, *, d_model, nhead):
    """Equivalent of TransformerModel.forward(src); src: (S, B, input_dim), seq-first."""
    S, B, input_dim = src.shape
    del d_model, input_dim  # implied by params

    # Batch-major residual stream: one contiguous (S, D) slab per batch element.
    x_bs = jnp.transpose(src, (1, 0, 2))                 # (B, S, input_dim)

    # encoder_input_layer(src)*sqrt(d_model) (scale folded into weights) + pos encoding
    x = pallas_embed(x_bs, pe[:S], params["enc_in_w"], params["enc_in_b"])   # (B, S, D)

    tgt = x  # nn.Transformer(src, src, ...): decoder input is the embedded src

    # Encoder stack (causal src_mask per the module) + final encoder LayerNorm.
    enc = x
    for lp in params["encoder_layers"]:
        enc = pallas_self_attn_block(enc, lp["sa"], lp["ln1"], nhead, causal=True)
        enc = pallas_ffn_block(enc, lp, lp["ln2"])
    memory = pallas_layernorm(enc, params["enc_norm"])

    # Decoder stack (no tgt/memory masks) + final decoder LN fused with output layer.
    y = tgt
    for lp in params["decoder_layers"]:
        y = pallas_self_attn_block(y, lp["sa"], lp["ln1"], nhead, causal=False)
        y = pallas_cross_attn_block(y, memory, lp["ca"], lp["ln2"], nhead)
        y = pallas_ffn_block(y, lp, lp["ln3"])
    out = pallas_norm_linear(y, params["dec_norm"], params["dec_out_w"], params["dec_out_b"])

    return jnp.transpose(out, (1, 0, 2))                 # (S, B, input_dim)


# ----------------------------------------------------------------------------
# Deterministic parameter initialization (synthetic; weights stored pre-transposed
# (K, N), QKV pre-concatenated, 1/sqrt(Dh) folded into Q, sqrt(d_model) folded into
# the embedding layer, matmul weights pre-cast to the MXU dtype)
# ----------------------------------------------------------------------------

def init_params(key, input_dim, d_model, nhead, n_enc, n_dec, d_ff):
    keys = iter(jax.random.split(key, 512))
    qscale = 1.0 / math.sqrt(d_model // nhead)
    emb_scale = math.sqrt(d_model)

    def u(shape, a):
        return jax.random.uniform(next(keys), shape, jnp.float32, -a, a)

    def wcast(x):  # matmul weights pre-cast (biases / LN params stay f32)
        return x.astype(_MXU_DTYPE)

    def mha_self():
        w_in = u((d_model, 3 * d_model), math.sqrt(6.0 / (4 * d_model)))
        b_in = jnp.zeros((3 * d_model,), jnp.float32)
        col_scale = jnp.concatenate([jnp.full((d_model,), qscale, jnp.float32),
                                     jnp.ones((2 * d_model,), jnp.float32)])
        return dict(w_qkv=wcast(w_in * col_scale[None, :]), b_qkv=b_in * col_scale,
                    w_o=wcast(u((d_model, d_model), 1.0 / math.sqrt(d_model))),
                    b_o=jnp.zeros((d_model,), jnp.float32))

    def mha_cross():
        w_in = u((d_model, 3 * d_model), math.sqrt(6.0 / (4 * d_model)))
        b_in = jnp.zeros((3 * d_model,), jnp.float32)
        return dict(w_q=wcast(w_in[:, :d_model] * qscale), b_q=b_in[:d_model] * qscale,
                    w_kv=wcast(w_in[:, d_model:]), b_kv=b_in[d_model:],
                    w_o=wcast(u((d_model, d_model), 1.0 / math.sqrt(d_model))),
                    b_o=jnp.zeros((d_model,), jnp.float32))

    def ln():
        return dict(g=jnp.ones((d_model,), jnp.float32),
                    b=jnp.zeros((d_model,), jnp.float32))

    def ff():
        return dict(ff1_w=wcast(u((d_model, d_ff), 1.0 / math.sqrt(d_model))),
                    ff1_b=u((d_ff,), 1.0 / math.sqrt(d_model)),
                    ff2_w=wcast(u((d_ff, d_model), 1.0 / math.sqrt(d_ff))),
                    ff2_b=u((d_model,), 1.0 / math.sqrt(d_ff)))

    params = dict(
        enc_in_w=wcast(u((input_dim, d_model), 0.1) * emb_scale),   # init_weights: U(-0.1, 0.1)
        enc_in_b=u((d_model,), 1.0 / math.sqrt(input_dim)) * emb_scale,
        dec_out_w=wcast(u((d_model, input_dim), 0.1)),
        dec_out_b=u((input_dim,), 1.0 / math.sqrt(d_model)),
        enc_norm=ln(), dec_norm=ln(),
        encoder_layers=[], decoder_layers=[],
    )
    for _ in range(n_enc):
        lp = dict(sa=mha_self(), ln1=ln(), ln2=ln())
        lp.update(ff())
        params["encoder_layers"].append(lp)
    for _ in range(n_dec):
        lp = dict(sa=mha_self(), ca=mha_cross(), ln1=ln(), ln2=ln(), ln3=ln())
        lp.update(ff())
        params["decoder_layers"].append(lp)
    return params


# ----------------------------------------------------------------------------

if __name__ == "__main__":
    input_dim, d_model, nhead = 8, 32, 4
    num_encoder_layers, num_decoder_layers, dim_feedforward = 2, 2, 64
    S, B = 8, 2  # seq len, batch (seq-first layout, like nn.Transformer batch_first=False)

    key = jax.random.PRNGKey(0)
    pkey, xkey = jax.random.split(key)
    params = init_params(pkey, input_dim, d_model, nhead,
                         num_encoder_layers, num_decoder_layers, dim_feedforward)
    src = jax.random.normal(xkey, (S, B, input_dim), jnp.float32)
    pe = positional_encoding(64, d_model)

    fwd = jax.jit(functools.partial(transformer_model_forward,
                                    d_model=d_model, nhead=nhead))
    out = jax.block_until_ready(fwd(params, src, pe))

    assert out.shape == (S, B, input_dim), out.shape
    assert not bool(jnp.any(jnp.isnan(out)))
    print("KERNEL_OK")
</pallas_src>

<mosaic_0001>
module attributes {stable_mosaic.version = 11 : i64} {
  func.func @_embed_kernel(%arg0: i32, %arg1: i32, %arg2: memref<1x8x8xf32, #tpu.memory_space<vmem>>, %arg3: memref<8x32xf32, #tpu.memory_space<vmem>>, %arg4: memref<8x32xbf16, #tpu.memory_space<vmem>>, %arg5: memref<1x32xf32, #tpu.memory_space<vmem>>, %arg6: memref<1x8x32xf32, #tpu.memory_space<vmem>>) attributes {dimension_semantics = [#tpu.dimension_semantics<parallel>, #tpu.dimension_semantics<parallel>], iteration_bounds = array<i64: 2, 1>, scalar_prefetch = 0 : i64, scratch_operands = 0 : i64, tpu.core_type = #tpu.core_type<tc>, window_params = [{transform_indices = @transform_0, window_bounds = array<i64: 1, 8, 8>}, {transform_indices = @transform_1, window_bounds = array<i64: 8, 32>}, {pipeline_mode = #tpu.pipeline_mode<synchronous>, transform_indices = @transform_2, window_bounds = array<i64: 8, 32>}, {pipeline_mode = #tpu.pipeline_mode<synchronous>, transform_indices = @transform_3, window_bounds = array<i64: 1, 32>}, {transform_indices = @transform_4, window_bounds = array<i64: 1, 8, 32>}]} {
    %c0 = arith.constant 0 : index
    %c0_0 = arith.constant 0 : index
    %c0_1 = arith.constant 0 : index
    %0 = vector.load %arg2[%c0, %c0_0, %c0_1] : memref<1x8x8xf32, #tpu.memory_space<vmem>>, vector<1x8x8xf32>
    %1 = vector.shape_cast %0 : vector<1x8x8xf32> to vector<8x8xf32>
    %c0_2 = arith.constant 0 : index
    %c0_3 = arith.constant 0 : index
    %2 = vector.load %arg4[%c0_2, %c0_3] : memref<8x32xbf16, #tpu.memory_space<vmem>>, vector<8x32xbf16>
    %3 = arith.truncf %1 : vector<8x8xf32> to vector<8x8xbf16>
    %cst = arith.constant dense<0.000000e+00> : vector<8x32xf32>
    %4 = tpu.matmul %3, %2, %cst {dimension_numbers = #tpu.dot_dimension_numbers<[1], [0], [0], [1], [0, 0, 1, 1], [], []>} : vector<8x8xbf16>, vector<8x32xbf16>, vector<8x32xf32> -> vector<8x32xf32>
    %c0_4 = arith.constant 0 : index
    %c0_5 = arith.constant 0 : index
    %5 = vector.load %arg5[%c0_4, %c0_5] : memref<1x32xf32, #tpu.memory_space<vmem>>, vector<1x32xf32>
    %6 = vector.broadcast %5 : vector<1x32xf32> to vector<8x32xf32>
    %7 = arith.addf %4, %6 : vector<8x32xf32>
    %c0_6 = arith.constant 0 : index
    %c0_7 = arith.constant 0 : index
    %8 = vector.load %arg3[%c0_6, %c0_7] : memref<8x32xf32, #tpu.memory_space<vmem>>, vector<8x32xf32>
    %9 = arith.addf %7, %8 : vector<8x32xf32>
    %c0_8 = arith.constant 0 : index
    %c0_9 = arith.constant 0 : index
    %c0_10 = arith.constant 0 : index
    %10 = vector.load %arg6[%c0_8, %c0_9, %c0_10] : memref<1x8x32xf32, #tpu.memory_space<vmem>>, vector<1x8x32xf32>
    %11 = vector.shape_cast %10 : vector<1x8x32xf32> to vector<8x32xf32>
    %12 = vector.shape_cast %9 : vector<8x32xf32> to vector<1x8x32xf32>
    tpu.vector_store %arg6[%c0_8, %c0_9, %c0_10], %12 {strides = array<i32>} : memref<1x8x32xf32, #tpu.memory_space<vmem>>, vector<1x8x32xf32>,
    return
  }
  func.func @transform_0(%arg0: i32, %arg1: i32) -> (i32, i32, i32) {
    %c0_i32 = arith.constant 0 : i32
    %c0_i32_0 = arith.constant 0 : i32
    return %arg0, %arg1, %c0_i32 : i32, i32, i32
  }
  func.func @transform_1(%arg0: i32, %arg1: i32) -> (i32, i32) {
    %c0_i32 = arith.constant 0 : i32
    %c0_i32_0 = arith.constant 0 : i32
    return %arg1, %c0_i32 : i32, i32
  }
  func.func @transform_2(%arg0: i32, %arg1: i32) -> (i32, i32) {
    %c0_i32 = arith.constant 0 : i32
    %c0_i32_0 = arith.constant 0 : i32
    %c0_i32_1 = arith.constant 0 : i32
    return %c0_i32, %c0_i32_0 : i32, i32
  }
  func.func @transform_3(%arg0: i32, %arg1: i32) -> (i32, i32) {
    %c0_i32 = arith.constant 0 : i32
    %c0_i32_0 = arith.constant 0 : i32
    %c0_i32_1 = arith.constant 0 : i32
    return %c0_i32, %c0_i32_0 : i32, i32
  }
  func.func @transform_4(%arg0: i32, %arg1: i32) -> (i32, i32, i32) {
    %c0_i32 = arith.constant 0 : i32
    %c0_i32_0 = arith.constant 0 : i32
    return %arg0, %arg1, %c0_i32 : i32, i32, i32
  }
}

module attributes {stable_mosaic.version = 11 : i64} {
  func.func @_attn_block_kernel(%arg0: i32, %arg1: memref<1x8x32xf32, #tpu.memory_space<vmem>>, %arg2: memref<32x96xbf16, #tpu.memory_space<vmem>>, %arg3: memref<1x96xf32, #tpu.memory_space<vmem>>, %arg4: memref<32x32xbf16, #tpu.memory_space<vmem>>, %arg5: memref<1x32xf32, #tpu.memory_space<vmem>>, %arg6: memref<1x32xf32, #tpu.memory_space<vmem>>, %arg7: memref<1x32xf32, #tpu.memory_space<vmem>>, %arg8: memref<1x8x32xf32, #tpu.memory_space<vmem>>) attributes {dimension_semantics = [#tpu.dimension_semantics<parallel>], iteration_bounds = array<i64: 2>, scalar_prefetch = 0 : i64, scratch_operands = 0 : i64, tpu.core_type = #tpu.core_type<tc>, window_params = [{transform_indices = @transform_0, window_bounds = array<i64: 1, 8, 32>}, {pipeline_mode = #tpu.pipeline_mode<synchronous>, transform_indices = @transform_1, window_bounds = array<i64: 32, 96>}, {pipeline_mode = #tpu.pipeline_mode<synchronous>, transform_indices = @transform_2, window_bounds = array<i64: 1, 96>}, {pipeline_mode = #tpu.pipeline_mode<synchronous>, transform_indices = @transform_3, window_bounds = array<i64: 32, 32>}, {pipeline_mode = #tpu.pipeline_mode<synchronous>, transform_indices = @transform_4, window_bounds = array<i64: 1, 32>}, {pipeline_mode = #tpu.pipeline_mode<synchronous>, transform_indices = @transform_5, window_bounds = array<i64: 1, 32>}, {pipeline_mode = #tpu.pipeline_mode<synchronous>, transform_indices = @transform_6, window_bounds = array<i64: 1, 32>}, {transform_indices = @transform_7, window_bounds = array<i64: 1, 8, 32>}]} {
    %c0 = arith.constant 0 : index
    %c0_0 = arith.constant 0 : index
    %c0_1 = arith.constant 0 : index
    %0 = vector.load %arg1[%c0, %c0_0, %c0_1] : memref<1x8x32xf32, #tpu.memory_space<vmem>>, vector<1x8x32xf32>
    %1 = vector.shape_cast %0 : vector<1x8x32xf32> to vector<8x32xf32>
    %c0_2 = arith.constant 0 : index
    %c0_3 = arith.constant 0 : index
    %2 = vector.load %arg2[%c0_2, %c0_3] : memref<32x96xbf16, #tpu.memory_space<vmem>>, vector<32x96xbf16>
    %3 = arith.truncf %1 : vector<8x32xf32> to vector<8x32xbf16>
    %cst = arith.constant dense<0.000000e+00> : vector<8x96xf32>
    %4 = tpu.matmul %3, %2, %cst {dimension_numbers = #tpu.dot_dimension_numbers<[1], [0], [0], [1], [0, 0, 1, 1], [], []>} : vector<8x32xbf16>, vector<32x96xbf16>, vector<8x96xf32> -> vector<8x96xf32>
    %c0_4 = arith.constant 0 : index
    %c0_5 = arith.constant 0 : index
    %5 = vector.load %arg3[%c0_4, %c0_5] : memref<1x96xf32, #tpu.memory_space<vmem>>, vector<1x96xf32>
    %6 = vector.broadcast %5 : vector<1x96xf32> to vector<8x96xf32>
    %7 = arith.addf %4, %6 : vector<8x96xf32>
    %8 = tpu.iota {dimensions = array<i32: 0>} : vector<8x8xi32>
    %9 = tpu.iota {dimensions = array<i32: 1>} : vector<8x8xi32>
    %10 = arith.cmpi sle, %9, %8 : vector<8x8xi32>
    %cst_6 = arith.constant 0.000000e+00 : f32
    %cst_7 = arith.constant -1.000000e+30 : f32
    %11 = vector.broadcast %cst_6 : f32 to vector<8x8xf32>
    %12 = vector.broadcast %cst_7 : f32 to vector<8x8xf32>
    %13 = arith.select %10, %11, %12 : vector<8x8xi1>, vector<8x8xf32>
    %14 = vector.extract_strided_slice %7 {offsets = [0, 0], sizes = [8, 8], strides = [1, 1]} : vector<8x96xf32> to vector<8x8xf32>
    %15 = vector.extract_strided_slice %7 {offsets = [0, 32], sizes = [8, 8], strides = [1, 1]} : vector<8x96xf32> to vector<8x8xf32>
    %16 = vector.extract_strided_slice %7 {offsets = [0, 64], sizes = [8, 8], strides = [1, 1]} : vector<8x96xf32> to vector<8x8xf32>
    %17 = arith.truncf %14 : vector<8x8xf32> to vector<8x8xbf16>
    %18 = arith.truncf %15 : vector<8x8xf32> to vector<8x8xbf16>
    %cst_8 = arith.constant dense<0.000000e+00> : vector<8x8xf32>
    %19 = tpu.matmul %17, %18, %cst_8 {dimension_numbers = #tpu.dot_dimension_numbers<[1], [1], [0], [0], [0, 0, 1, 0], [], []>} : vector<8x8xbf16>, vector<8x8xbf16>, vector<8x8xf32> -> vector<8x8xf32>
    %20 = arith.addf %19, %13 : vector<8x8xf32>
    %cst_9 = arith.constant dense<0xFF800000> : vector<8xf32>
    %21 = vector.multi_reduction <maximumf>, %20, %cst_9 [1] : vector<8x8xf32> to vector<8xf32>
    %22 = vector.shape_cast %21 : vector<8xf32> to vector<8x1xf32>
    %23 = vector.broadcast %22 : vector<8x1xf32> to vector<8x8xf32>
    %24 = arith.subf %20, %23 : vector<8x8xf32>
    %25 = math.exp %24 : vector<8x8xf32>
    %cst_10 = arith.constant dense<0.000000e+00> : vector<8xf32>
    %26 = vector.multi_reduction <add>, %25, %cst_10 [1] : vector<8x8xf32> to vector<8xf32>
    %27 = vector.shape_cast %26 : vector<8xf32> to vector<8x1xf32>
    %28 = vector.broadcast %27 : vector<8x1xf32> to vector<8x8xf32>
    %29 = arith.divf %25, %28 : vector<8x8xf32>
    %30 = arith.truncf %29 : vector<8x8xf32> to vector<8x8xbf16>
    %31 = arith.truncf %16 : vector<8x8xf32> to vector<8x8xbf16>
    %cst_11 = arith.constant dense<0.000000e+00> : vector<8x8xf32>
    %32 = tpu.matmul %30, %31, %cst_11 {dimension_numbers = #tpu.dot_dimension_numbers<[1], [0], [0], [1], [0, 0, 1, 1], [], []>} : vector<8x8xbf16>, vector<8x8xbf16>, vector<8x8xf32> -> vector<8x8xf32>
    %33 = vector.extract_strided_slice %7 {offsets = [0, 8], sizes = [8, 8], strides = [1, 1]} : vector<8x96xf32> to vector<8x8xf32>
    %34 = vector.extract_strided_slice %7 {offsets = [0, 40], sizes = [8, 8], strides = [1, 1]} : vector<8x96xf32> to vector<8x8xf32>
    %35 = vector.extract_strided_slice %7 {offsets = [0, 72], sizes = [8, 8], strides = [1, 1]} : vector<8x96xf32> to vector<8x8xf32>
    %36 = arith.truncf %33 : vector<8x8xf32> to vector<8x8xbf16>
    %37 = arith.truncf %34 : vector<8x8xf32> to vector<8x8xbf16>
    %cst_12 = arith.constant dense<0.000000e+00> : vector<8x8xf32>
    %38 = tpu.matmul %36, %37, %cst_12 {dimension_numbers = #tpu.dot_dimension_numbers<[1], [1], [0], [0], [0, 0, 1, 0], [], []>} : vector<8x8xbf16>, vector<8x8xbf16>, vector<8x8xf32> -> vector<8x8xf32>
    %39 = arith.addf %38, %13 : vector<8x8xf32>
    %cst_13 = arith.constant dense<0xFF800000> : vector<8xf32>
    %40 = vector.multi_reduction <maximumf>, %39, %cst_13 [1] : vector<8x8xf32> to vector<8xf32>
    %41 = vector.shape_cast %40 : vector<8xf32> to vector<8x1xf32>
    %42 = vector.broadcast %41 : vector<8x1xf32> to vector<8x8xf32>
    %43 = arith.subf %39, %42 : vector<8x8xf32>
    %44 = math.exp %43 : vector<8x8xf32>
    %cst_14 = arith.constant dense<0.000000e+00> : vector<8xf32>
    %45 = vector.multi_reduction <add>, %44, %cst_14 [1] : vector<8x8xf32> to vector<8xf32>
    %46 = vector.shape_cast %45 : vector<8xf32> to vector<8x1xf32>
    %47 = vector.broadcast %46 : vector<8x1xf32> to vector<8x8xf32>
    %48 = arith.divf %44, %47 : vector<8x8xf32>
    %49 = arith.truncf %48 : vector<8x8xf32> to vector<8x8xbf16>
    %50 = arith.truncf %35 : vector<8x8xf32> to vector<8x8xbf16>
    %cst_15 = arith.constant dense<0.000000e+00> : vector<8x8xf32>
    %51 = tpu.matmul %49, %50, %cst_15 {dimension_numbers = #tpu.dot_dimension_numbers<[1], [0], [0], [1], [0, 0, 1, 1], [], []>} : vector<8x8xbf16>, vector<8x8xbf16>, vector<8x8xf32> -> vector<8x8xf32>
    %52 = vector.extract_strided_slice %7 {offsets = [0, 16], sizes = [8, 8], strides = [1, 1]} : vector<8x96xf32> to vector<8x8xf32>
    %53 = vector.extract_strided_slice %7 {offsets = [0, 48], sizes = [8, 8], strides = [1, 1]} : vector<8x96xf32> to vector<8x8xf32>
    %54 = vector.extract_strided_slice %7 {offsets = [0, 80], sizes = [8, 8], strides = [1, 1]} : vector<8x96xf32> to vector<8x8xf32>
    %55 = arith.truncf %52 : vector<8x8xf32> to vector<8x8xbf16>
    %56 = arith.truncf %53 : vector<8x8xf32> to vector<8x8xbf16>
    %cst_16 = arith.constant dense<0.000000e+00> : vector<8x8xf32>
    %57 = tpu.matmul %55, %56, %cst_16 {dimension_numbers = #tpu.dot_dimension_numbers<[1], [1], [0], [0], [0, 0, 1, 0], [], []>} : vector<8x8xbf16>, vector<8x8xbf16>, vector<8x8xf32> -> vector<8x8xf32>
    %58 = arith.addf %57, %13 : vector<8x8xf32>
    %cst_17 = arith.constant dense<0xFF800000> : vector<8xf32>
    %59 = vector.multi_reduction <maximumf>, %58, %cst_17 [1] : vector<8x8xf32> to vector<8xf32>
    %60 = vector.shape_cast %59 : vector<8xf32> to vector<8x1xf32>
    %61 = vector.broadcast %60 : vector<8x1xf32> to vector<8x8xf32>
    %62 = arith.subf %58, %61 : vector<8x8xf32>
    %63 = math.exp %62 : vector<8x8xf32>
    %cst_18 = arith.constant dense<0.000000e+00> : vector<8xf32>
    %64 = vector.multi_reduction <add>, %63, %cst_18 [1] : vector<8x8xf32> to vector<8xf32>
    %65 = vector.shape_cast %64 : vector<8xf32> to vector<8x1xf32>
    %66 = vector.broadcast %65 : vector<8x1xf32> to vector<8x8xf32>
    %67 = arith.divf %63, %66 : vector<8x8xf32>
    %68 = arith.truncf %67 : vector<8x8xf32> to vector<8x8xbf16>
    %69 = arith.truncf %54 : vector<8x8xf32> to vector<8x8xbf16>
    %cst_19 = arith.constant dense<0.000000e+00> : vector<8x8xf32>
    %70 = tpu.matmul %68, %69, %cst_19 {dimension_numbers = #tpu.dot_dimension_numbers<[1], [0], [0], [1], [0, 0, 1, 1], [], []>} : vector<8x8xbf16>, vector<8x8xbf16>, vector<8x8xf32> -> vector<8x8xf32>
    %71 = vector.extract_strided_slice %7 {offsets = [0, 24], sizes = [8, 8], strides = [1, 1]} : vector<8x96xf32> to vector<8x8xf32>
    %72 = vector.extract_strided_slice %7 {offsets = [0, 56], sizes = [8, 8], strides = [1, 1]} : vector<8x96xf32> to vector<8x8xf32>
    %73 = vector.extract_strided_slice %7 {offsets = [0, 88], sizes = [8, 8], strides = [1, 1]} : vector<8x96xf32> to vector<8x8xf32>
    %74 = arith.truncf %71 : vector<8x8xf32> to vector<8x8xbf16>
    %75 = arith.truncf %72 : vector<8x8xf32> to vector<8x8xbf16>
    %cst_20 = arith.constant dense<0.000000e+00> : vector<8x8xf32>
    %76 = tpu.matmul %74, %75, %cst_20 {dimension_numbers = #tpu.dot_dimension_numbers<[1], [1], [0], [0], [0, 0, 1, 0], [], []>} : vector<8x8xbf16>, vector<8x8xbf16>, vector<8x8xf32> -> vector<8x8xf32>
    %77 = arith.addf %76, %13 : vector<8x8xf32>
    %cst_21 = arith.constant dense<0xFF800000> : vector<8xf32>
    %78 = vector.multi_reduction <maximumf>, %77, %cst_21 [1] : vector<8x8xf32> to vector<8xf32>
    %79 = vector.shape_cast %78 : vector<8xf32> to vector<8x1xf32>
    %80 = vector.broadcast %79 : vector<8x1xf32> to vector<8x8xf32>
    %81 = arith.subf %77, %80 : vector<8x8xf32>
    %82 = math.exp %81 : vector<8x8xf32>
    %cst_22 = arith.constant dense<0.000000e+00> : vector<8xf32>
    %83 = vector.multi_reduction <add>, %82, %cst_22 [1] : vector<8x8xf32> to vector<8xf32>
    %84 = vector.shape_cast %83 : vector<8xf32> to vector<8x1xf32>
    %85 = vector.broadcast %84 : vector<8x1xf32> to vector<8x8xf32>
    %86 = arith.divf %82, %85 : vector<8x8xf32>
    %87 = arith.truncf %86 : vector<8x8xf32> to vector<8x8xbf16>
    %88 = arith.truncf %73 : vector<8x8xf32> to vector<8x8xbf16>
    %cst_23 = arith.constant dense<0.000000e+00> : vector<8x8xf32>
    %89 = tpu.matmul %87, %88, %cst_23 {dimension_numbers = #tpu.dot_dimension_numbers<[1], [0], [0], [1], [0, 0, 1, 1], [], []>} : vector<8x8xbf16>, vector<8x8xbf16>, vector<8x8xf32> -> vector<8x8xf32>
    %90 = tpu.concatenate %32, %51, %70, %89 in 1 : vector<8x8xf32>, vector<8x8xf32>, vector<8x8xf32>, vector<8x8xf32> -> vector<8x32xf32>
    %c0_24 = arith.constant 0 : index
    %c0_25 = arith.constant 0 : index
    %91 = vector.load %arg4[%c0_24, %c0_25] : memref<32x32xbf16, #tpu.memory_space<vmem>>, vector<32x32xbf16>
    %92 = arith.truncf %90 : vector<8x32xf32> to vector<8x32xbf16>
    %cst_26 = arith.constant dense<0.000000e+00> : vector<8x32xf32>
    %93 = tpu.matmul %92, %91, %cst_26 {dimension_numbers = #tpu.dot_dimension_numbers<[1], [0], [0], [1], [0, 0, 1, 1], [], []>} : vector<8x32xbf16>, vector<32x32xbf16>, vector<8x32xf32> -> vector<8x32xf32>
    %94 = arith.addf %1, %93 : vector<8x32xf32>
    %c0_27 = arith.constant 0 : index
    %c0_28 = arith.constant 0 : index
    %95 = vector.load %arg5[%c0_27, %c0_28] : memref<1x32xf32, #tpu.memory_space<vmem>>, vector<1x32xf32>
    %96 = vector.broadcast %95 : vector<1x32xf32> to vector<8x32xf32>
    %97 = arith.addf %94, %96 : vector<8x32xf32>
    %c0_29 = arith.constant 0 : index
    %c0_30 = arith.constant 0 : index
    %98 = vector.load %arg6[%c0_29, %c0_30] : memref<1x32xf32, #tpu.memory_space<vmem>>, vector<1x32xf32>
    %c0_31 = arith.constant 0 : index
    %c0_32 = arith.constant 0 : index
    %99 = vector.load %arg7[%c0_31, %c0_32] : memref<1x32xf32, #tpu.memory_space<vmem>>, vector<1x32xf32>
    %cst_33 = arith.constant dense<0.000000e+00> : vector<8xf32>
    %100 = vector.multi_reduction <add>, %97, %cst_33 [1] : vector<8x32xf32> to vector<8xf32>
    %101 = vector.shape_cast %100 : vector<8xf32> to vector<8x1xf32>
    %cst_34 = arith.constant 3.200000e+01 : f32
    %102 = vector.broadcast %cst_34 : f32 to vector<8x1xf32>
    %103 = arith.divf %101, %102 : vector<8x1xf32>
    %104 = vector.broadcast %103 : vector<8x1xf32> to vector<8x32xf32>
    %105 = arith.subf %97, %104 : vector<8x32xf32>
    %106 = arith.mulf %105, %105 : vector<8x32xf32>
    %cst_35 = arith.constant dense<0.000000e+00> : vector<8xf32>
    %107 = vector.multi_reduction <add>, %106, %cst_35 [1] : vector<8x32xf32> to vector<8xf32>
    %108 = vector.shape_cast %107 : vector<8xf32> to vector<8x1xf32>
    %cst_36 = arith.constant 3.200000e+01 : f32
    %109 = vector.broadcast %cst_36 : f32 to vector<8x1xf32>
    %110 = arith.divf %108, %109 : vector<8x1xf32>
    %111 = vector.broadcast %103 : vector<8x1xf32> to vector<8x32xf32>
    %112 = arith.subf %97, %111 : vector<8x32xf32>
    %cst_37 = arith.constant 9.99999974E-6 : f32
    %113 = vector.broadcast %cst_37 : f32 to vector<8x1xf32>
    %114 = arith.addf %110, %113 : vector<8x1xf32>
    %115 = math.rsqrt %114 : vector<8x1xf32>
    %116 = vector.broadcast %115 : vector<8x1xf32> to vector<8x32xf32>
    %117 = arith.mulf %112, %116 : vector<8x32xf32>
    %118 = vector.broadcast %98 : vector<1x32xf32> to vector<8x32xf32>
    %119 = arith.mulf %117, %118 : vector<8x32xf32>
    %120 = vector.broadcast %99 : vector<1x32xf32> to vector<8x32xf32>
    %121 = arith.addf %119, %120 : vector<8x32xf32>
    %c0_38 = arith.constant 0 : index
    %c0_39 = arith.constant 0 : index
    %c0_40 = arith.constant 0 : index
    %122 = vector.load %arg8[%c0_38, %c0_39, %c0_40] : memref<1x8x32xf32, #tpu.memory_space<vmem>>, vector<1x8x32xf32>
    %123 = vector.shape_cast %122 : vector<1x8x32xf32> to vector<8x32xf32>
    %124 = vector.shape_cast %121 : vector<8x32xf32> to vector<1x8x32xf32>
    tpu.vector_store %arg8[%c0_38, %c0_39, %c0_40], %124 {strides = array<i32>} : memref<1x8x32xf32, #tpu.memory_space<vmem>>, vector<1x8x32xf32>,
    return
  }
  func.func @transform_0(%arg0: i32) -> (i32, i32, i32) {
    %c0_i32 = arith.constant 0 : i32
    %c0_i32_0 = arith.constant 0 : i32
    %c0_i32_1 = arith.constant 0 : i32
    return %arg0, %c0_i32, %c0_i32_0 : i32, i32, i32
  }
  func.func @transform_1(%arg0: i32) -> (i32, i32) {
    %c0_i32 = arith.constant 0 : i32
    %c0_i32_0 = arith.constant 0 : i32
    %c0_i32_1 = arith.constant 0 : i32
    return %c0_i32, %c0_i32_0 : i32, i32
  }
  func.func @transform_2(%arg0: i32) -> (i32, i32) {
    %c0_i32 = arith.constant 0 : i32
    %c0_i32_0 = arith.constant 0 : i32
    %c0_i32_1 = arith.constant 0 : i32
    return %c0_i32, %c0_i32_0 : i32, i32
  }
  func.func @transform_3(%arg0: i32) -> (i32, i32) {
    %c0_i32 = arith.constant 0 : i32
    %c0_i32_0 = arith.constant 0 : i32
    %c0_i32_1 = arith.constant 0 : i32
    return %c0_i32, %c0_i32_0 : i32, i32
  }
  func.func @transform_4(%arg0: i32) -> (i32, i32) {
    %c0_i32 = arith.constant 0 : i32
    %c0_i32_0 = arith.constant 0 : i32
    %c0_i32_1 = arith.constant 0 : i32
    return %c0_i32, %c0_i32_0 : i32, i32
  }
  func.func @transform_5(%arg0: i32) -> (i32, i32) {
    %c0_i32 = arith.constant 0 : i32
    %c0_i32_0 = arith.constant 0 : i32
    %c0_i32_1 = arith.constant 0 : i32
    return %c0_i32, %c0_i32_0 : i32, i32
  }
  func.func @transform_6(%arg0: i32) -> (i32, i32) {
    %c0_i32 = arith.constant 0 : i32
    %c0_i32_0 = arith.constant 0 : i32
    %c0_i32_1 = arith.constant 0 : i32
    return %c0_i32, %c0_i32_0 : i32, i32
  }
  func.func @transform_7(%arg0: i32) -> (i32, i32, i32) {
    %c0_i32 = arith.constant 0 : i32
    %c0_i32_0 = arith.constant 0 : i32
    %c0_i32_1 = arith.constant 0 : i32
    return %arg0, %c0_i32, %c0_i32_0 : i32, i32, i32
  }
}

module attributes {stable_mosaic.version = 11 : i64} {
  func.func @_ffn_addnorm_kernel(%arg0: i32, %arg1: i32, %arg2: memref<8x32xf32, #tpu.memory_space<vmem>>, %arg3: memref<32x64xbf16, #tpu.memory_space<vmem>>, %arg4: memref<1x64xf32, #tpu.memory_space<vmem>>, %arg5: memref<64x32xbf16, #tpu.memory_space<vmem>>, %arg6: memref<1x32xf32, #tpu.memory_space<vmem>>, %arg7: memref<1x32xf32, #tpu.memory_space<vmem>>, %arg8: memref<1x32xf32, #tpu.memory_space<vmem>>, %arg9: memref<8x32xf32, #tpu.memory_space<vmem>>, %arg10: memref<8x32xf32, #tpu.memory_space<vmem>>) attributes {dimension_semantics = [#tpu.dimension_semantics<parallel>, #tpu.dimension_semantics<arbitrary>], iteration_bounds = array<i64: 2, 1>, scalar_prefetch = 0 : i64, scratch_operands = 1 : i64, tpu.core_type = #tpu.core_type<tc>, window_params = [{transform_indices = @transform_0, window_bounds = array<i64: 8, 32>}, {transform_indices = @transform_1, window_bounds = array<i64: 32, 64>}, {transform_indices = @transform_2, window_bounds = array<i64: 1, 64>}, {transform_indices = @transform_3, window_bounds = array<i64: 64, 32>}, {pipeline_mode = #tpu.pipeline_mode<synchronous>, transform_indices = @transform_4, window_bounds = array<i64: 1, 32>}, {pipeline_mode = #tpu.pipeline_mode<synchronous>, transform_indices = @transform_5, window_bounds = array<i64: 1, 32>}, {pipeline_mode = #tpu.pipeline_mode<synchronous>, transform_indices = @transform_6, window_bounds = array<i64: 1, 32>}, {transform_indices = @transform_7, window_bounds = array<i64: 8, 32>}]} {
    %c0_i32 = arith.constant 0 : i32
    %0 = arith.cmpi eq, %arg1, %c0_i32 : i32
    %1 = arith.extui %0 : i1 to i32
    %c0_i32_0 = arith.constant 0 : i32
    %2 = arith.cmpi ne, %1, %c0_i32_0 : i32
    scf.if %2 {
      %cst_16 = arith.constant 0.000000e+00 : f32
      %21 = vector.broadcast %cst_16 : f32 to vector<8x32xf32>
      %c0_17 = arith.constant 0 : index
      %c0_18 = arith.constant 0 : index
      %22 = vector.load %arg10[%c0_17, %c0_18] : memref<8x32xf32, #tpu.memory_space<vmem>>, vector<8x32xf32>
      tpu.vector_store %arg10[%c0_17, %c0_18], %21 {strides = array<i32>} : memref<8x32xf32, #tpu.memory_space<vmem>>, vector<8x32xf32>,
    } else {
    }
    %c0 = arith.constant 0 : index
    %c0_1 = arith.constant 0 : index
    %3 = vector.load %arg2[%c0, %c0_1] : memref<8x32xf32, #tpu.memory_space<vmem>>, vector<8x32xf32>
    %c0_2 = arith.constant 0 : index
    %c0_3 = arith.constant 0 : index
    %4 = vector.load %arg3[%c0_2, %c0_3] : memref<32x64xbf16, #tpu.memory_space<vmem>>, vector<32x64xbf16>
    %5 = arith.truncf %3 : vector<8x32xf32> to vector<8x32xbf16>
    %cst = arith.constant dense<0.000000e+00> : vector<8x64xf32>
    %6 = tpu.matmul %5, %4, %cst {dimension_numbers = #tpu.dot_dimension_numbers<[1], [0], [0], [1], [0, 0, 1, 1], [], []>} : vector<8x32xbf16>, vector<32x64xbf16>, vector<8x64xf32> -> vector<8x64xf32>
    %c0_4 = arith.constant 0 : index
    %c0_5 = arith.constant 0 : index
    %7 = vector.load %arg4[%c0_4, %c0_5] : memref<1x64xf32, #tpu.memory_space<vmem>>, vector<1x64xf32>
    %8 = vector.broadcast %7 : vector<1x64xf32> to vector<8x64xf32>
    %9 = arith.addf %6, %8 : vector<8x64xf32>
    %cst_6 = arith.constant 0.000000e+00 : f32
    %10 = vector.broadcast %cst_6 : f32 to vector<8x64xf32>
    %11 = arith.maximumf %9, %10 : vector<8x64xf32>
    %c0_7 = arith.constant 0 : index
    %c0_8 = arith.constant 0 : index
    %12 = vector.load %arg10[%c0_7, %c0_8] : memref<8x32xf32, #tpu.memory_space<vmem>>, vector<8x32xf32>
    %c0_9 = arith.constant 0 : index
    %c0_10 = arith.constant 0 : index
    %13 = vector.load %arg5[%c0_9, %c0_10] : memref<64x32xbf16, #tpu.memory_space<vmem>>, vector<64x32xbf16>
    %14 = arith.truncf %11 : vector<8x64xf32> to vector<8x64xbf16>
    %cst_11 = arith.constant dense<0.000000e+00> : vector<8x32xf32>
    %15 = tpu.matmul %14, %13, %cst_11 {dimension_numbers = #tpu.dot_dimension_numbers<[1], [0], [0], [1], [0, 0, 1, 1], [], []>} : vector<8x64xbf16>, vector<64x32xbf16>, vector<8x32xf32> -> vector<8x32xf32>
    %16 = arith.addf %12, %15 : vector<8x32xf32>
    %c0_12 = arith.constant 0 : index
    %c0_13 = arith.constant 0 : index
    %17 = vector.load %arg10[%c0_12, %c0_13] : memref<8x32xf32, #tpu.memory_space<vmem>>, vector<8x32xf32>
    tpu.vector_store %arg10[%c0_12, %c0_13], %16 {strides = array<i32>} : memref<8x32xf32, #tpu.memory_space<vmem>>, vector<8x32xf32>,
    %c0_i32_14 = arith.constant 0 : i32
    %18 = arith.cmpi eq, %arg1, %c0_i32_14 : i32
    %19 = arith.extui %18 : i1 to i32
    %c0_i32_15 = arith.constant 0 : i32
    %20 = arith.cmpi ne, %19, %c0_i32_15 : i32
    scf.if %20 {
      %c0_16 = arith.constant 0 : index
      %c0_17 = arith.constant 0 : index
      %21 = vector.load %arg10[%c0_16, %c0_17] : memref<8x32xf32, #tpu.memory_space<vmem>>, vector<8x32xf32>
      %22 = arith.addf %3, %21 : vector<8x32xf32>
      %c0_18 = arith.constant 0 : index
      %c0_19 = arith.constant 0 : index
      %23 = vector.load %arg6[%c0_18, %c0_19] : memref<1x32xf32, #tpu.memory_space<vmem>>, vector<1x32xf32>
      %24 = vector.broadcast %23 : vector<1x32xf32> to vector<8x32xf32>
      %25 = arith.addf %22, %24 : vector<8x32xf32>
      %c0_20 = arith.constant 0 : index
      %c0_21 = arith.constant 0 : index
      %26 = vector.load %arg7[%c0_20, %c0_21] : memref<1x32xf32, #tpu.memory_space<vmem>>, vector<1x32xf32>
      %c0_22 = arith.constant 0 : index
      %c0_23 = arith.constant 0 : index
      %27 = vector.load %arg8[%c0_22, %c0_23] : memref<1x32xf32, #tpu.memory_space<vmem>>, vector<1x32xf32>
      %cst_24 = arith.constant dense<0.000000e+00> : vector<8xf32>
      %28 = vector.multi_reduction <add>, %25, %cst_24 [1] : vector<8x32xf32> to vector<8xf32>
      %29 = vector.shape_cast %28 : vector<8xf32> to vector<8x1xf32>
      %cst_25 = arith.constant 3.200000e+01 : f32
      %30 = vector.broadcast %cst_25 : f32 to vector<8x1xf32>
      %31 = arith.divf %29, %30 : vector<8x1xf32>
      %32 = vector.broadcast %31 : vector<8x1xf32> to vector<8x32xf32>
      %33 = arith.subf %25, %32 : vector<8x32xf32>
      %34 = arith.mulf %33, %33 : vector<8x32xf32>
      %cst_26 = arith.constant dense<0.000000e+00> : vector<8xf32>
      %35 = vector.multi_reduction <add>, %34, %cst_26 [1] : vector<8x32xf32> to vector<8xf32>
      %36 = vector.shape_cast %35 : vector<8xf32> to vector<8x1xf32>
      %cst_27 = arith.constant 3.200000e+01 : f32
      %37 = vector.broadcast %cst_27 : f32 to vector<8x1xf32>
      %38 = arith.divf %36, %37 : vector<8x1xf32>
      %39 = vector.broadcast %31 : vector<8x1xf32> to vector<8x32xf32>
      %40 = arith.subf %25, %39 : vector<8x32xf32>
      %cst_28 = arith.constant 9.99999974E-6 : f32
      %41 = vector.broadcast %cst_28 : f32 to vector<8x1xf32>
      %42 = arith.addf %38, %41 : vector<8x1xf32>
      %43 = math.rsqrt %42 : vector<8x1xf32>
      %44 = vector.broadcast %43 : vector<8x1xf32> to vector<8x32xf32>
      %45 = arith.mulf %40, %44 : vector<8x32xf32>
      %46 = vector.broadcast %26 : vector<1x32xf32> to vector<8x32xf32>
      %47 = arith.mulf %45, %46 : vector<8x32xf32>
      %48 = vector.broadcast %27 : vector<1x32xf32> to vector<8x32xf32>
      %49 = arith.addf %47, %48 : vector<8x32xf32>
      %c0_29 = arith.constant 0 : index
      %c0_30 = arith.constant 0 : index
      %50 = vector.load %arg9[%c0_29, %c0_30] : memref<8x32xf32, #tpu.memory_space<vmem>>, vector<8x32xf32>
      tpu.vector_store %arg9[%c0_29, %c0_30], %49 {strides = array<i32>} : memref<8x32xf32, #tpu.memory_space<vmem>>, vector<8x32xf32>,
    } else {
    }
    return
  }
  func.func @transform_0(%arg0: i32, %arg1: i32) -> (i32, i32) {
    %c0_i32 = arith.constant 0 : i32
    %c0_i32_0 = arith.constant 0 : i32
    return %arg0, %c0_i32 : i32, i32
  }
  func.func @transform_1(%arg0: i32, %arg1: i32) -> (i32, i32) {
    %c0_i32 = arith.constant 0 : i32
    %c0_i32_0 = arith.constant 0 : i32
    return %c0_i32, %arg1 : i32, i32
  }
  func.func @transform_2(%arg0: i32, %arg1: i32) -> (i32, i32) {
    %c0_i32 = arith.constant 0 : i32
    %c0_i32_0 = arith.constant 0 : i32
    return %c0_i32, %arg1 : i32, i32
  }
  func.func @transform_3(%arg0: i32, %arg1: i32) -> (i32, i32) {
    %c0_i32 = arith.constant 0 : i32
    %c0_i32_0 = arith.constant 0 : i32
    return %arg1, %c0_i32 : i32, i32
  }
  func.func @transform_4(%arg0: i32, %arg1: i32) -> (i32, i32) {
    %c0_i32 = arith.constant 0 : i32
    %c0_i32_0 = arith.constant 0 : i32
    %c0_i32_1 = arith.constant 0 : i32
    return %c0_i32, %c0_i32_0 : i32, i32
  }
  func.func @transform_5(%arg0: i32, %arg1: i32) -> (i32, i32) {
    %c0_i32 = arith.constant 0 : i32
    %c0_i32_0 = arith.constant 0 : i32
    %c0_i32_1 = arith.constant 0 : i32
    return %c0_i32, %c0_i32_0 : i32, i32
  }
  func.func @transform_6(%arg0: i32, %arg1: i32) -> (i32, i32) {
    %c0_i32 = arith.constant 0 : i32
    %c0_i32_0 = arith.constant 0 : i32
    %c0_i32_1 = arith.constant 0 : i32
    return %c0_i32, %c0_i32_0 : i32, i32
  }
  func.func @transform_7(%arg0: i32, %arg1: i32) -> (i32, i32) {
    %c0_i32 = arith.constant 0 : i32
    %c0_i32_0 = arith.constant 0 : i32
    return %arg0, %c0_i32 : i32, i32
  }
}

module attributes {stable_mosaic.version = 11 : i64} {
  func.func @_norm_kernel(%arg0: i32, %arg1: memref<8x32xf32, #tpu.memory_space<vmem>>, %arg2: memref<1x32xf32, #tpu.memory_space<vmem>>, %arg3: memref<1x32xf32, #tpu.memory_space<vmem>>, %arg4: memref<8x32xf32, #tpu.memory_space<vmem>>) attributes {dimension_semantics = [#tpu.dimension_semantics<parallel>], iteration_bounds = array<i64: 2>, scalar_prefetch = 0 : i64, scratch_operands = 0 : i64, tpu.core_type = #tpu.core_type<tc>, window_params = [{transform_indices = @transform_0, window_bounds = array<i64: 8, 32>}, {pipeline_mode = #tpu.pipeline_mode<synchronous>, transform_indices = @transform_1, window_bounds = array<i64: 1, 32>}, {pipeline_mode = #tpu.pipeline_mode<synchronous>, transform_indices = @transform_2, window_bounds = array<i64: 1, 32>}, {transform_indices = @transform_3, window_bounds = array<i64: 8, 32>}]} {
    %c0 = arith.constant 0 : index
    %c0_0 = arith.constant 0 : index
    %0 = vector.load %arg1[%c0, %c0_0] : memref<8x32xf32, #tpu.memory_space<vmem>>, vector<8x32xf32>
    %c0_1 = arith.constant 0 : index
    %c0_2 = arith.constant 0 : index
    %1 = vector.load %arg2[%c0_1, %c0_2] : memref<1x32xf32, #tpu.memory_space<vmem>>, vector<1x32xf32>
    %c0_3 = arith.constant 0 : index
    %c0_4 = arith.constant 0 : index
    %2 = vector.load %arg3[%c0_3, %c0_4] : memref<1x32xf32, #tpu.memory_space<vmem>>, vector<1x32xf32>
    %cst = arith.constant dense<0.000000e+00> : vector<8xf32>
    %3 = vector.multi_reduction <add>, %0, %cst [1] : vector<8x32xf32> to vector<8xf32>
    %4 = vector.shape_cast %3 : vector<8xf32> to vector<8x1xf32>
    %cst_5 = arith.constant 3.200000e+01 : f32
    %5 = vector.broadcast %cst_5 : f32 to vector<8x1xf32>
    %6 = arith.divf %4, %5 : vector<8x1xf32>
    %7 = vector.broadcast %6 : vector<8x1xf32> to vector<8x32xf32>
    %8 = arith.subf %0, %7 : vector<8x32xf32>
    %9 = arith.mulf %8, %8 : vector<8x32xf32>
    %cst_6 = arith.constant dense<0.000000e+00> : vector<8xf32>
    %10 = vector.multi_reduction <add>, %9, %cst_6 [1] : vector<8x32xf32> to vector<8xf32>
    %11 = vector.shape_cast %10 : vector<8xf32> to vector<8x1xf32>
    %cst_7 = arith.constant 3.200000e+01 : f32
    %12 = vector.broadcast %cst_7 : f32 to vector<8x1xf32>
    %13 = arith.divf %11, %12 : vector<8x1xf32>
    %14 = vector.broadcast %6 : vector<8x1xf32> to vector<8x32xf32>
    %15 = arith.subf %0, %14 : vector<8x32xf32>
    %cst_8 = arith.constant 9.99999974E-6 : f32
    %16 = vector.broadcast %cst_8 : f32 to vector<8x1xf32>
    %17 = arith.addf %13, %16 : vector<8x1xf32>
    %18 = math.rsqrt %17 : vector<8x1xf32>
    %19 = vector.broadcast %18 : vector<8x1xf32> to vector<8x32xf32>
    %20 = arith.mulf %15, %19 : vector<8x32xf32>
    %21 = vector.broadcast %1 : vector<1x32xf32> to vector<8x32xf32>
    %22 = arith.mulf %20, %21 : vector<8x32xf32>
    %23 = vector.broadcast %2 : vector<1x32xf32> to vector<8x32xf32>
    %24 = arith.addf %22, %23 : vector<8x32xf32>
    %c0_9 = arith.constant 0 : index
    %c0_10 = arith.constant 0 : index
    %25 = vector.load %arg4[%c0_9, %c0_10] : memref<8x32xf32, #tpu.memory_space<vmem>>, vector<8x32xf32>
    tpu.vector_store %arg4[%c0_9, %c0_10], %24 {strides = array<i32>} : memref<8x32xf32, #tpu.memory_space<vmem>>, vector<8x32xf32>,
    return
  }
  func.func @transform_0(%arg0: i32) -> (i32, i32) {
    %c0_i32 = arith.constant 0 : i32
    %c0_i32_0 = arith.constant 0 : i32
    return %arg0, %c0_i32 : i32, i32
  }
  func.func @transform_1(%arg0: i32) -> (i32, i32) {
    %c0_i32 = arith.constant 0 : i32
    %c0_i32_0 = arith.constant 0 : i32
    %c0_i32_1 = arith.constant 0 : i32
    return %c0_i32, %c0_i32_0 : i32, i32
  }
  func.func @transform_2(%arg0: i32) -> (i32, i32) {
    %c0_i32 = arith.constant 0 : i32
    %c0_i32_0 = arith.constant 0 : i32
    %c0_i32_1 = arith.constant 0 : i32
    return %c0_i32, %c0_i32_0 : i32, i32
  }
  func.func @transform_3(%arg0: i32) -> (i32, i32) {
    %c0_i32 = arith.constant 0 : i32
    %c0_i32_0 = arith.constant 0 : i32
    return %arg0, %c0_i32 : i32, i32
  }
}

module attributes {stable_mosaic.version = 11 : i64} {
  func.func @_attn_block_kernel(%arg0: i32, %arg1: memref<1x8x32xf32, #tpu.memory_space<vmem>>, %arg2: memref<32x96xbf16, #tpu.memory_space<vmem>>, %arg3: memref<1x96xf32, #tpu.memory_space<vmem>>, %arg4: memref<32x32xbf16, #tpu.memory_space<vmem>>, %arg5: memref<1x32xf32, #tpu.memory_space<vmem>>, %arg6: memref<1x32xf32, #tpu.memory_space<vmem>>, %arg7: memref<1x32xf32, #tpu.memory_space<vmem>>, %arg8: memref<1x8x32xf32, #tpu.memory_space<vmem>>) attributes {dimension_semantics = [#tpu.dimension_semantics<parallel>], iteration_bounds = array<i64: 2>, scalar_prefetch = 0 : i64, scratch_operands = 0 : i64, tpu.core_type = #tpu.core_type<tc>, window_params = [{transform_indices = @transform_0, window_bounds = array<i64: 1, 8, 32>}, {pipeline_mode = #tpu.pipeline_mode<synchronous>, transform_indices = @transform_1, window_bounds = array<i64: 32, 96>}, {pipeline_mode = #tpu.pipeline_mode<synchronous>, transform_indices = @transform_2, window_bounds = array<i64: 1, 96>}, {pipeline_mode = #tpu.pipeline_mode<synchronous>, transform_indices = @transform_3, window_bounds = array<i64: 32, 32>}, {pipeline_mode = #tpu.pipeline_mode<synchronous>, transform_indices = @transform_4, window_bounds = array<i64: 1, 32>}, {pipeline_mode = #tpu.pipeline_mode<synchronous>, transform_indices = @transform_5, window_bounds = array<i64: 1, 32>}, {pipeline_mode = #tpu.pipeline_mode<synchronous>, transform_indices = @transform_6, window_bounds = array<i64: 1, 32>}, {transform_indices = @transform_7, window_bounds = array<i64: 1, 8, 32>}]} {
    %c0 = arith.constant 0 : index
    %c0_0 = arith.constant 0 : index
    %c0_1 = arith.constant 0 : index
    %0 = vector.load %arg1[%c0, %c0_0, %c0_1] : memref<1x8x32xf32, #tpu.memory_space<vmem>>, vector<1x8x32xf32>
    %1 = vector.shape_cast %0 : vector<1x8x32xf32> to vector<8x32xf32>
    %c0_2 = arith.constant 0 : index
    %c0_3 = arith.constant 0 : index
    %2 = vector.load %arg2[%c0_2, %c0_3] : memref<32x96xbf16, #tpu.memory_space<vmem>>, vector<32x96xbf16>
    %3 = arith.truncf %1 : vector<8x32xf32> to vector<8x32xbf16>
    %cst = arith.constant dense<0.000000e+00> : vector<8x96xf32>
    %4 = tpu.matmul %3, %2, %cst {dimension_numbers = #tpu.dot_dimension_numbers<[1], [0], [0], [1], [0, 0, 1, 1], [], []>} : vector<8x32xbf16>, vector<32x96xbf16>, vector<8x96xf32> -> vector<8x96xf32>
    %c0_4 = arith.constant 0 : index
    %c0_5 = arith.constant 0 : index
    %5 = vector.load %arg3[%c0_4, %c0_5] : memref<1x96xf32, #tpu.memory_space<vmem>>, vector<1x96xf32>
    %6 = vector.broadcast %5 : vector<1x96xf32> to vector<8x96xf32>
    %7 = arith.addf %4, %6 : vector<8x96xf32>
    %8 = vector.extract_strided_slice %7 {offsets = [0, 0], sizes = [8, 8], strides = [1, 1]} : vector<8x96xf32> to vector<8x8xf32>
    %9 = vector.extract_strided_slice %7 {offsets = [0, 32], sizes = [8, 8], strides = [1, 1]} : vector<8x96xf32> to vector<8x8xf32>
    %10 = vector.extract_strided_slice %7 {offsets = [0, 64], sizes = [8, 8], strides = [1, 1]} : vector<8x96xf32> to vector<8x8xf32>
    %11 = arith.truncf %8 : vector<8x8xf32> to vector<8x8xbf16>
    %12 = arith.truncf %9 : vector<8x8xf32> to vector<8x8xbf16>
    %cst_6 = arith.constant dense<0.000000e+00> : vector<8x8xf32>
    %13 = tpu.matmul %11, %12, %cst_6 {dimension_numbers = #tpu.dot_dimension_numbers<[1], [1], [0], [0], [0, 0, 1, 0], [], []>} : vector<8x8xbf16>, vector<8x8xbf16>, vector<8x8xf32> -> vector<8x8xf32>
    %cst_7 = arith.constant dense<0xFF800000> : vector<8xf32>
    %14 = vector.multi_reduction <maximumf>, %13, %cst_7 [1] : vector<8x8xf32> to vector<8xf32>
    %15 = vector.shape_cast %14 : vector<8xf32> to vector<8x1xf32>
    %16 = vector.broadcast %15 : vector<8x1xf32> to vector<8x8xf32>
    %17 = arith.subf %13, %16 : vector<8x8xf32>
    %18 = math.exp %17 : vector<8x8xf32>
    %cst_8 = arith.constant dense<0.000000e+00> : vector<8xf32>
    %19 = vector.multi_reduction <add>, %18, %cst_8 [1] : vector<8x8xf32> to vector<8xf32>
    %20 = vector.shape_cast %19 : vector<8xf32> to vector<8x1xf32>
    %21 = vector.broadcast %20 : vector<8x1xf32> to vector<8x8xf32>
    %22 = arith.divf %18, %21 : vector<8x8xf32>
    %23 = arith.truncf %22 : vector<8x8xf32> to vector<8x8xbf16>
    %24 = arith.truncf %10 : vector<8x8xf32> to vector<8x8xbf16>
    %cst_9 = arith.constant dense<0.000000e+00> : vector<8x8xf32>
    %25 = tpu.matmul %23, %24, %cst_9 {dimension_numbers = #tpu.dot_dimension_numbers<[1], [0], [0], [1], [0, 0, 1, 1], [], []>} : vector<8x8xbf16>, vector<8x8xbf16>, vector<8x8xf32> -> vector<8x8xf32>
    %26 = vector.extract_strided_slice %7 {offsets = [0, 8], sizes = [8, 8], strides = [1, 1]} : vector<8x96xf32> to vector<8x8xf32>
    %27 = vector.extract_strided_slice %7 {offsets = [0, 40], sizes = [8, 8], strides = [1, 1]} : vector<8x96xf32> to vector<8x8xf32>
    %28 = vector.extract_strided_slice %7 {offsets = [0, 72], sizes = [8, 8], strides = [1, 1]} : vector<8x96xf32> to vector<8x8xf32>
    %29 = arith.truncf %26 : vector<8x8xf32> to vector<8x8xbf16>
    %30 = arith.truncf %27 : vector<8x8xf32> to vector<8x8xbf16>
    %cst_10 = arith.constant dense<0.000000e+00> : vector<8x8xf32>
    %31 = tpu.matmul %29, %30, %cst_10 {dimension_numbers = #tpu.dot_dimension_numbers<[1], [1], [0], [0], [0, 0, 1, 0], [], []>} : vector<8x8xbf16>, vector<8x8xbf16>, vector<8x8xf32> -> vector<8x8xf32>
    %cst_11 = arith.constant dense<0xFF800000> : vector<8xf32>
    %32 = vector.multi_reduction <maximumf>, %31, %cst_11 [1] : vector<8x8xf32> to vector<8xf32>
    %33 = vector.shape_cast %32 : vector<8xf32> to vector<8x1xf32>
    %34 = vector.broadcast %33 : vector<8x1xf32> to vector<8x8xf32>
    %35 = arith.subf %31, %34 : vector<8x8xf32>
    %36 = math.exp %35 : vector<8x8xf32>
    %cst_12 = arith.constant dense<0.000000e+00> : vector<8xf32>
    %37 = vector.multi_reduction <add>, %36, %cst_12 [1] : vector<8x8xf32> to vector<8xf32>
    %38 = vector.shape_cast %37 : vector<8xf32> to vector<8x1xf32>
    %39 = vector.broadcast %38 : vector<8x1xf32> to vector<8x8xf32>
    %40 = arith.divf %36, %39 : vector<8x8xf32>
    %41 = arith.truncf %40 : vector<8x8xf32> to vector<8x8xbf16>
    %42 = arith.truncf %28 : vector<8x8xf32> to vector<8x8xbf16>
    %cst_13 = arith.constant dense<0.000000e+00> : vector<8x8xf32>
    %43 = tpu.matmul %41, %42, %cst_13 {dimension_numbers = #tpu.dot_dimension_numbers<[1], [0], [0], [1], [0, 0, 1, 1], [], []>} : vector<8x8xbf16>, vector<8x8xbf16>, vector<8x8xf32> -> vector<8x8xf32>
    %44 = vector.extract_strided_slice %7 {offsets = [0, 16], sizes = [8, 8], strides = [1, 1]} : vector<8x96xf32> to vector<8x8xf32>
    %45 = vector.extract_strided_slice %7 {offsets = [0, 48], sizes = [8, 8], strides = [1, 1]} : vector<8x96xf32> to vector<8x8xf32>
    %46 = vector.extract_strided_slice %7 {offsets = [0, 80], sizes = [8, 8], strides = [1, 1]} : vector<8x96xf32> to vector<8x8xf32>
    %47 = arith.truncf %44 : vector<8x8xf32> to vector<8x8xbf16>
    %48 = arith.truncf %45 : vector<8x8xf32> to vector<8x8xbf16>
    %cst_14 = arith.constant dense<0.000000e+00> : vector<8x8xf32>
    %49 = tpu.matmul %47, %48, %cst_14 {dimension_numbers = #tpu.dot_dimension_numbers<[1], [1], [0], [0], [0, 0, 1, 0], [], []>} : vector<8x8xbf16>, vector<8x8xbf16>, vector<8x8xf32> -> vector<8x8xf32>
    %cst_15 = arith.constant dense<0xFF800000> : vector<8xf32>
    %50 = vector.multi_reduction <maximumf>, %49, %cst_15 [1] : vector<8x8xf32> to vector<8xf32>
    %51 = vector.shape_cast %50 : vector<8xf32> to vector<8x1xf32>
    %52 = vector.broadcast %51 : vector<8x1xf32> to vector<8x8xf32>
    %53 = arith.subf %49, %52 : vector<8x8xf32>
    %54 = math.exp %53 : vector<8x8xf32>
    %cst_16 = arith.constant dense<0.000000e+00> : vector<8xf32>
    %55 = vector.multi_reduction <add>, %54, %cst_16 [1] : vector<8x8xf32> to vector<8xf32>
    %56 = vector.shape_cast %55 : vector<8xf32> to vector<8x1xf32>
    %57 = vector.broadcast %56 : vector<8x1xf32> to vector<8x8xf32>
    %58 = arith.divf %54, %57 : vector<8x8xf32>
    %59 = arith.truncf %58 : vector<8x8xf32> to vector<8x8xbf16>
    %60 = arith.truncf %46 : vector<8x8xf32> to vector<8x8xbf16>
    %cst_17 = arith.constant dense<0.000000e+00> : vector<8x8xf32>
    %61 = tpu.matmul %59, %60, %cst_17 {dimension_numbers = #tpu.dot_dimension_numbers<[1], [0], [0], [1], [0, 0, 1, 1], [], []>} : vector<8x8xbf16>, vector<8x8xbf16>, vector<8x8xf32> -> vector<8x8xf32>
    %62 = vector.extract_strided_slice %7 {offsets = [0, 24], sizes = [8, 8], strides = [1, 1]} : vector<8x96xf32> to vector<8x8xf32>
    %63 = vector.extract_strided_slice %7 {offsets = [0, 56], sizes = [8, 8], strides = [1, 1]} : vector<8x96xf32> to vector<8x8xf32>
    %64 = vector.extract_strided_slice %7 {offsets = [0, 88], sizes = [8, 8], strides = [1, 1]} : vector<8x96xf32> to vector<8x8xf32>
    %65 = arith.truncf %62 : vector<8x8xf32> to vector<8x8xbf16>
    %66 = arith.truncf %63 : vector<8x8xf32> to vector<8x8xbf16>
    %cst_18 = arith.constant dense<0.000000e+00> : vector<8x8xf32>
    %67 = tpu.matmul %65, %66, %cst_18 {dimension_numbers = #tpu.dot_dimension_numbers<[1], [1], [0], [0], [0, 0, 1, 0], [], []>} : vector<8x8xbf16>, vector<8x8xbf16>, vector<8x8xf32> -> vector<8x8xf32>
    %cst_19 = arith.constant dense<0xFF800000> : vector<8xf32>
    %68 = vector.multi_reduction <maximumf>, %67, %cst_19 [1] : vector<8x8xf32> to vector<8xf32>
    %69 = vector.shape_cast %68 : vector<8xf32> to vector<8x1xf32>
    %70 = vector.broadcast %69 : vector<8x1xf32> to vector<8x8xf32>
    %71 = arith.subf %67, %70 : vector<8x8xf32>
    %72 = math.exp %71 : vector<8x8xf32>
    %cst_20 = arith.constant dense<0.000000e+00> : vector<8xf32>
    %73 = vector.multi_reduction <add>, %72, %cst_20 [1] : vector<8x8xf32> to vector<8xf32>
    %74 = vector.shape_cast %73 : vector<8xf32> to vector<8x1xf32>
    %75 = vector.broadcast %74 : vector<8x1xf32> to vector<8x8xf32>
    %76 = arith.divf %72, %75 : vector<8x8xf32>
    %77 = arith.truncf %76 : vector<8x8xf32> to vector<8x8xbf16>
    %78 = arith.truncf %64 : vector<8x8xf32> to vector<8x8xbf16>
    %cst_21 = arith.constant dense<0.000000e+00> : vector<8x8xf32>
    %79 = tpu.matmul %77, %78, %cst_21 {dimension_numbers = #tpu.dot_dimension_numbers<[1], [0], [0], [1], [0, 0, 1, 1], [], []>} : vector<8x8xbf16>, vector<8x8xbf16>, vector<8x8xf32> -> vector<8x8xf32>
    %80 = tpu.concatenate %25, %43, %61, %79 in 1 : vector<8x8xf32>, vector<8x8xf32>, vector<8x8xf32>, vector<8x8xf32> -> vector<8x32xf32>
    %c0_22 = arith.constant 0 : index
    %c0_23 = arith.constant 0 : index
    %81 = vector.load %arg4[%c0_22, %c0_23] : memref<32x32xbf16, #tpu.memory_space<vmem>>, vector<32x32xbf16>
    %82 = arith.truncf %80 : vector<8x32xf32> to vector<8x32xbf16>
    %cst_24 = arith.constant dense<0.000000e+00> : vector<8x32xf32>
    %83 = tpu.matmul %82, %81, %cst_24 {dimension_numbers = #tpu.dot_dimension_numbers<[1], [0], [0], [1], [0, 0, 1, 1], [], []>} : vector<8x32xbf16>, vector<32x32xbf16>, vector<8x32xf32> -> vector<8x32xf32>
    %84 = arith.addf %1, %83 : vector<8x32xf32>
    %c0_25 = arith.constant 0 : index
    %c0_26 = arith.constant 0 : index
    %85 = vector.load %arg5[%c0_25, %c0_26] : memref<1x32xf32, #tpu.memory_space<vmem>>, vector<1x32xf32>
    %86 = vector.broadcast %85 : vector<1x32xf32> to vector<8x32xf32>
    %87 = arith.addf %84, %86 : vector<8x32xf32>
    %c0_27 = arith.constant 0 : index
    %c0_28 = arith.constant 0 : index
    %88 = vector.load %arg6[%c0_27, %c0_28] : memref<1x32xf32, #tpu.memory_space<vmem>>, vector<1x32xf32>
    %c0_29 = arith.constant 0 : index
    %c0_30 = arith.constant 0 : index
    %89 = vector.load %arg7[%c0_29, %c0_30] : memref<1x32xf32, #tpu.memory_space<vmem>>, vector<1x32xf32>
    %cst_31 = arith.constant dense<0.000000e+00> : vector<8xf32>
    %90 = vector.multi_reduction <add>, %87, %cst_31 [1] : vector<8x32xf32> to vector<8xf32>
    %91 = vector.shape_cast %90 : vector<8xf32> to vector<8x1xf32>
    %cst_32 = arith.constant 3.200000e+01 : f32
    %92 = vector.broadcast %cst_32 : f32 to vector<8x1xf32>
    %93 = arith.divf %91, %92 : vector<8x1xf32>
    %94 = vector.broadcast %93 : vector<8x1xf32> to vector<8x32xf32>
    %95 = arith.subf %87, %94 : vector<8x32xf32>
    %96 = arith.mulf %95, %95 : vector<8x32xf32>
    %cst_33 = arith.constant dense<0.000000e+00> : vector<8xf32>
    %97 = vector.multi_reduction <add>, %96, %cst_33 [1] : vector<8x32xf32> to vector<8xf32>
    %98 = vector.shape_cast %97 : vector<8xf32> to vector<8x1xf32>
    %cst_34 = arith.constant 3.200000e+01 : f32
    %99 = vector.broadcast %cst_34 : f32 to vector<8x1xf32>
    %100 = arith.divf %98, %99 : vector<8x1xf32>
    %101 = vector.broadcast %93 : vector<8x1xf32> to vector<8x32xf32>
    %102 = arith.subf %87, %101 : vector<8x32xf32>
    %cst_35 = arith.constant 9.99999974E-6 : f32
    %103 = vector.broadcast %cst_35 : f32 to vector<8x1xf32>
    %104 = arith.addf %100, %103 : vector<8x1xf32>
    %105 = math.rsqrt %104 : vector<8x1xf32>
    %106 = vector.broadcast %105 : vector<8x1xf32> to vector<8x32xf32>
    %107 = arith.mulf %102, %106 : vector<8x32xf32>
    %108 = vector.broadcast %88 : vector<1x32xf32> to vector<8x32xf32>
    %109 = arith.mulf %107, %108 : vector<8x32xf32>
    %110 = vector.broadcast %89 : vector<1x32xf32> to vector<8x32xf32>
    %111 = arith.addf %109, %110 : vector<8x32xf32>
    %c0_36 = arith.constant 0 : index
    %c0_37 = arith.constant 0 : index
    %c0_38 = arith.constant 0 : index
    %112 = vector.load %arg8[%c0_36, %c0_37, %c0_38] : memref<1x8x32xf32, #tpu.memory_space<vmem>>, vector<1x8x32xf32>
    %113 = vector.shape_cast %112 : vector<1x8x32xf32> to vector<8x32xf32>
    %114 = vector.shape_cast %111 : vector<8x32xf32> to vector<1x8x32xf32>
    tpu.vector_store %arg8[%c0_36, %c0_37, %c0_38], %114 {strides = array<i32>} : memref<1x8x32xf32, #tpu.memory_space<vmem>>, vector<1x8x32xf32>,
    return
  }
  func.func @transform_0(%arg0: i32) -> (i32, i32, i32) {
    %c0_i32 = arith.constant 0 : i32
    %c0_i32_0 = arith.constant 0 : i32
    %c0_i32_1 = arith.constant 0 : i32
    return %arg0, %c0_i32, %c0_i32_0 : i32, i32, i32
  }
  func.func @transform_1(%arg0: i32) -> (i32, i32) {
    %c0_i32 = arith.constant 0 : i32
    %c0_i32_0 = arith.constant 0 : i32
    %c0_i32_1 = arith.constant 0 : i32
    return %c0_i32, %c0_i32_0 : i32, i32
  }
  func.func @transform_2(%arg0: i32) -> (i32, i32) {
    %c0_i32 = arith.constant 0 : i32
    %c0_i32_0 = arith.constant 0 : i32
    %c0_i32_1 = arith.constant 0 : i32
    return %c0_i32, %c0_i32_0 : i32, i32
  }
  func.func @transform_3(%arg0: i32) -> (i32, i32) {
    %c0_i32 = arith.constant 0 : i32
    %c0_i32_0 = arith.constant 0 : i32
    %c0_i32_1 = arith.constant 0 : i32
    return %c0_i32, %c0_i32_0 : i32, i32
  }
  func.func @transform_4(%arg0: i32) -> (i32, i32) {
    %c0_i32 = arith.constant 0 : i32
    %c0_i32_0 = arith.constant 0 : i32
    %c0_i32_1 = arith.constant 0 : i32
    return %c0_i32, %c0_i32_0 : i32, i32
  }
  func.func @transform_5(%arg0: i32) -> (i32, i32) {
    %c0_i32 = arith.constant 0 : i32
    %c0_i32_0 = arith.constant 0 : i32
    %c0_i32_1 = arith.constant 0 : i32
    return %c0_i32, %c0_i32_0 : i32, i32
  }
  func.func @transform_6(%arg0: i32) -> (i32, i32) {
    %c0_i32 = arith.constant 0 : i32
    %c0_i32_0 = arith.constant 0 : i32
    %c0_i32_1 = arith.constant 0 : i32
    return %c0_i32, %c0_i32_0 : i32, i32
  }
  func.func @transform_7(%arg0: i32) -> (i32, i32, i32) {
    %c0_i32 = arith.constant 0 : i32
    %c0_i32_0 = arith.constant 0 : i32
    %c0_i32_1 = arith.constant 0 : i32
    return %arg0, %c0_i32, %c0_i32_0 : i32, i32, i32
  }
}

module attributes {stable_mosaic.version = 11 : i64} {
  func.func @_cross_attn_block_kernel(%arg0: i32, %arg1: memref<1x8x32xf32, #tpu.memory_space<vmem>>, %arg2: memref<1x8x32xf32, #tpu.memory_space<vmem>>, %arg3: memref<32x32xbf16, #tpu.memory_space<vmem>>, %arg4: memref<1x32xf32, #tpu.memory_space<vmem>>, %arg5: memref<32x64xbf16, #tpu.memory_space<vmem>>, %arg6: memref<1x64xf32, #tpu.memory_space<vmem>>, %arg7: memref<32x32xbf16, #tpu.memory_space<vmem>>, %arg8: memref<1x32xf32, #tpu.memory_space<vmem>>, %arg9: memref<1x32xf32, #tpu.memory_space<vmem>>, %arg10: memref<1x32xf32, #tpu.memory_space<vmem>>, %arg11: memref<1x8x32xf32, #tpu.memory_space<vmem>>) attributes {dimension_semantics = [#tpu.dimension_semantics<parallel>], iteration_bounds = array<i64: 2>, scalar_prefetch = 0 : i64, scratch_operands = 0 : i64, tpu.core_type = #tpu.core_type<tc>, window_params = [{transform_indices = @transform_0, window_bounds = array<i64: 1, 8, 32>}, {transform_indices = @transform_1, window_bounds = array<i64: 1, 8, 32>}, {pipeline_mode = #tpu.pipeline_mode<synchronous>, transform_indices = @transform_2, window_bounds = array<i64: 32, 32>}, {pipeline_mode = #tpu.pipeline_mode<synchronous>, transform_indices = @transform_3, window_bounds = array<i64: 1, 32>}, {pipeline_mode = #tpu.pipeline_mode<synchronous>, transform_indices = @transform_4, window_bounds = array<i64: 32, 64>}, {pipeline_mode = #tpu.pipeline_mode<synchronous>, transform_indices = @transform_5, window_bounds = array<i64: 1, 64>}, {pipeline_mode = #tpu.pipeline_mode<synchronous>, transform_indices = @transform_6, window_bounds = array<i64: 32, 32>}, {pipeline_mode = #tpu.pipeline_mode<synchronous>, transform_indices = @transform_7, window_bounds = array<i64: 1, 32>}, {pipeline_mode = #tpu.pipeline_mode<synchronous>, transform_indices = @transform_8, window_bounds = array<i64: 1, 32>}, {pipeline_mode = #tpu.pipeline_mode<synchronous>, transform_indices = @transform_9, window_bounds = array<i64: 1, 32>}, {transform_indices = @transform_10, window_bounds = array<i64: 1, 8, 32>}]} {
    %c0 = arith.constant 0 : index
    %c0_0 = arith.constant 0 : index
    %c0_1 = arith.constant 0 : index
    %0 = vector.load %arg1[%c0, %c0_0, %c0_1] : memref<1x8x32xf32, #tpu.memory_space<vmem>>, vector<1x8x32xf32>
    %1 = vector.shape_cast %0 : vector<1x8x32xf32> to vector<8x32xf32>
    %c0_2 = arith.constant 0 : index
    %c0_3 = arith.constant 0 : index
    %c0_4 = arith.constant 0 : index
    %2 = vector.load %arg2[%c0_2, %c0_3, %c0_4] : memref<1x8x32xf32, #tpu.memory_space<vmem>>, vector<1x8x32xf32>
    %3 = vector.shape_cast %2 : vector<1x8x32xf32> to vector<8x32xf32>
    %c0_5 = arith.constant 0 : index
    %c0_6 = arith.constant 0 : index
    %4 = vector.load %arg3[%c0_5, %c0_6] : memref<32x32xbf16, #tpu.memory_space<vmem>>, vector<32x32xbf16>
    %5 = arith.truncf %1 : vector<8x32xf32> to vector<8x32xbf16>
    %cst = arith.constant dense<0.000000e+00> : vector<8x32xf32>
    %6 = tpu.matmul %5, %4, %cst {dimension_numbers = #tpu.dot_dimension_numbers<[1], [0], [0], [1], [0, 0, 1, 1], [], []>} : vector<8x32xbf16>, vector<32x32xbf16>, vector<8x32xf32> -> vector<8x32xf32>
    %c0_7 = arith.constant 0 : index
    %c0_8 = arith.constant 0 : index
    %7 = vector.load %arg4[%c0_7, %c0_8] : memref<1x32xf32, #tpu.memory_space<vmem>>, vector<1x32xf32>
    %8 = vector.broadcast %7 : vector<1x32xf32> to vector<8x32xf32>
    %9 = arith.addf %6, %8 : vector<8x32xf32>
    %c0_9 = arith.constant 0 : index
    %c0_10 = arith.constant 0 : index
    %10 = vector.load %arg5[%c0_9, %c0_10] : memref<32x64xbf16, #tpu.memory_space<vmem>>, vector<32x64xbf16>
    %11 = arith.truncf %3 : vector<8x32xf32> to vector<8x32xbf16>
    %cst_11 = arith.constant dense<0.000000e+00> : vector<8x64xf32>
    %12 = tpu.matmul %11, %10, %cst_11 {dimension_numbers = #tpu.dot_dimension_numbers<[1], [0], [0], [1], [0, 0, 1, 1], [], []>} : vector<8x32xbf16>, vector<32x64xbf16>, vector<8x64xf32> -> vector<8x64xf32>
    %c0_12 = arith.constant 0 : index
    %c0_13 = arith.constant 0 : index
    %13 = vector.load %arg6[%c0_12, %c0_13] : memref<1x64xf32, #tpu.memory_space<vmem>>, vector<1x64xf32>
    %14 = vector.broadcast %13 : vector<1x64xf32> to vector<8x64xf32>
    %15 = arith.addf %12, %14 : vector<8x64xf32>
    %16 = vector.extract_strided_slice %9 {offsets = [0, 0], sizes = [8, 8], strides = [1, 1]} : vector<8x32xf32> to vector<8x8xf32>
    %17 = vector.extract_strided_slice %15 {offsets = [0, 0], sizes = [8, 8], strides = [1, 1]} : vector<8x64xf32> to vector<8x8xf32>
    %18 = vector.extract_strided_slice %15 {offsets = [0, 32], sizes = [8, 8], strides = [1, 1]} : vector<8x64xf32> to vector<8x8xf32>
    %19 = arith.truncf %16 : vector<8x8xf32> to vector<8x8xbf16>
    %20 = arith.truncf %17 : vector<8x8xf32> to vector<8x8xbf16>
    %cst_14 = arith.constant dense<0.000000e+00> : vector<8x8xf32>
    %21 = tpu.matmul %19, %20, %cst_14 {dimension_numbers = #tpu.dot_dimension_numbers<[1], [1], [0], [0], [0, 0, 1, 0], [], []>} : vector<8x8xbf16>, vector<8x8xbf16>, vector<8x8xf32> -> vector<8x8xf32>
    %cst_15 = arith.constant dense<0xFF800000> : vector<8xf32>
    %22 = vector.multi_reduction <maximumf>, %21, %cst_15 [1] : vector<8x8xf32> to vector<8xf32>
    %23 = vector.shape_cast %22 : vector<8xf32> to vector<8x1xf32>
    %24 = vector.broadcast %23 : vector<8x1xf32> to vector<8x8xf32>
    %25 = arith.subf %21, %24 : vector<8x8xf32>
    %26 = math.exp %25 : vector<8x8xf32>
    %cst_16 = arith.constant dense<0.000000e+00> : vector<8xf32>
    %27 = vector.multi_reduction <add>, %26, %cst_16 [1] : vector<8x8xf32> to vector<8xf32>
    %28 = vector.shape_cast %27 : vector<8xf32> to vector<8x1xf32>
    %29 = vector.broadcast %28 : vector<8x1xf32> to vector<8x8xf32>
    %30 = arith.divf %26, %29 : vector<8x8xf32>
    %31 = arith.truncf %30 : vector<8x8xf32> to vector<8x8xbf16>
    %32 = arith.truncf %18 : vector<8x8xf32> to vector<8x8xbf16>
    %cst_17 = arith.constant dense<0.000000e+00> : vector<8x8xf32>
    %33 = tpu.matmul %31, %32, %cst_17 {dimension_numbers = #tpu.dot_dimension_numbers<[1], [0], [0], [1], [0, 0, 1, 1], [], []>} : vector<8x8xbf16>, vector<8x8xbf16>, vector<8x8xf32> -> vector<8x8xf32>
    %34 = vector.extract_strided_slice %9 {offsets = [0, 8], sizes = [8, 8], strides = [1, 1]} : vector<8x32xf32> to vector<8x8xf32>
    %35 = vector.extract_strided_slice %15 {offsets = [0, 8], sizes = [8, 8], strides = [1, 1]} : vector<8x64xf32> to vector<8x8xf32>
    %36 = vector.extract_strided_slice %15 {offsets = [0, 40], sizes = [8, 8], strides = [1, 1]} : vector<8x64xf32> to vector<8x8xf32>
    %37 = arith.truncf %34 : vector<8x8xf32> to vector<8x8xbf16>
    %38 = arith.truncf %35 : vector<8x8xf32> to vector<8x8xbf16>
    %cst_18 = arith.constant dense<0.000000e+00> : vector<8x8xf32>
    %39 = tpu.matmul %37, %38, %cst_18 {dimension_numbers = #tpu.dot_dimension_numbers<[1], [1], [0], [0], [0, 0, 1, 0], [], []>} : vector<8x8xbf16>, vector<8x8xbf16>, vector<8x8xf32> -> vector<8x8xf32>
    %cst_19 = arith.constant dense<0xFF800000> : vector<8xf32>
    %40 = vector.multi_reduction <maximumf>, %39, %cst_19 [1] : vector<8x8xf32> to vector<8xf32>
    %41 = vector.shape_cast %40 : vector<8xf32> to vector<8x1xf32>
    %42 = vector.broadcast %41 : vector<8x1xf32> to vector<8x8xf32>
    %43 = arith.subf %39, %42 : vector<8x8xf32>
    %44 = math.exp %43 : vector<8x8xf32>
    %cst_20 = arith.constant dense<0.000000e+00> : vector<8xf32>
    %45 = vector.multi_reduction <add>, %44, %cst_20 [1] : vector<8x8xf32> to vector<8xf32>
    %46 = vector.shape_cast %45 : vector<8xf32> to vector<8x1xf32>
    %47 = vector.broadcast %46 : vector<8x1xf32> to vector<8x8xf32>
    %48 = arith.divf %44, %47 : vector<8x8xf32>
    %49 = arith.truncf %48 : vector<8x8xf32> to vector<8x8xbf16>
    %50 = arith.truncf %36 : vector<8x8xf32> to vector<8x8xbf16>
    %cst_21 = arith.constant dense<0.000000e+00> : vector<8x8xf32>
    %51 = tpu.matmul %49, %50, %cst_21 {dimension_numbers = #tpu.dot_dimension_numbers<[1], [0], [0], [1], [0, 0, 1, 1], [], []>} : vector<8x8xbf16>, vector<8x8xbf16>, vector<8x8xf32> -> vector<8x8xf32>
    %52 = vector.extract_strided_slice %9 {offsets = [0, 16], sizes = [8, 8], strides = [1, 1]} : vector<8x32xf32> to vector<8x8xf32>
    %53 = vector.extract_strided_slice %15 {offsets = [0, 16], sizes = [8, 8], strides = [1, 1]} : vector<8x64xf32> to vector<8x8xf32>
    %54 = vector.extract_strided_slice %15 {offsets = [0, 48], sizes = [8, 8], strides = [1, 1]} : vector<8x64xf32> to vector<8x8xf32>
    %55 = arith.truncf %52 : vector<8x8xf32> to vector<8x8xbf16>
    %56 = arith.truncf %53 : vector<8x8xf32> to vector<8x8xbf16>
    %cst_22 = arith.constant dense<0.000000e+00> : vector<8x8xf32>
    %57 = tpu.matmul %55, %56, %cst_22 {dimension_numbers = #tpu.dot_dimension_numbers<[1], [1], [0], [0], [0, 0, 1, 0], [], []>} : vector<8x8xbf16>, vector<8x8xbf16>, vector<8x8xf32> -> vector<8x8xf32>
    %cst_23 = arith.constant dense<0xFF800000> : vector<8xf32>
    %58 = vector.multi_reduction <maximumf>, %57, %cst_23 [1] : vector<8x8xf32> to vector<8xf32>
    %59 = vector.shape_cast %58 : vector<8xf32> to vector<8x1xf32>
    %60 = vector.broadcast %59 : vector<8x1xf32> to vector<8x8xf32>
    %61 = arith.subf %57, %60 : vector<8x8xf32>
    %62 = math.exp %61 : vector<8x8xf32>
    %cst_24 = arith.constant dense<0.000000e+00> : vector<8xf32>
    %63 = vector.multi_reduction <add>, %62, %cst_24 [1] : vector<8x8xf32> to vector<8xf32>
    %64 = vector.shape_cast %63 : vector<8xf32> to vector<8x1xf32>
    %65 = vector.broadcast %64 : vector<8x1xf32> to vector<8x8xf32>
    %66 = arith.divf %62, %65 : vector<8x8xf32>
    %67 = arith.truncf %66 : vector<8x8xf32> to vector<8x8xbf16>
    %68 = arith.truncf %54 : vector<8x8xf32> to vector<8x8xbf16>
    %cst_25 = arith.constant dense<0.000000e+00> : vector<8x8xf32>
    %69 = tpu.matmul %67, %68, %cst_25 {dimension_numbers = #tpu.dot_dimension_numbers<[1], [0], [0], [1], [0, 0, 1, 1], [], []>} : vector<8x8xbf16>, vector<8x8xbf16>, vector<8x8xf32> -> vector<8x8xf32>
    %70 = vector.extract_strided_slice %9 {offsets = [0, 24], sizes = [8, 8], strides = [1, 1]} : vector<8x32xf32> to vector<8x8xf32>
    %71 = vector.extract_strided_slice %15 {offsets = [0, 24], sizes = [8, 8], strides = [1, 1]} : vector<8x64xf32> to vector<8x8xf32>
    %72 = vector.extract_strided_slice %15 {offsets = [0, 56], sizes = [8, 8], strides = [1, 1]} : vector<8x64xf32> to vector<8x8xf32>
    %73 = arith.truncf %70 : vector<8x8xf32> to vector<8x8xbf16>
    %74 = arith.truncf %71 : vector<8x8xf32> to vector<8x8xbf16>
    %cst_26 = arith.constant dense<0.000000e+00> : vector<8x8xf32>
    %75 = tpu.matmul %73, %74, %cst_26 {dimension_numbers = #tpu.dot_dimension_numbers<[1], [1], [0], [0], [0, 0, 1, 0], [], []>} : vector<8x8xbf16>, vector<8x8xbf16>, vector<8x8xf32> -> vector<8x8xf32>
    %cst_27 = arith.constant dense<0xFF800000> : vector<8xf32>
    %76 = vector.multi_reduction <maximumf>, %75, %cst_27 [1] : vector<8x8xf32> to vector<8xf32>
    %77 = vector.shape_cast %76 : vector<8xf32> to vector<8x1xf32>
    %78 = vector.broadcast %77 : vector<8x1xf32> to vector<8x8xf32>
    %79 = arith.subf %75, %78 : vector<8x8xf32>
    %80 = math.exp %79 : vector<8x8xf32>
    %cst_28 = arith.constant dense<0.000000e+00> : vector<8xf32>
    %81 = vector.multi_reduction <add>, %80, %cst_28 [1] : vector<8x8xf32> to vector<8xf32>
    %82 = vector.shape_cast %81 : vector<8xf32> to vector<8x1xf32>
    %83 = vector.broadcast %82 : vector<8x1xf32> to vector<8x8xf32>
    %84 = arith.divf %80, %83 : vector<8x8xf32>
    %85 = arith.truncf %84 : vector<8x8xf32> to vector<8x8xbf16>
    %86 = arith.truncf %72 : vector<8x8xf32> to vector<8x8xbf16>
    %cst_29 = arith.constant dense<0.000000e+00> : vector<8x8xf32>
    %87 = tpu.matmul %85, %86, %cst_29 {dimension_numbers = #tpu.dot_dimension_numbers<[1], [0], [0], [1], [0, 0, 1, 1], [], []>} : vector<8x8xbf16>, vector<8x8xbf16>, vector<8x8xf32> -> vector<8x8xf32>
    %88 = tpu.concatenate %33, %51, %69, %87 in 1 : vector<8x8xf32>, vector<8x8xf32>, vector<8x8xf32>, vector<8x8xf32> -> vector<8x32xf32>
    %c0_30 = arith.constant 0 : index
    %c0_31 = arith.constant 0 : index
    %89 = vector.load %arg7[%c0_30, %c0_31] : memref<32x32xbf16, #tpu.memory_space<vmem>>, vector<32x32xbf16>
    %90 = arith.truncf %88 : vector<8x32xf32> to vector<8x32xbf16>
    %cst_32 = arith.constant dense<0.000000e+00> : vector<8x32xf32>
    %91 = tpu.matmul %90, %89, %cst_32 {dimension_numbers = #tpu.dot_dimension_numbers<[1], [0], [0], [1], [0, 0, 1, 1], [], []>} : vector<8x32xbf16>, vector<32x32xbf16>, vector<8x32xf32> -> vector<8x32xf32>
    %92 = arith.addf %1, %91 : vector<8x32xf32>
    %c0_33 = arith.constant 0 : index
    %c0_34 = arith.constant 0 : index
    %93 = vector.load %arg8[%c0_33, %c0_34] : memref<1x32xf32, #tpu.memory_space<vmem>>, vector<1x32xf32>
    %94 = vector.broadcast %93 : vector<1x32xf32> to vector<8x32xf32>
    %95 = arith.addf %92, %94 : vector<8x32xf32>
    %c0_35 = arith.constant 0 : index
    %c0_36 = arith.constant 0 : index
    %96 = vector.load %arg9[%c0_35, %c0_36] : memref<1x32xf32, #tpu.memory_space<vmem>>, vector<1x32xf32>
    %c0_37 = arith.constant 0 : index
    %c0_38 = arith.constant 0 : index
    %97 = vector.load %arg10[%c0_37, %c0_38] : memref<1x32xf32, #tpu.memory_space<vmem>>, vector<1x32xf32>
    %cst_39 = arith.constant dense<0.000000e+00> : vector<8xf32>
    %98 = vector.multi_reduction <add>, %95, %cst_39 [1] : vector<8x32xf32> to vector<8xf32>
    %99 = vector.shape_cast %98 : vector<8xf32> to vector<8x1xf32>
    %cst_40 = arith.constant 3.200000e+01 : f32
    %100 = vector.broadcast %cst_40 : f32 to vector<8x1xf32>
    %101 = arith.divf %99, %100 : vector<8x1xf32>
    %102 = vector.broadcast %101 : vector<8x1xf32> to vector<8x32xf32>
    %103 = arith.subf %95, %102 : vector<8x32xf32>
    %104 = arith.mulf %103, %103 : vector<8x32xf32>
    %cst_41 = arith.constant dense<0.000000e+00> : vector<8xf32>
    %105 = vector.multi_reduction <add>, %104, %cst_41 [1] : vector<8x32xf32> to vector<8xf32>
    %106 = vector.shape_cast %105 : vector<8xf32> to vector<8x1xf32>
    %cst_42 = arith.constant 3.200000e+01 : f32
    %107 = vector.broadcast %cst_42 : f32 to vector<8x1xf32>
    %108 = arith.divf %106, %107 : vector<8x1xf32>
    %109 = vector.broadcast %101 : vector<8x1xf32> to vector<8x32xf32>
    %110 = arith.subf %95, %109 : vector<8x32xf32>
    %cst_43 = arith.constant 9.99999974E-6 : f32
    %111 = vector.broadcast %cst_43 : f32 to vector<8x1xf32>
    %112 = arith.addf %108, %111 : vector<8x1xf32>
    %113 = math.rsqrt %112 : vector<8x1xf32>
    %114 = vector.broadcast %113 : vector<8x1xf32> to vector<8x32xf32>
    %115 = arith.mulf %110, %114 : vector<8x32xf32>
    %116 = vector.broadcast %96 : vector<1x32xf32> to vector<8x32xf32>
    %117 = arith.mulf %115, %116 : vector<8x32xf32>
    %118 = vector.broadcast %97 : vector<1x32xf32> to vector<8x32xf32>
    %119 = arith.addf %117, %118 : vector<8x32xf32>
    %c0_44 = arith.constant 0 : index
    %c0_45 = arith.constant 0 : index
    %c0_46 = arith.constant 0 : index
    %120 = vector.load %arg11[%c0_44, %c0_45, %c0_46] : memref<1x8x32xf32, #tpu.memory_space<vmem>>, vector<1x8x32xf32>
    %121 = vector.shape_cast %120 : vector<1x8x32xf32> to vector<8x32xf32>
    %122 = vector.shape_cast %119 : vector<8x32xf32> to vector<1x8x32xf32>
    tpu.vector_store %arg11[%c0_44, %c0_45, %c0_46], %122 {strides = array<i32>} : memref<1x8x32xf32, #tpu.memory_space<vmem>>, vector<1x8x32xf32>,
    return
  }
  func.func @transform_0(%arg0: i32) -> (i32, i32, i32) {
    %c0_i32 = arith.constant 0 : i32
    %c0_i32_0 = arith.constant 0 : i32
    %c0_i32_1 = arith.constant 0 : i32
    return %arg0, %c0_i32, %c0_i32_0 : i32, i32, i32
  }
  func.func @transform_1(%arg0: i32) -> (i32, i32, i32) {
    %c0_i32 = arith.constant 0 : i32
    %c0_i32_0 = arith.constant 0 : i32
    %c0_i32_1 = arith.constant 0 : i32
    return %arg0, %c0_i32, %c0_i32_0 : i32, i32, i32
  }
  func.func @transform_2(%arg0: i32) -> (i32, i32) {
    %c0_i32 = arith.constant 0 : i32
    %c0_i32_0 = arith.constant 0 : i32
    %c0_i32_1 = arith.constant 0 : i32
    return %c0_i32, %c0_i32_0 : i32, i32
  }
  func.func @transform_3(%arg0: i32) -> (i32, i32) {
    %c0_i32 = arith.constant 0 : i32
    %c0_i32_0 = arith.constant 0 : i32
    %c0_i32_1 = arith.constant 0 : i32
    return %c0_i32, %c0_i32_0 : i32, i32
  }
  func.func @transform_4(%arg0: i32) -> (i32, i32) {
    %c0_i32 = arith.constant 0 : i32
    %c0_i32_0 = arith.constant 0 : i32
    %c0_i32_1 = arith.constant 0 : i32
    return %c0_i32, %c0_i32_0 : i32, i32
  }
  func.func @transform_5(%arg0: i32) -> (i32, i32) {
    %c0_i32 = arith.constant 0 : i32
    %c0_i32_0 = arith.constant 0 : i32
    %c0_i32_1 = arith.constant 0 : i32
    return %c0_i32, %c0_i32_0 : i32, i32
  }
  func.func @transform_6(%arg0: i32) -> (i32, i32) {
    %c0_i32 = arith.constant 0 : i32
    %c0_i32_0 = arith.constant 0 : i32
    %c0_i32_1 = arith.constant 0 : i32
    return %c0_i32, %c0_i32_0 : i32, i32
  }
  func.func @transform_7(%arg0: i32) -> (i32, i32) {
    %c0_i32 = arith.constant 0 : i32
    %c0_i32_0 = arith.constant 0 : i32
    %c0_i32_1 = arith.constant 0 : i32
    return %c0_i32, %c0_i32_0 : i32, i32
  }
  func.func @transform_8(%arg0: i32) -> (i32, i32) {
    %c0_i32 = arith.constant 0 : i32
    %c0_i32_0 = arith.constant 0 : i32
    %c0_i32_1 = arith.constant 0 : i32
    return %c0_i32, %c0_i32_0 : i32, i32
  }
  func.func @transform_9(%arg0: i32) -> (i32, i32) {
    %c0_i32 = arith.constant 0 : i32
    %c0_i32_0 = arith.constant 0 : i32
    %c0_i32_1 = arith.constant 0 : i32
    return %c0_i32, %c0_i32_0 : i32, i32
  }
  func.func @transform_10(%arg0: i32) -> (i32, i32, i32) {
    %c0_i32 = arith.constant 0 : i32
    %c0_i32_0 = arith.constant 0 : i32
    %c0_i32_1 = arith.constant 0 : i32
    return %arg0, %c0_i32, %c0_i32_0 : i32, i32, i32
  }
}

module attributes {stable_mosaic.version = 11 : i64} {
  func.func @_norm_linear_kernel(%arg0: i32, %arg1: memref<8x32xf32, #tpu.memory_space<vmem>>, %arg2: memref<1x32xf32, #tpu.memory_space<vmem>>, %arg3: memref<1x32xf32, #tpu.memory_space<vmem>>, %arg4: memref<32x8xbf16, #tpu.memory_space<vmem>>, %arg5: memref<1x8xf32, #tpu.memory_space<vmem>>, %arg6: memref<8x8xf32, #tpu.memory_space<vmem>>) attributes {dimension_semantics = [#tpu.dimension_semantics<parallel>], iteration_bounds = array<i64: 2>, scalar_prefetch = 0 : i64, scratch_operands = 0 : i64, tpu.core_type = #tpu.core_type<tc>, window_params = [{transform_indices = @transform_0, window_bounds = array<i64: 8, 32>}, {pipeline_mode = #tpu.pipeline_mode<synchronous>, transform_indices = @transform_1, window_bounds = array<i64: 1, 32>}, {pipeline_mode = #tpu.pipeline_mode<synchronous>, transform_indices = @transform_2, window_bounds = array<i64: 1, 32>}, {pipeline_mode = #tpu.pipeline_mode<synchronous>, transform_indices = @transform_3, window_bounds = array<i64: 32, 8>}, {pipeline_mode = #tpu.pipeline_mode<synchronous>, transform_indices = @transform_4, window_bounds = array<i64: 1, 8>}, {transform_indices = @transform_5, window_bounds = array<i64: 8, 8>}]} {
    %c0 = arith.constant 0 : index
    %c0_0 = arith.constant 0 : index
    %0 = vector.load %arg1[%c0, %c0_0] : memref<8x32xf32, #tpu.memory_space<vmem>>, vector<8x32xf32>
    %c0_1 = arith.constant 0 : index
    %c0_2 = arith.constant 0 : index
    %1 = vector.load %arg2[%c0_1, %c0_2] : memref<1x32xf32, #tpu.memory_space<vmem>>, vector<1x32xf32>
    %c0_3 = arith.constant 0 : index
    %c0_4 = arith.constant 0 : index
    %2 = vector.load %arg3[%c0_3, %c0_4] : memref<1x32xf32, #tpu.memory_space<vmem>>, vector<1x32xf32>
    %cst = arith.constant dense<0.000000e+00> : vector<8xf32>
    %3 = vector.multi_reduction <add>, %0, %cst [1] : vector<8x32xf32> to vector<8xf32>
    %4 = vector.shape_cast %3 : vector<8xf32> to vector<8x1xf32>
    %cst_5 = arith.constant 3.200000e+01 : f32
    %5 = vector.broadcast %cst_5 : f32 to vector<8x1xf32>
    %6 = arith.divf %4, %5 : vector<8x1xf32>
    %7 = vector.broadcast %6 : vector<8x1xf32> to vector<8x32xf32>
    %8 = arith.subf %0, %7 : vector<8x32xf32>
    %9 = arith.mulf %8, %8 : vector<8x32xf32>
    %cst_6 = arith.constant dense<0.000000e+00> : vector<8xf32>
    %10 = vector.multi_reduction <add>, %9, %cst_6 [1] : vector<8x32xf32> to vector<8xf32>
    %11 = vector.shape_cast %10 : vector<8xf32> to vector<8x1xf32>
    %cst_7 = arith.constant 3.200000e+01 : f32
    %12 = vector.broadcast %cst_7 : f32 to vector<8x1xf32>
    %13 = arith.divf %11, %12 : vector<8x1xf32>
    %14 = vector.broadcast %6 : vector<8x1xf32> to vector<8x32xf32>
    %15 = arith.subf %0, %14 : vector<8x32xf32>
    %cst_8 = arith.constant 9.99999974E-6 : f32
    %16 = vector.broadcast %cst_8 : f32 to vector<8x1xf32>
    %17 = arith.addf %13, %16 : vector<8x1xf32>
    %18 = math.rsqrt %17 : vector<8x1xf32>
    %19 = vector.broadcast %18 : vector<8x1xf32> to vector<8x32xf32>
    %20 = arith.mulf %15, %19 : vector<8x32xf32>
    %21 = vector.broadcast %1 : vector<1x32xf32> to vector<8x32xf32>
    %22 = arith.mulf %20, %21 : vector<8x32xf32>
    %23 = vector.broadcast %2 : vector<1x32xf32> to vector<8x32xf32>
    %24 = arith.addf %22, %23 : vector<8x32xf32>
    %c0_9 = arith.constant 0 : index
    %c0_10 = arith.constant 0 : index
    %25 = vector.load %arg4[%c0_9, %c0_10] : memref<32x8xbf16, #tpu.memory_space<vmem>>, vector<32x8xbf16>
    %26 = arith.truncf %24 : vector<8x32xf32> to vector<8x32xbf16>
    %cst_11 = arith.constant dense<0.000000e+00> : vector<8x8xf32>
    %27 = tpu.matmul %26, %25, %cst_11 {dimension_numbers = #tpu.dot_dimension_numbers<[1], [0], [0], [1], [0, 0, 1, 1], [], []>} : vector<8x32xbf16>, vector<32x8xbf16>, vector<8x8xf32> -> vector<8x8xf32>
    %c0_12 = arith.constant 0 : index
    %c0_13 = arith.constant 0 : index
    %28 = vector.load %arg5[%c0_12, %c0_13] : memref<1x8xf32, #tpu.memory_space<vmem>>, vector<1x8xf32>
    %29 = vector.broadcast %28 : vector<1x8xf32> to vector<8x8xf32>
    %30 = arith.addf %27, %29 : vector<8x8xf32>
    %c0_14 = arith.constant 0 : index
    %c0_15 = arith.constant 0 : index
    %31 = vector.load %arg6[%c0_14, %c0_15] : memref<8x8xf32, #tpu.memory_space<vmem>>, vector<8x8xf32>
    tpu.vector_store %arg6[%c0_14, %c0_15], %30 {strides = array<i32>} : memref<8x8xf32, #tpu.memory_space<vmem>>, vector<8x8xf32>,
    return
  }
  func.func @transform_0(%arg0: i32) -> (i32, i32) {
    %c0_i32 = arith.constant 0 : i32
    %c0_i32_0 = arith.constant 0 : i32
    return %arg0, %c0_i32 : i32, i32
  }
  func.func @transform_1(%arg0: i32) -> (i32, i32) {
    %c0_i32 = arith.constant 0 : i32
    %c0_i32_0 = arith.constant 0 : i32
    %c0_i32_1 = arith.constant 0 : i32
    return %c0_i32, %c0_i32_0 : i32, i32
  }
  func.func @transform_2(%arg0: i32) -> (i32, i32) {
    %c0_i32 = arith.constant 0 : i32
    %c0_i32_0 = arith.constant 0 : i32
    %c0_i32_1 = arith.constant 0 : i32
    return %c0_i32, %c0_i32_0 : i32, i32
  }
  func.func @transform_3(%arg0: i32) -> (i32, i32) {
    %c0_i32 = arith.constant 0 : i32
    %c0_i32_0 = arith.constant 0 : i32
    %c0_i32_1 = arith.constant 0 : i32
    return %c0_i32, %c0_i32_0 : i32, i32
  }
  func.func @transform_4(%arg0: i32) -> (i32, i32) {
    %c0_i32 = arith.constant 0 : i32
    %c0_i32_0 = arith.constant 0 : i32
    %c0_i32_1 = arith.constant 0 : i32
    return %c0_i32, %c0_i32_0 : i32, i32
  }
  func.func @transform_5(%arg0: i32) -> (i32, i32) {
    %c0_i32 = arith.constant 0 : i32
    %c0_i32_0 = arith.constant 0 : i32
    return %arg0, %c0_i32 : i32, i32
  }
}

</mosaic_0001>

<llo_original>
// kernel: transformer_model_forward.13
$region0: #{transformer_model_forward.13}
  #allocation0 [shape = 'u32[]', space=smem, size = 0x4, offset = 0x4, fixed_abs, tag = 'smem constant byte address 0x4 - core index']
  #allocation1 [shape = 'u32[144,128]{1,0:T(1,128)}', space=vmem, size = 0x12000, scoped, tag = 'internal scratch']
  %s0 = inlined_call_operand.vmem [shape: f32[2,8,8], index: 0, kind: input, shape index: {}]
  %s1 = inlined_call_operand.vmem [shape: f32[8,32], index: 1, kind: input, shape index: {}]
  %s2 = inlined_call_operand.vmem [shape: bf16[8,32], index: 2, kind: input, shape index: {}]
  %s3 = inlined_call_operand.vmem [shape: f32[1,32], index: 3, kind: input, shape index: {}]
  %s4 = inlined_call_operand.vmem [shape: f32[2,8,32], index: 4, kind: output, shape index: {}]
  %s5 = sld [smem:[#allocation0]]
  $region49: #{transformer_model_forward.13} parent=0
    _
  %s7 = ssub.s32 1, %s5
  %s8 = scalar_select 0, %s7, %s5
  loop: start=0, step=1, limit=4
  $region2: #{transformer_model_forward.13} parent=0 // loop_pre_header
    _
  $region3: #{transformer_model_forward.13} parent=0 // loop_header
    %s10 = sphi 0, %s14
    %p11 = scmp.ge.s32.totalorder %s10, 4
    %s17 = sphi 0, %s29
    %s18 = sphi 0, %s25
    %s19 = sphi 0, %s17
    %s20 = sphi 0, %s18
    %s21 = sphi 0, %s19
    %s22 = sphi 0, %s20
    %s34 = sphi 0, %s36
    %s37 = sphi 0, %s34
    %s38 = sphi 0, %s37
    %s54 = sphi 0, %s38
    %s60 = sphi 0, %s62
    %s63 = sphi 0, %s60
    %s64 = sphi 0, %s63
    %s80 = sphi 0, %s64
    %s84 = sphi 0, %s84
    %s86 = sphi 0, %s84
    %s87 = sphi 0, %s86
    %s101 = sphi 0, %s87
    %s105 = sphi 0, %s105
    %s107 = sphi 0, %s105
    %s108 = sphi 0, %s107
    %s122 = sphi 0, %s108
    %s130 = sphi 0, %s132
    %s133 = sphi 0, %s130
    %s134 = sphi 0, %s133
    %s150 = sphi 0, %s134
  $region4: #{transformer_model_forward.13} parent=0 // loop_header_branch
    %13 = sbr.rel (%p11) target = $region8
  $region5: #{transformer_model_forward.13} parent=0 // loop_body
    %s15 = ssub.s32 %s10, 1
    %s16 = ssub.s32 %s10, 2
    %s23 = sadd.s32 1, %s18
    %p24 = scmp.ge.s32.totalorder %s23, 1
    %s25 = scalar_select %p24, 0, %s23
    %s26 = sadd.s32 1, %s17
    %s27 = scalar_select %p24, %s26, %s17
    %p28 = scmp.ge.s32.totalorder %s27, 2
    %s29 = scalar_select %p28, 0, %s27
    %s30 = ssub.s32 %s17, %s29
    %s31 = ssub.s32 %s18, %s25
    %s32 = sor.u32 %s30, %s31
    %p33 = scmp.eq.s32.totalorder %s32, 0
    %s35 = sadd.s32 %s34, 1
    %s36 = scalar_select %p33, %s34, %s35
    %p39 = pneg %p33
    %p40 = scmp.eq.s32.totalorder %s10, 1
    %p41 = por %p39, %p40
    %p42 = scmp.ne.s32.totalorder %s34, %s37
    %p43 = scmp.eq.s32.totalorder %s10, 0
    %p44 = por %p42, %p43
    %p45 = scmp.ne.s32.totalorder %s34, %s37
    %p46 = scmp.eq.s32.totalorder %s15, 1
    %p47 = por %p45, %p46
    %p48 = scmp.ne.s32.totalorder %s37, %s38
    %p49 = scmp.eq.s32.totalorder %s15, 0
    %p50 = por %p48, %p49
    %p51 = scmp.ne.s32.totalorder %s37, %s38
    %p52 = scmp.eq.s32.totalorder %s16, 1
    %p53 = por %p51, %p52
    %p55 = scmp.ne.s32.totalorder %s38, %s54
    %p56 = scmp.eq.s32.totalorder %s16, 0
    %p57 = por %p55, %p56
    %s58 = ssub.s32 %s18, %s25
    %p59 = scmp.eq.s32.totalorder %s58, 0
    %s61 = sadd.s32 %s60, 1
    %s62 = scalar_select %p59, %s60, %s61
    %p65 = pneg %p59
    %p66 = scmp.eq.s32.totalorder %s10, 1
    %p67 = por %p65, %p66
    %p68 = scmp.ne.s32.totalorder %s60, %s63
    %p69 = scmp.eq.s32.totalorder %s10, 0
    %p70 = por %p68, %p69
    %p71 = scmp.ne.s32.totalorder %s60, %s63
    %p72 = scmp.eq.s32.totalorder %s15, 1
    %p73 = por %p71, %p72
    %p74 = scmp.ne.s32.totalorder %s63, %s64
    %p75 = scmp.eq.s32.totalorder %s15, 0
    %p76 = por %p74, %p75
    %p77 = scmp.ne.s32.totalorder %s63, %s64
    %p78 = scmp.eq.s32.totalorder %s16, 1
    %p79 = por %p77, %p78
    %p81 = scmp.ne.s32.totalorder %s64, %s80
    %p82 = scmp.eq.s32.totalorder %s16, 0
    %p83 = por %p81, %p82
    %s85 = sadd.s32 %s84, 1
    %p88 = scmp.eq.s32.totalorder %s10, 1
    %p89 = scmp.ne.s32.totalorder %s84, %s86
    %p90 = scmp.eq.s32.totalorder %s10, 0
    %p91 = por %p89, %p90
    %p92 = scmp.ne.s32.totalorder %s84, %s86
    %p93 = scmp.eq.s32.totalorder %s15, 1
    %p94 = por %p92, %p93
    %p95 = scmp.ne.s32.totalorder %s86, %s87
    %p96 = scmp.eq.s32.totalorder %s15, 0
    %p97 = por %p95, %p96
    %p98 = scmp.ne.s32.totalorder %s86, %s87
    %p99 = scmp.eq.s32.totalorder %s16, 1
    %p100 = por %p98, %p99
    %p102 = scmp.ne.s32.totalorder %s87, %s101
    %p103 = scmp.eq.s32.totalorder %s16, 0
    %p104 = por %p102, %p103
    %s106 = sadd.s32 %s105, 1
    %p109 = scmp.eq.s32.totalorder %s10, 1
    %p110 = scmp.ne.s32.totalorder %s105, %s107
    %p111 = scmp.eq.s32.totalorder %s10, 0
    %p112 = por %p110, %p111
    %p113 = scmp.ne.s32.totalorder %s105, %s107
    %p114 = scmp.eq.s32.totalorder %s15, 1
    %p115 = por %p113, %p114
    %p116 = scmp.ne.s32.totalorder %s107, %s108
    %p117 = scmp.eq.s32.totalorder %s15, 0
    %p118 = por %p116, %p117
    %p119 = scmp.ne.s32.totalorder %s107, %s108
    %p120 = scmp.eq.s32.totalorder %s16, 1
    %p121 = por %p119, %p120
    %p123 = scmp.ne.s32.totalorder %s108, %s122
    %p124 = scmp.eq.s32.totalorder %s16, 0
    %p125 = por %p123, %p124
    %s126 = ssub.s32 %s17, %s29
    %s127 = ssub.s32 %s18, %s25
    %s128 = sor.u32 %s126, %s127
    %p129 = scmp.eq.s32.totalorder %s128, 0
    %s131 = sadd.s32 %s130, 1
    %s132 = scalar_select %p129, %s130, %s131
    %p135 = pneg %p129
    %p136 = scmp.eq.s32.totalorder %s10, 1
    %p137 = por %p135, %p136
    %p138 = scmp.ne.s32.totalorder %s130, %s133
    %p139 = scmp.eq.s32.totalorder %s10, 0
    %p140 = por %p138, %p139
    %p141 = scmp.ne.s32.totalorder %s130, %s133
    %p142 = scmp.eq.s32.totalorder %s15, 1
    %p143 = por %p141, %p142
    %p144 = scmp.ne.s32.totalorder %s133, %s134
    %p145 = scmp.eq.s32.totalorder %s15, 0
    %p146 = por %p144, %p145
    %p147 = scmp.ne.s32.totalorder %s133, %s134
    %p148 = scmp.eq.s32.totalorder %s16, 1
    %p149 = por %p147, %p148
    %p151 = scmp.ne.s32.totalorder %s134, %s150
    %p152 = scmp.eq.s32.totalorder %s16, 0
    %p153 = por %p151, %p152
    %p154 = scmp.le.s32.totalorder 1, %s10
    %p155 = scmp.lt.s32.totalorder %s10, 3
    %p156 = pnand %p154, %p155
    %p157 = pneg %p156
    // Predicated region
    $region9: #{transformer_model_forward.13} parent=5 // pred_check
      _
    $region10: #{transformer_model_forward.13} parent=5 // pred_check_branch
      %159 = sbr.rel (%p156) target = $region12
    $region11: #{transformer_model_forward.13} parent=5 // pred_region
      %s160 = ssub.s32 %s10, 1
      // Predicated region
      $region13: #{transformer_model_forward.13} parent=11 // pred_check
        %p161 = pneg %p76
      $region14: #{transformer_model_forward.13} parent=11 // pred_check_branch
        %163 = sbr.rel (%p161) target = $region16
      $region15: #{transformer_model_forward.13} parent=11 // pred_region
        %p164 = scmp.lt.s32.totalorder %s20, 0
        %s165 = scalar_select %p164, %s20, 0
        %s166 = smul.addr %s165, 8
        %s167 = scalar_lea.vmem %s1, %s166
      $region16: #{transformer_model_forward.13} parent=11 // pred_fallthru
        _
      // Predicated region
      $region17: #{transformer_model_forward.13} parent=11 // pred_check
        %p168 = pneg %p97
      $region18: #{transformer_model_forward.13} parent=11 // pred_check_branch
        %170 = sbr.rel (%p168) target = $region20
      $region19: #{transformer_model_forward.13} parent=11 // pred_region
        _
      $region20: #{transformer_model_forward.13} parent=11 // pred_fallthru
        _
      // Predicated region
      $region21: #{transformer_model_forward.13} parent=11 // pred_check
        %p171 = pneg %p118
      $region22: #{transformer_model_forward.13} parent=11 // pred_check_branch
        %173 = sbr.rel (%p171) target = $region24
      $region23: #{transformer_model_forward.13} parent=11 // pred_region
        _
      $region24: #{transformer_model_forward.13} parent=11 // pred_fallthru
        _
    $region12: #{transformer_model_forward.13} parent=5 // pred_fallthru
      _
    %p174 = scmp.lt.s32.totalorder %s10, 2
    // Predicated region
    $region25: #{transformer_model_forward.13} parent=5 // pred_check
      %p175 = pneg %p174
    $region26: #{transformer_model_forward.13} parent=5 // pred_check_branch
      %177 = sbr.rel (%p175) target = $region28
    $region27: #{transformer_model_forward.13} parent=5 // pred_region
      // Predicated region
      $region29: #{transformer_model_forward.13} parent=27 // pred_check
        %p178 = pneg %p44
      $region30: #{transformer_model_forward.13} parent=27 // pred_check_branch
        %180 = sbr.rel (%p178) target = $region32
      $region31: #{transformer_model_forward.13} parent=27 // pred_region
        %p181 = scmp.lt.s32.totalorder %s17, 1
        %s182 = scalar_select %p181, %s17, 1
        %p183 = scmp.lt.s32.totalorder %s18, 0
        %s184 = scalar_select %p183, %s18, 0
        %s185 = sadd.s32 %s184, %s182
        %s186 = smul.addr %s185, 8
        %s187 = scalar_lea.vmem %s0, %s186
      $region32: #{transformer_model_forward.13} parent=27 // pred_fallthru
        _
    $region28: #{transformer_model_forward.13} parent=5 // pred_fallthru
      _
    %p188 = scmp.le.s32.totalorder 1, %s10
    %p189 = scmp.lt.s32.totalorder %s10, 3
    %p190 = pnand %p188, %p189
    %p191 = pneg %p190
    // Predicated region
    $region33: #{transformer_model_forward.13} parent=5 // pred_check
      _
    $region34: #{transformer_model_forward.13} parent=5 // pred_check_branch
      %193 = sbr.rel (%p190) target = $region36
    $region35: #{transformer_model_forward.13} parent=5 // pred_region
      %s194 = ssub.s32 %s10, 1
      %p195 = scmp.lt.s32.totalorder %s19, 1
      %s196 = scalar_select %p195, %s19, 1
      %p197 = scmp.lt.s32.totalorder %s20, 0
      %s198 = scalar_select %p197, %s20, 0
      %s199 = sadd.s32 %s198, %s196
      %s200 = smul.addr %s199, 8
      %s201 = scalar_lea.vmem %s0, %s200
      %p202 = pneg %p50
      %p203 = pneg %p47
      %p204 = scmp.lt.s32.totalorder %s20, 0
      %s205 = scalar_select %p204, %s20, 0
      %s206 = smul.addr %s205, 8
      %s207 = scalar_lea.vmem %s1, %s206
      %p208 = pneg %p76
      %p209 = pneg %p73
      %p210 = pneg %p97
      %p211 = pneg %p94
      %p212 = pneg %p118
      %p213 = pneg %p115
      %p214 = pneg %p146
      %p215 = pneg %p143
      %p216 = scmp.lt.s32.totalorder %s19, 1
      %s217 = scalar_select %p216, %s19, 1
      %p218 = scmp.lt.s32.totalorder %s20, 0
      %s219 = scalar_select %p218, %s20, 0
      %s220 = sadd.s32 %s219, %s217
      %s221 = smul.addr %s220, 8
      %s222 = scalar_lea.vmem %s4, %s221
      %p223 = scmp.lt.s32.totalorder %s19, 1
      %s224 = scalar_select %p223, %s19, 1
      %p225 = scmp.lt.s32.totalorder %s20, 0
      %s226 = scalar_select %p225, %s20, 0
      %s227 = sadd.s32 %s226, %s224
      %s228 = smul.addr %s227, 8
      %s229 = scalar_lea.vmem %s0, %s228
      %p230 = scmp.lt.s32.totalorder %s20, 0
      %s231 = scalar_select %p230, %s20, 0
      %s232 = smul.addr %s231, 8
      %s233 = scalar_lea.vmem %s1, %s232
      %p234 = scmp.lt.s32.totalorder %s19, 1
      %s235 = scalar_select %p234, %s19, 1
      %p236 = scmp.lt.s32.totalorder %s20, 0
      %s237 = scalar_select %p236, %s20, 0
      %s238 = sadd.s32 %s237, %s235
      %s239 = smul.addr %s238, 8
      %s240 = scalar_lea.vmem %s4, %s239
      %v242 = vld [vmem:[%s229] sm:$0xff]
      %v243 = vld [vmem:[%s2] sm:$0xf]
      %v244 = vpack.c.bf16 %v242, %v242
      %v245 = vld [vmem:[%s3] sm:$0x1]
      %v247 = vlaneseq
      %v248 = vshrl.u32 %v247, 7
      %v249 = vsub.s32 0, %v248
      %v250 = vrot.slane %v245, %v249
      %vm252 = vcmask 64512
      %v254 = vsel %vm252, %v244, 0
      %vm256 = vcmask 1043456
      %v258 = vsel %vm256, %v243, 0
      %260 = vmatprep.subr.bf16.mxu0 0
      %261 = vmatpush1.bf16.msra.mxu0 %v258
      %262 = vmatprep.subr.bf16.mxu0 0
      %263 = vmatpush1.bf16.msra.mxu0 0
      %264 = vmatprep.subr.bf16.mxu0 0
      %265 = vmatpush1.bf16.msra.mxu0 0
      %266 = vmatprep.subr.bf16.mxu0 0
      %267 = vmatpush1.bf16.msra.mxu0 0
      %268 = vmatprep.subr.bf16.mxu0 0
      %269 = vmatpush1.bf16.msra.mxu0 0
      %270 = vmatprep.subr.bf16.mxu0 0
      %271 = vmatpush1.bf16.msra.mxu0 0
      %272 = vmatprep.subr.bf16.mxu0 0
      %273 = vmatpush1.bf16.msra.mxu0 0
      %274 = vmatprep.subr.bf16.mxu0 0
      %275 = vmatpush1.bf16.msra.mxu0 0
      %276 = vmatprep.subr.bf16.mxu0 0
      %277 = vmatpush1.bf16.msra.mxu0 0
      %278 = vmatprep.subr.bf16.mxu0 0
      %279 = vmatpush1.bf16.msra.mxu0 0
      %280 = vmatprep.subr.bf16.mxu0 0
      %281 = vmatpush1.bf16.msra.mxu0 0
      %282 = vmatprep.subr.bf16.mxu0 0
      %283 = vmatpush1.bf16.msra.mxu0 0
      %284 = vmatprep.subr.bf16.mxu0 0
      %285 = vmatpush1.bf16.msra.mxu0 0
      %286 = vmatprep.subr.bf16.mxu0 0
      %287 = vmatpush1.bf16.msra.mxu0 0
      %288 = vmatprep.subr.bf16.mxu0 0
      %289 = vmatpush1.bf16.msra.mxu0 0
      %290 = vmatprep.subr.bf16.mxu0 0
      %291 = vmatpush1.bf16.msra.mxu0 0
      %292 = vmatprep.mubr.bf16.mxu0 0
      %293 = vmatmul.mubr.bf16.gmra.mrb[0].mxu0 %v254
      %v294 = vpop.f32.mrb[0].mxu0
      %v295 = vadd.f32 %v250, %v294
      %v296 = vpop.f32.mrb[0].mxu0
      %v297 = vpop.f32.mrb[0].mxu0
      %v298 = vpop.f32.mrb[0].mxu0
      %299 = vdwg.mxu0
      %v300 = vld [vmem:[%s233] sm:$0xff]
      %v301 = vadd.f32 %v295, %v300
      %vm302 = vcmask 261120
      %303 = vst.msk [vmem:[%s240] sm:$0xff] %vm302, %v301
      %p304 = scmp.lt.s32.totalorder %s19, 1
      %s305 = scalar_select %p304, %s19, 1
      %p306 = scmp.lt.s32.totalorder %s20, 0
      %s307 = scalar_select %p306, %s20, 0
      %s308 = sadd.s32 %s307, %s305
      %s309 = smul.addr %s308, 8
      %s310 = scalar_lea.vmem %s4, %s309
      // Predicated region
      $region37: #{transformer_model_forward.13} parent=35 // pred_check
        %p311 = pneg %p143
      $region38: #{transformer_model_forward.13} parent=35 // pred_check_branch
        %313 = sbr.rel (%p311) target = $region40
      $region39: #{transformer_model_forward.13} parent=35 // pred_region
        _
      $region40: #{transformer_model_forward.13} parent=35 // pred_fallthru
        _
    $region36: #{transformer_model_forward.13} parent=5 // pred_fallthru
      _
    %p314 = scmp.le.s32.totalorder 2, %s10
    // Predicated region
    $region41: #{transformer_model_forward.13} parent=5 // pred_check
      %p315 = pneg %p314
    $region42: #{transformer_model_forward.13} parent=5 // pred_check_branch
      %317 = sbr.rel (%p315) target = $region44
    $region43: #{transformer_model_forward.13} parent=5 // pred_region
      %s318 = ssub.s32 %s10, 2
      // Predicated region
      $region45: #{transformer_model_forward.13} parent=43 // pred_check
        %p319 = pneg %p149
      $region46: #{transformer_model_forward.13} parent=43 // pred_check_branch
        %321 = sbr.rel (%p319) target = $region48
      $region47: #{transformer_model_forward.13} parent=43 // pred_region
        %p322 = scmp.lt.s32.totalorder %s21, 1
        %s323 = scalar_select %p322, %s21, 1
        %p324 = scmp.lt.s32.totalorder %s22, 0
        %s325 = scalar_select %p324, %s22, 0
        %s326 = sadd.s32 %s325, %s323
        %s327 = smul.addr %s326, 8
        %s328 = scalar_lea.vmem %s4, %s327
      $region48: #{transformer_model_forward.13} parent=43 // pred_fallthru
        _
    $region44: #{transformer_model_forward.13} parent=5 // pred_fallthru
      _
  $region6: #{transformer_model_forward.13} parent=0 // loop_footer
    %s14 = sadd.s32 1, %s10
  $region7: #{transformer_model_forward.13} parent=0 // loop_footer_branch
    %9 = sbr.rel target = $region3
  $region8: #{transformer_model_forward.13} parent=0 // loop_exit
    _

// kernel: transformer_model_forward.14
$region0: #{transformer_model_forward.14}
  #allocation0 [shape = 'u32[]', space=smem, size = 0x4, offset = 0x4, fixed_abs, tag = 'smem constant byte address 0x4 - core index']
  #allocation1 [shape = 'u32[144,128]{1,0:T(1,128)}', space=vmem, size = 0x12000, scoped, tag = 'internal scratch']
  %s0 = inlined_call_operand.vmem [shape: f32[2,8,32], index: 0, kind: input, shape index: {}]
  %s1 = inlined_call_operand.vmem [shape: bf16[32,96], index: 1, kind: input, shape index: {}]
  %s2 = inlined_call_operand.vmem [shape: f32[1,96], index: 2, kind: input, shape index: {}]
  %s3 = inlined_call_operand.vmem [shape: bf16[32,32], index: 3, kind: input, shape index: {}]
  %s4 = inlined_call_operand.vmem [shape: f32[1,32], index: 4, kind: input, shape index: {}]
  %s5 = inlined_call_operand.vmem [shape: f32[1,32], index: 5, kind: input, shape index: {}]
  %s6 = inlined_call_operand.vmem [shape: f32[1,32], index: 6, kind: input, shape index: {}]
  %s7 = inlined_call_operand.vmem [shape: f32[2,8,32], index: 7, kind: output, shape index: {}]
  %s8 = sld [smem:[#allocation0]]
  $region61: #{transformer_model_forward.14} parent=0
    _
  %s10 = ssub.s32 1, %s8
  %s11 = scalar_select 0, %s10, %s8
  loop: start=0, step=1, limit=4
  $region2: #{transformer_model_forward.14} parent=0 // loop_pre_header
    _
  $region3: #{transformer_model_forward.14} parent=0 // loop_header
    %s13 = sphi 0, %s17
    %p14 = scmp.ge.s32.totalorder %s13, 4
    %s23 = sphi 0, %s25
    %s26 = sphi 0, %s23
    %s27 = sphi 0, %s26
    %s43 = sphi 0, %s27
    %s47 = sphi 0, %s47
    %s49 = sphi 0, %s47
    %s50 = sphi 0, %s49
    %s64 = sphi 0, %s50
    %s68 = sphi 0, %s68
    %s70 = sphi 0, %s68
    %s71 = sphi 0, %s70
    %s85 = sphi 0, %s71
    %s89 = sphi 0, %s89
    %s91 = sphi 0, %s89
    %s92 = sphi 0, %s91
    %s106 = sphi 0, %s92
    %s110 = sphi 0, %s110
    %s112 = sphi 0, %s110
    %s113 = sphi 0, %s112
    %s127 = sphi 0, %s113
    %s131 = sphi 0, %s131
    %s133 = sphi 0, %s131
    %s134 = sphi 0, %s133
    %s148 = sphi 0, %s134
    %s152 = sphi 0, %s152
    %s154 = sphi 0, %s152
    %s155 = sphi 0, %s154
    %s169 = sphi 0, %s155
    %s175 = sphi 0, %s177
    %s178 = sphi 0, %s175
    %s179 = sphi 0, %s178
    %s195 = sphi 0, %s179
  $region4: #{transformer_model_forward.14} parent=0 // loop_header_branch
    %16 = sbr.rel (%p14) target = $region8
  $region5: #{transformer_model_forward.14} parent=0 // loop_body
    %s18 = ssub.s32 %s13, 1
    %s19 = ssub.s32 %s13, 2
    %s20 = sadd.s32 %s13, 1
    %s21 = ssub.s32 %s13, %s20
    %p22 = scmp.eq.s32.totalorder %s21, 0
    %s24 = sadd.s32 %s23, 1
    %s25 = scalar_select %p22, %s23, %s24
    %p28 = pneg %p22
    %p29 = scmp.eq.s32.totalorder %s13, 1
    %p30 = por %p28, %p29
    %p31 = scmp.ne.s32.totalorder %s23, %s26
    %p32 = scmp.eq.s32.totalorder %s13, 0
    %p33 = por %p31, %p32
    %p34 = scmp.ne.s32.totalorder %s23, %s26
    %p35 = scmp.eq.s32.totalorder %s18, 1
    %p36 = por %p34, %p35
    %p37 = scmp.ne.s32.totalorder %s26, %s27
    %p38 = scmp.eq.s32.totalorder %s18, 0
    %p39 = por %p37, %p38
    %p40 = scmp.ne.s32.totalorder %s26, %s27
    %p41 = scmp.eq.s32.totalorder %s19, 1
    %p42 = por %p40, %p41
    %p44 = scmp.ne.s32.totalorder %s27, %s43
    %p45 = scmp.eq.s32.totalorder %s19, 0
    %p46 = por %p44, %p45
    %s48 = sadd.s32 %s47, 1
    %p51 = scmp.eq.s32.totalorder %s13, 1
    %p52 = scmp.ne.s32.totalorder %s47, %s49
    %p53 = scmp.eq.s32.totalorder %s13, 0
    %p54 = por %p52, %p53
    %p55 = scmp.ne.s32.totalorder %s47, %s49
    %p56 = scmp.eq.s32.totalorder %s18, 1
    %p57 = por %p55, %p56
    %p58 = scmp.ne.s32.totalorder %s49, %s50
    %p59 = scmp.eq.s32.totalorder %s18, 0
    %p60 = por %p58, %p59
    %p61 = scmp.ne.s32.totalorder %s49, %s50
    %p62 = scmp.eq.s32.totalorder %s19, 1
    %p63 = por %p61, %p62
    %p65 = scmp.ne.s32.totalorder %s50, %s64
    %p66 = scmp.eq.s32.totalorder %s19, 0
    %p67 = por %p65, %p66
    %s69 = sadd.s32 %s68, 1
    %p72 = scmp.eq.s32.totalorder %s13, 1
    %p73 = scmp.ne.s32.totalorder %s68, %s70
    %p74 = scmp.eq.s32.totalorder %s13, 0
    %p75 = por %p73, %p74
    %p76 = scmp.ne.s32.totalorder %s68, %s70
    %p77 = scmp.eq.s32.totalorder %s18, 1
    %p78 = por %p76, %p77
    %p79 = scmp.ne.s32.totalorder %s70, %s71
    %p80 = scmp.eq.s32.totalorder %s18, 0
    %p81 = por %p79, %p80
    %p82 = scmp.ne.s32.totalorder %s70, %s71
    %p83 = scmp.eq.s32.totalorder %s19, 1
    %p84 = por %p82, %p83
    %p86 = scmp.ne.s32.totalorder %s71, %s85
    %p87 = scmp.eq.s32.totalorder %s19, 0
    %p88 = por %p86, %p87
    %s90 = sadd.s32 %s89, 1
    %p93 = scmp.eq.s32.totalorder %s13, 1
    %p94 = scmp.ne.s32.totalorder %s89, %s91
    %p95 = scmp.eq.s32.totalorder %s13, 0
    %p96 = por %p94, %p95
    %p97 = scmp.ne.s32.totalorder %s89, %s91
    %p98 = scmp.eq.s32.totalorder %s18, 1
    %p99 = por %p97, %p98
    %p100 = scmp.ne.s32.totalorder %s91, %s92
    %p101 = scmp.eq.s32.totalorder %s18, 0
    %p102 = por %p100, %p101
    %p103 = scmp.ne.s32.totalorder %s91, %s92
    %p104 = scmp.eq.s32.totalorder %s19, 1
    %p105 = por %p103, %p104
    %p107 = scmp.ne.s32.totalorder %s92, %s106
    %p108 = scmp.eq.s32.totalorder %s19, 0
    %p109 = por %p107, %p108
    %s111 = sadd.s32 %s110, 1
    %p114 = scmp.eq.s32.totalorder %s13, 1
    %p115 = scmp.ne.s32.totalorder %s110, %s112
    %p116 = scmp.eq.s32.totalorder %s13, 0
    %p117 = por %p115, %p116
    %p118 = scmp.ne.s32.totalorder %s110, %s112
    %p119 = scmp.eq.s32.totalorder %s18, 1
    %p120 = por %p118, %p119
    %p121 = scmp.ne.s32.totalorder %s112, %s113
    %p122 = scmp.eq.s32.totalorder %s18, 0
    %p123 = por %p121, %p122
    %p124 = scmp.ne.s32.totalorder %s112, %s113
    %p125 = scmp.eq.s32.totalorder %s19, 1
    %p126 = por %p124, %p125
    %p128 = scmp.ne.s32.totalorder %s113, %s127
    %p129 = scmp.eq.s32.totalorder %s19, 0
    %p130 = por %p128, %p129
    %s132 = sadd.s32 %s131, 1
    %p135 = scmp.eq.s32.totalorder %s13, 1
    %p136 = scmp.ne.s32.totalorder %s131, %s133
    %p137 = scmp.eq.s32.totalorder %s13, 0
    %p138 = por %p136, %p137
    %p139 = scmp.ne.s32.totalorder %s131, %s133
    %p140 = scmp.eq.s32.totalorder %s18, 1
    %p141 = por %p139, %p140
    %p142 = scmp.ne.s32.totalorder %s133, %s134
    %p143 = scmp.eq.s32.totalorder %s18, 0
    %p144 = por %p142, %p143
    %p145 = scmp.ne.s32.totalorder %s133, %s134
    %p146 = scmp.eq.s32.totalorder %s19, 1
    %p147 = por %p145, %p146
    %p149 = scmp.ne.s32.totalorder %s134, %s148
    %p150 = scmp.eq.s32.totalorder %s19, 0
    %p151 = por %p149, %p150
    %s153 = sadd.s32 %s152, 1
    %p156 = scmp.eq.s32.totalorder %s13, 1
    %p157 = scmp.ne.s32.totalorder %s152, %s154
    %p158 = scmp.eq.s32.totalorder %s13, 0
    %p159 = por %p157, %p158
    %p160 = scmp.ne.s32.totalorder %s152, %s154
    %p161 = scmp.eq.s32.totalorder %s18, 1
    %p162 = por %p160, %p161
    %p163 = scmp.ne.s32.totalorder %s154, %s155
    %p164 = scmp.eq.s32.totalorder %s18, 0
    %p165 = por %p163, %p164
    %p166 = scmp.ne.s32.totalorder %s154, %s155
    %p167 = scmp.eq.s32.totalorder %s19, 1
    %p168 = por %p166, %p167
    %p170 = scmp.ne.s32.totalorder %s155, %s169
    %p171 = scmp.eq.s32.totalorder %s19, 0
    %p172 = por %p170, %p171
    %s173 = ssub.s32 %s13, %s20
    %p174 = scmp.eq.s32.totalorder %s173, 0
    %s176 = sadd.s32 %s175, 1
    %s177 = scalar_select %p174, %s175, %s176
    %p180 = pneg %p174
    %p181 = scmp.eq.s32.totalorder %s13, 1
    %p182 = por %p180, %p181
    %p183 = scmp.ne.s32.totalorder %s175, %s178
    %p184 = scmp.eq.s32.totalorder %s13, 0
    %p185 = por %p183, %p184
    %p186 = scmp.ne.s32.totalorder %s175, %s178
    %p187 = scmp.eq.s32.totalorder %s18, 1
    %p188 = por %p186, %p187
    %p189 = scmp.ne.s32.totalorder %s178, %s179
    %p190 = scmp.eq.s32.totalorder %s18, 0
    %p191 = por %p189, %p190
    %p192 = scmp.ne.s32.totalorder %s178, %s179
    %p193 = scmp.eq.s32.totalorder %s19, 1
    %p194 = por %p192, %p193
    %p196 = scmp.ne.s32.totalorder %s179, %s195
    %p197 = scmp.eq.s32.totalorder %s19, 0
    %p198 = por %p196, %p197
    %p199 = scmp.le.s32.totalorder 1, %s13
    %p200 = scmp.lt.s32.totalorder %s13, 3
    %p201 = pnand %p199, %p200
    %p202 = pneg %p201
    // Predicated region
    $region9: #{transformer_model_forward.14} parent=5 // pred_check
      _
    $region10: #{transformer_model_forward.14} parent=5 // pred_check_branch
      %204 = sbr.rel (%p201) target = $region12
    $region11: #{transformer_model_forward.14} parent=5 // pred_region
      %s205 = ssub.s32 %s13, 1
      // Predicated region
      $region13: #{transformer_model_forward.14} parent=11 // pred_check
        %p206 = pneg %p60
      $region14: #{transformer_model_forward.14} parent=11 // pred_check_branch
        %208 = sbr.rel (%p206) target = $region16
      $region15: #{transformer_model_forward.14} parent=11 // pred_region
        _
      $region16: #{transformer_model_forward.14} parent=11 // pred_fallthru
        _
      // Predicated region
      $region17: #{transformer_model_forward.14} parent=11 // pred_check
        %p209 = pneg %p81
      $region18: #{transformer_model_forward.14} parent=11 // pred_check_branch
        %211 = sbr.rel (%p209) target = $region20
      $region19: #{transformer_model_forward.14} parent=11 // pred_region
        _
      $region20: #{transformer_model_forward.14} parent=11 // pred_fallthru
        _
      // Predicated region
      $region21: #{transformer_model_forward.14} parent=11 // pred_check
        %p212 = pneg %p102
      $region22: #{transformer_model_forward.14} parent=11 // pred_check_branch
        %214 = sbr.rel (%p212) target = $region24
      $region23: #{transformer_model_forward.14} parent=11 // pred_region
        _
      $region24: #{transformer_model_forward.14} parent=11 // pred_fallthru
        _
      // Predicated region
      $region25: #{transformer_model_forward.14} parent=11 // pred_check
        %p215 = pneg %p123
      $region26: #{transformer_model_forward.14} parent=11 // pred_check_branch
        %217 = sbr.rel (%p215) target = $region28
      $region27: #{transformer_model_forward.14} parent=11 // pred_region
        _
      $region28: #{transformer_model_forward.14} parent=11 // pred_fallthru
        _
      // Predicated region
      $region29: #{transformer_model_forward.14} parent=11 // pred_check
        %p218 = pneg %p144
      $region30: #{transformer_model_forward.14} parent=11 // pred_check_branch
        %220 = sbr.rel (%p218) target = $region32
      $region31: #{transformer_model_forward.14} parent=11 // pred_region
        _
      $region32: #{transformer_model_forward.14} parent=11 // pred_fallthru
        _
      // Predicated region
      $region33: #{transformer_model_forward.14} parent=11 // pred_check
        %p221 = pneg %p165
      $region34: #{transformer_model_forward.14} parent=11 // pred_check_branch
        %223 = sbr.rel (%p221) target = $region36
      $region35: #{transformer_model_forward.14} parent=11 // pred_region
        _
      $region36: #{transformer_model_forward.14} parent=11 // pred_fallthru
        _
    $region12: #{transformer_model_forward.14} parent=5 // pred_fallthru
      _
    %p224 = scmp.lt.s32.totalorder %s13, 2
    // Predicated region
    $region37: #{transformer_model_forward.14} parent=5 // pred_check
      %p225 = pneg %p224
    $region38: #{transformer_model_forward.14} parent=5 // pred_check_branch
      %227 = sbr.rel (%p225) target = $region40
    $region39: #{transformer_model_forward.14} parent=5 // pred_region
      // Predicated region
      $region41: #{transformer_model_forward.14} parent=39 // pred_check
        %p228 = pneg %p33
      $region42: #{transformer_model_forward.14} parent=39 // pred_check_branch
        %230 = sbr.rel (%p228) target = $region44
      $region43: #{transformer_model_forward.14} parent=39 // pred_region
        %p231 = scmp.lt.s32.totalorder %s13, 1
        %s232 = scalar_select %p231, %s13, 1
        %s233 = smul.addr %s232, 8
        %s234 = scalar_lea.vmem %s0, %s233
      $region44: #{transformer_model_forward.14} parent=39 // pred_fallthru
        _
    $region40: #{transformer_model_forward.14} parent=5 // pred_fallthru
      _
    %p235 = scmp.le.s32.totalorder 1, %s13
    %p236 = scmp.lt.s32.totalorder %s13, 3
    %p237 = pnand %p235, %p236
    %p238 = pneg %p237
    // Predicated region
    $region45: #{transformer_model_forward.14} parent=5 // pred_check
      _
    $region46: #{transformer_model_forward.14} parent=5 // pred_check_branch
      %240 = sbr.rel (%p237) target = $region48
    $region47: #{transformer_model_forward.14} parent=5 // pred_region
      %s241 = ssub.s32 %s13, 1
      %p242 = scmp.lt.s32.totalorder %s18, 1
      %s243 = scalar_select %p242, %s18, 1
      %s244 = smul.addr %s243, 8
      %s245 = scalar_lea.vmem %s0, %s244
      %p246 = pneg %p39
      %p247 = pneg %p36
      %p248 = pneg %p60
      %p249 = pneg %p57
      %p250 = pneg %p81
      %p251 = pneg %p78
      %p252 = pneg %p102
      %p253 = pneg %p99
      %p254 = pneg %p123
      %p255 = pneg %p120
      %p256 = pneg %p144
      %p257 = pneg %p141
      %p258 = pneg %p165
      %p259 = pneg %p162
      %p260 = pneg %p191
      %p261 = pneg %p188
      %p262 = scmp.lt.s32.totalorder %s18, 1
      %s263 = scalar_select %p262, %s18, 1
      %s264 = smul.addr %s263, 8
      %s265 = scalar_lea.vmem %s7, %s264
      %p266 = scmp.lt.s32.totalorder %s18, 1
      %s267 = scalar_select %p266, %s18, 1
      %s268 = smul.addr %s267, 8
      %s269 = scalar_lea.vmem %s0, %s268
      %p270 = scmp.lt.s32.totalorder %s18, 1
      %s271 = scalar_select %p270, %s18, 1
      %s272 = smul.addr %s271, 8
      %s273 = scalar_lea.vmem %s7, %s272
      %v275 = vld [vmem:[%s269] sm:$0xff]
      %v276 = vld [vmem:[%s1] sm:$0xf]
      %v277 = vld [vmem:[%s1 + $0x4] sm:$0xf]
      %v278 = vld [vmem:[%s1 + $0x8] sm:$0xf]
      %v279 = vld [vmem:[%s1 + $0xc] sm:$0xf]
      %v280 = vpack.c.bf16 %v275, %v275
      %v281 = vld [vmem:[%s2] sm:$0x1]
      %v283 = vlaneseq
      %v284 = vshrl.u32 %v283, 7
      %v285 = vsub.s32 0, %v284
      %v286 = vrot.slane %v281, %v285
      %v292 = vunpack.c.l.b16 %v276
      %v293 = vunpack.c.l.b16 %v277
      %v294 = vunpack.c.l.b16 %v278
      %v295 = vunpack.c.l.b16 %v279
      %v296 = vpack.c.b16 %v293, %v292
      %v297 = vpack.c.b16 %v295, %v294
      %vm300 = vcmask 261120
      %v302 = vsel %vm300, %v280, 0
      %304 = vmatprep.subr.bf16.mxu0 0
      %305 = vmatpush1.bf16.msra.mxu0 %v296
      %306 = vmatprep.subr.bf16.mxu0 0
      %307 = vmatpush1.bf16.msra.mxu0 %v297
      %308 = vmatprep.subr.bf16.mxu0 0
      %309 = vmatpush1.bf16.msra.mxu0 0
      %310 = vmatprep.subr.bf16.mxu0 0
      %311 = vmatpush1.bf16.msra.mxu0 0
      %312 = vmatprep.subr.bf16.mxu0 0
      %313 = vmatpush1.bf16.msra.mxu0 0
      %314 = vmatprep.subr.bf16.mxu0 0
      %315 = vmatpush1.bf16.msra.mxu0 0
      %316 = vmatprep.subr.bf16.mxu0 0
      %317 = vmatpush1.bf16.msra.mxu0 0
      %318 = vmatprep.subr.bf16.mxu0 0
      %319 = vmatpush1.bf16.msra.mxu0 0
      %320 = vmatprep.subr.bf16.mxu0 0
      %321 = vmatpush1.bf16.msra.mxu0 0
      %322 = vmatprep.subr.bf16.mxu0 0
      %323 = vmatpush1.bf16.msra.mxu0 0
      %324 = vmatprep.subr.bf16.mxu0 0
      %325 = vmatpush1.bf16.msra.mxu0 0
      %326 = vmatprep.subr.bf16.mxu0 0
      %327 = vmatpush1.bf16.msra.mxu0 0
      %328 = vmatprep.subr.bf16.mxu0 0
      %329 = vmatpush1.bf16.msra.mxu0 0
      %330 = vmatprep.subr.bf16.mxu0 0
      %331 = vmatpush1.bf16.msra.mxu0 0
      %332 = vmatprep.subr.bf16.mxu0 0
      %333 = vmatpush1.bf16.msra.mxu0 0
      %334 = vmatprep.subr.bf16.mxu0 0
      %335 = vmatpush1.bf16.msra.mxu0 0
      %336 = vmatprep.mubr.bf16.mxu0 0
      %337 = vmatmul.mubr.bf16.gmra.mrb[0].mxu0 %v302
      %v338 = vpop.f32.mrb[0].mxu0
      %v339 = vadd.f32 %v286, %v338
      %v340 = vpop.f32.mrb[0].mxu0
      %v341 = vpop.f32.mrb[0].mxu0
      %v342 = vpop.f32.mrb[0].mxu0
      %343 = vdwg.mxu0
      %v344 = vlaneseq
      %v345 = vshrl.u32 %v344, 7
      %v346 = vlaneseq
      %v347 = vand.u32 %v346, 127
      %vm348 = vcmp.le.s32.totalorder %v347, %v345
      %v349 = vsel %vm348, 0.0, -1e+30
      %v350 = vpack.c.bf16 %v339, %v339
      %352 = vrot.lane.b32.xlu0 %v350, 96
      %v353 = vpop.permute.xlu0 %352
      %vm354 = vcmask 64512
      %v356 = vsel %vm354, %v350, 0
      %v359 = vsel %vm354, %v353, 0
      %361 = vmatprep.subr.bf16.mxu0 0
      %362 = vmatpush1.bf16.xpose.msra.mxu0 %v359
      %363 = vmatprep.subr.bf16.mxu0 0
      %364 = vmatpush1.bf16.xpose.msra.mxu0 0
      %365 = vmatprep.subr.bf16.mxu0 0
      %366 = vmatpush1.bf16.xpose.msra.mxu0 0
      %367 = vmatprep.subr.bf16.mxu0 0
      %368 = vmatpush1.bf16.xpose.msra.mxu0 0
      %369 = vmatprep.subr.bf16.mxu0 0
      %370 = vmatpush1.bf16.xpose.msra.mxu0 0
      %371 = vmatprep.subr.bf16.mxu0 0
      %372 = vmatpush1.bf16.xpose.msra.mxu0 0
      %373 = vmatprep.subr.bf16.mxu0 0
      %374 = vmatpush1.bf16.xpose.msra.mxu0 0
      %375 = vmatprep.subr.bf16.mxu0 0
      %376 = vmatpush1.bf16.xpose.msra.mxu0 0
      %377 = vmatprep.subr.bf16.mxu0 0
      %378 = vmatpush1.bf16.xpose.msra.mxu0 0
      %379 = vmatprep.subr.bf16.mxu0 0
      %380 = vmatpush1.bf16.xpose.msra.mxu0 0
      %381 = vmatprep.subr.bf16.mxu0 0
      %382 = vmatpush1.bf16.xpose.msra.mxu0 0
      %383 = vmatprep.subr.bf16.mxu0 0
      %384 = vmatpush1.bf16.xpose.msra.mxu0 0
      %385 = vmatprep.subr.bf16.mxu0 0
      %386 = vmatpush1.bf16.xpose.msra.mxu0 0
      %387 = vmatprep.subr.bf16.mxu0 0
      %388 = vmatpush1.bf16.xpose.msra.mxu0 0
      %389 = vmatprep.subr.bf16.mxu0 0
      %390 = vmatpush1.bf16.xpose.msra.mxu0 0
      %391 = vmatprep.subr.bf16.mxu0 0
      %392 = vmatpush1.bf16.xpose.msra.mxu0 0
      %393 = vmatprep.mubr.bf16.mxu0 0
      %394 = vmatmul.mubr.bf16.gmra.mrb[0].mxu0 %v356
      %v395 = vpop.f32.mrb[0].mxu0
      %v396 = vadd.f32 %v349, %v395
      %v397 = vpop.f32.mrb[0].mxu0
      %v398 = vpop.f32.mrb[0].mxu0
      %v399 = vpop.f32.mrb[0].mxu0
      %400 = vdwg.mxu0
      %v401 = vsel %vm354, %v396, -inf
      %402 = vmax.xlane.f32.xlu0 %v401
      %v403 = vpop.xlane.xlu0 %402
      %v404 = vsub.f32 %v396, %v403
      %v405 = vmul.f32 %v404, 1.442695
      %v406 = vpow.pop %v405
      %v407 = vsel %vm354, %v406, 0.0
      %408 = vadd.xlane.f32.xlu0 %v407
      %v409 = vpop.xlane.xlu0 %408
      %v410 = vrcp.pop %v409
      %v411 = vmul.f32 %v406, %v410
      %v412 = vpack.c.bf16 %v411, %v411
      %413 = vrot.lane.b32.xlu0 %v350, 64
      %v414 = vpop.permute.xlu0 %413
      %v416 = vsel %vm354, %v412, 0
      %vm418 = vcmask 1043456
      %v420 = vsel %vm418, %v414, 0
      %422 = vmatprep.subr.bf16.mxu0 0
      %423 = vmatpush1.bf16.msra.mxu0 %v420
      %424 = vmatprep.subr.bf16.mxu0 0
      %425 = vmatpush1.bf16.msra.mxu0 0
      %426 = vmatprep.subr.bf16.mxu0 0
      %427 = vmatpush1.bf16.msra.mxu0 0
      %428 = vmatprep.subr.bf16.mxu0 0
      %429 = vmatpush1.bf16.msra.mxu0 0
      %430 = vmatprep.subr.bf16.mxu0 0
      %431 = vmatpush1.bf16.msra.mxu0 0
      %432 = vmatprep.subr.bf16.mxu0 0
      %433 = vmatpush1.bf16.msra.mxu0 0
      %434 = vmatprep.subr.bf16.mxu0 0
      %435 = vmatpush1.bf16.msra.mxu0 0
      %436 = vmatprep.subr.bf16.mxu0 0
      %437 = vmatpush1.bf16.msra.mxu0 0
      %438 = vmatprep.subr.bf16.mxu0 0
      %439 = vmatpush1.bf16.msra.mxu0 0
      %440 = vmatprep.subr.bf16.mxu0 0
      %441 = vmatpush1.bf16.msra.mxu0 0
      %442 = vmatprep.subr.bf16.mxu0 0
      %443 = vmatpush1.bf16.msra.mxu0 0
      %444 = vmatprep.subr.bf16.mxu0 0
      %445 = vmatpush1.bf16.msra.mxu0 0
      %446 = vmatprep.subr.bf16.mxu0 0
      %447 = vmatpush1.bf16.msra.mxu0 0
      %448 = vmatprep.subr.bf16.mxu0 0
      %449 = vmatpush1.bf16.msra.mxu0 0
      %450 = vmatprep.subr.bf16.mxu0 0
      %451 = vmatpush1.bf16.msra.mxu0 0
      %452 = vmatprep.subr.bf16.mxu0 0
      %453 = vmatpush1.bf16.msra.mxu0 0
      %454 = vmatprep.mubr.bf16.mxu0 0
      %455 = vmatmul.mubr.bf16.gmra.mrb[0].mxu0 %v416
      %v456 = vpop.f32.mrb[0].mxu0
      %v457 = vadd.f32 0.0, %v456
      %v458 = vpop.f32.mrb[0].mxu0
      %v459 = vpop.f32.mrb[0].mxu0
      %v460 = vpop.f32.mrb[0].mxu0
      %461 = vdwg.mxu0
      %462 = vrot.lane.b32.xlu0 %v350, 120
      %v463 = vpop.permute.xlu0 %462
      %464 = vrot.lane.b32.xlu0 %v350, 88
      %v465 = vpop.permute.xlu0 %464
      %v467 = vsel %vm354, %v463, 0
      %v470 = vsel %vm354, %v465, 0
      %472 = vmatprep.subr.bf16.mxu0 0
      %473 = vmatpush1.bf16.xpose.msra.mxu0 %v470
      %474 = vmatprep.subr.bf16.mxu0 0
      %475 = vmatpush1.bf16.xpose.msra.mxu0 0
      %476 = vmatprep.subr.bf16.mxu0 0
      %477 = vmatpush1.bf16.xpose.msra.mxu0 0
      %478 = vmatprep.subr.bf16.mxu0 0
      %479 = vmatpush1.bf16.xpose.msra.mxu0 0
      %480 = vmatprep.subr.bf16.mxu0 0
      %481 = vmatpush1.bf16.xpose.msra.mxu0 0
      %482 = vmatprep.subr.bf16.mxu0 0
      %483 = vmatpush1.bf16.xpose.msra.mxu0 0
      %484 = vmatprep.subr.bf16.mxu0 0
      %485 = vmatpush1.bf16.xpose.msra.mxu0 0
      %486 = vmatprep.subr.bf16.mxu0 0
      %487 = vmatpush1.bf16.xpose.msra.mxu0 0
      %488 = vmatprep.subr.bf16.mxu0 0
      %489 = vmatpush1.bf16.xpose.msra.mxu0 0
      %490 = vmatprep.subr.bf16.mxu0 0
      %491 = vmatpush1.bf16.xpose.msra.mxu0 0
      %492 = vmatprep.subr.bf16.mxu0 0
      %493 = vmatpush1.bf16.xpose.msra.mxu0 0
      %494 = vmatprep.subr.bf16.mxu0 0
      %495 = vmatpush1.bf16.xpose.msra.mxu0 0
      %496 = vmatprep.subr.bf16.mxu0 0
      %497 = vmatpush1.bf16.xpose.msra.mxu0 0
      %498 = vmatprep.subr.bf16.mxu0 0
      %499 = vmatpush1.bf16.xpose.msra.mxu0 0
      %500 = vmatprep.subr.bf16.mxu0 0
      %501 = vmatpush1.bf16.xpose.msra.mxu0 0
      %502 = vmatprep.subr.bf16.mxu0 0
      %503 = vmatpush1.bf16.xpose.msra.mxu0 0
      %504 = vmatprep.mubr.bf16.mxu0 0
      %505 = vmatmul.mubr.bf16.gmra.mrb[0].mxu0 %v467
      %v506 = vpop.f32.mrb[0].mxu0
      %v507 = vadd.f32 %v349, %v506
      %v508 = vpop.f32.mrb[0].mxu0
      %v509 = vpop.f32.mrb[0].mxu0
      %v510 = vpop.f32.mrb[0].mxu0
      %511 = vdwg.mxu0
      %v512 = vsel %vm354, %v507, -inf
      %513 = vmax.xlane.f32.xlu0 %v512
      %v514 = vpop.xlane.xlu0 %513
      %v515 = vsub.f32 %v507, %v514
      %v516 = vmul.f32 %v515, 1.442695
      %v517 = vpow.pop %v516
      %v518 = vsel %vm354, %v517, 0.0
      %519 = vadd.xlane.f32.xlu0 %v518
      %v520 = vpop.xlane.xlu0 %519
      %v521 = vrcp.pop %v520
      %v522 = vmul.f32 %v517, %v521
      %v523 = vpack.c.bf16 %v522, %v522
      %524 = vrot.lane.b32.xlu0 %v350, 56
      %v525 = vpop.permute.xlu0 %524
      %v527 = vsel %vm354, %v523, 0
      %v530 = vsel %vm418, %v525, 0
      %532 = vmatprep.subr.bf16.mxu0 0
      %533 = vmatpush1.bf16.msra.mxu0 %v530
      %534 = vmatprep.subr.bf16.mxu0 0
      %535 = vmatpush1.bf16.msra.mxu0 0
      %536 = vmatprep.subr.bf16.mxu0 0
      %537 = vmatpush1.bf16.msra.mxu0 0
      %538 = vmatprep.subr.bf16.mxu0 0
      %539 = vmatpush1.bf16.msra.mxu0 0
      %540 = vmatprep.subr.bf16.mxu0 0
      %541 = vmatpush1.bf16.msra.mxu0 0
      %542 = vmatprep.subr.bf16.mxu0 0
      %543 = vmatpush1.bf16.msra.mxu0 0
      %544 = vmatprep.subr.bf16.mxu0 0
      %545 = vmatpush1.bf16.msra.mxu0 0
      %546 = vmatprep.subr.bf16.mxu0 0
      %547 = vmatpush1.bf16.msra.mxu0 0
      %548 = vmatprep.subr.bf16.mxu0 0
      %549 = vmatpush1.bf16.msra.mxu0 0
      %550 = vmatprep.subr.bf16.mxu0 0
      %551 = vmatpush1.bf16.msra.mxu0 0
      %552 = vmatprep.subr.bf16.mxu0 0
      %553 = vmatpush1.bf16.msra.mxu0 0
      %554 = vmatprep.subr.bf16.mxu0 0
      %555 = vmatpush1.bf16.msra.mxu0 0
      %556 = vmatprep.subr.bf16.mxu0 0
      %557 = vmatpush1.bf16.msra.mxu0 0
      %558 = vmatprep.subr.bf16.mxu0 0
      %559 = vmatpush1.bf16.msra.mxu0 0
      %560 = vmatprep.subr.bf16.mxu0 0
      %561 = vmatpush1.bf16.msra.mxu0 0
      %562 = vmatprep.subr.bf16.mxu0 0
      %563 = vmatpush1.bf16.msra.mxu0 0
      %564 = vmatprep.mubr.bf16.mxu0 0
      %565 = vmatmul.mubr.bf16.gmra.mrb[0].mxu0 %v527
      %v566 = vpop.f32.mrb[0].mxu0
      %v567 = vadd.f32 0.0, %v566
      %v568 = vpop.f32.mrb[0].mxu0
      %v569 = vpop.f32.mrb[0].mxu0
      %v570 = vpop.f32.mrb[0].mxu0
      %571 = vdwg.mxu0
      %572 = vrot.lane.b32.xlu0 %v350, 112
      %v573 = vpop.permute.xlu0 %572
      %574 = vrot.lane.b32.xlu0 %v350, 80
      %v575 = vpop.permute.xlu0 %574
      %v577 = vsel %vm354, %v573, 0
      %v580 = vsel %vm354, %v575, 0
      %582 = vmatprep.subr.bf16.mxu0 0
      %583 = vmatpush1.bf16.xpose.msra.mxu0 %v580
      %584 = vmatprep.subr.bf16.mxu0 0
      %585 = vmatpush1.bf16.xpose.msra.mxu0 0
      %586 = vmatprep.subr.bf16.mxu0 0
      %587 = vmatpush1.bf16.xpose.msra.mxu0 0
      %588 = vmatprep.subr.bf16.mxu0 0
      %589 = vmatpush1.bf16.xpose.msra.mxu0 0
      %590 = vmatprep.subr.bf16.mxu0 0
      %591 = vmatpush1.bf16.xpose.msra.mxu0 0
      %592 = vmatprep.subr.bf16.mxu0 0
      %593 = vmatpush1.bf16.xpose.msra.mxu0 0
      %594 = vmatprep.subr.bf16.mxu0 0
      %595 = vmatpush1.bf16.xpose.msra.mxu0 0
      %596 = vmatprep.subr.bf16.mxu0 0
      %597 = vmatpush1.bf16.xpose.msra.mxu0 0
      %598 = vmatprep.subr.bf16.mxu0 0
      %599 = vmatpush1.bf16.xpose.msra.mxu0 0
      %600 = vmatprep.subr.bf16.mxu0 0
      %601 = vmatpush1.bf16.xpose.msra.mxu0 0
      %602 = vmatprep.subr.bf16.mxu0 0
      %603 = vmatpush1.bf16.xpose.msra.mxu0 0
      %604 = vmatprep.subr.bf16.mxu0 0
      %605 = vmatpush1.bf16.xpose.msra.mxu0 0
      %606 = vmatprep.subr.bf16.mxu0 0
      %607 = vmatpush1.bf16.xpose.msra.mxu0 0
      %608 = vmatprep.subr.bf16.mxu0 0
      %609 = vmatpush1.bf16.xpose.msra.mxu0 0
      %610 = vmatprep.subr.bf16.mxu0 0
      %611 = vmatpush1.bf16.xpose.msra.mxu0 0
      %612 = vmatprep.subr.bf16.mxu0 0
      %613 = vmatpush1.bf16.xpose.msra.mxu0 0
      %614 = vmatprep.mubr.bf16.mxu0 0
      %615 = vmatmul.mubr.bf16.gmra.mrb[0].mxu0 %v577
      %v616 = vpop.f32.mrb[0].mxu0
      %v617 = vadd.f32 %v349, %v616
      %v618 = vpop.f32.mrb[0].mxu0
      %v619 = vpop.f32.mrb[0].mxu0
      %v620 = vpop.f32.mrb[0].mxu0
      %621 = vdwg.mxu0
      %v622 = vsel %vm354, %v617, -inf
      %623 = vmax.xlane.f32.xlu0 %v622
      %v624 = vpop.xlane.xlu0 %623
      %v625 = vsub.f32 %v617, %v624
      %v626 = vmul.f32 %v625, 1.442695
      %v627 = vpow.pop %v626
      %v628 = vsel %vm354, %v627, 0.0
      %629 = vadd.xlane.f32.xlu0 %v628
      %v630 = vpop.xlane.xlu0 %629
      %v631 = vrcp.pop %v630
      %v632 = vmul.f32 %v627, %v631
      %v633 = vpack.c.bf16 %v632, %v632
      %634 = vrot.lane.b32.xlu0 %v350, 48
      %v635 = vpop.permute.xlu0 %634
      %v637 = vsel %vm354, %v633, 0
      %v640 = vsel %vm418, %v635, 0
      %642 = vmatprep.subr.bf16.mxu0 0
      %643 = vmatpush1.bf16.msra.mxu0 %v640
      %644 = vmatprep.subr.bf16.mxu0 0
      %645 = vmatpush1.bf16.msra.mxu0 0
      %646 = vmatprep.subr.bf16.mxu0 0
      %647 = vmatpush1.bf16.msra.mxu0 0
      %648 = vmatprep.subr.bf16.mxu0 0
      %649 = vmatpush1.bf16.msra.mxu0 0
      %650 = vmatprep.subr.bf16.mxu0 0
      %651 = vmatpush1.bf16.msra.mxu0 0
      %652 = vmatprep.subr.bf16.mxu0 0
      %653 = vmatpush1.bf16.msra.mxu0 0
      %654 = vmatprep.subr.bf16.mxu0 0
      %655 = vmatpush1.bf16.msra.mxu0 0
      %656 = vmatprep.subr.bf16.mxu0 0
      %657 = vmatpush1.bf16.msra.mxu0 0
      %658 = vmatprep.subr.bf16.mxu0 0
      %659 = vmatpush1.bf16.msra.mxu0 0
      %660 = vmatprep.subr.bf16.mxu0 0
      %661 = vmatpush1.bf16.msra.mxu0 0
      %662 = vmatprep.subr.bf16.mxu0 0
      %663 = vmatpush1.bf16.msra.mxu0 0
      %664 = vmatprep.subr.bf16.mxu0 0
      %665 = vmatpush1.bf16.msra.mxu0 0
      %666 = vmatprep.subr.bf16.mxu0 0
      %667 = vmatpush1.bf16.msra.mxu0 0
      %668 = vmatprep.subr.bf16.mxu0 0
      %669 = vmatpush1.bf16.msra.mxu0 0
      %670 = vmatprep.subr.bf16.mxu0 0
      %671 = vmatpush1.bf16.msra.mxu0 0
      %672 = vmatprep.subr.bf16.mxu0 0
      %673 = vmatpush1.bf16.msra.mxu0 0
      %674 = vmatprep.mubr.bf16.mxu0 0
      %675 = vmatmul.mubr.bf16.gmra.mrb[0].mxu0 %v637
      %v676 = vpop.f32.mrb[0].mxu0
      %v677 = vadd.f32 0.0, %v676
      %v678 = vpop.f32.mrb[0].mxu0
      %v679 = vpop.f32.mrb[0].mxu0
      %v680 = vpop.f32.mrb[0].mxu0
      %681 = vdwg.mxu0
      %682 = vrot.lane.b32.xlu0 %v350, 104
      %v683 = vpop.permute.xlu0 %682
      %684 = vrot.lane.b32.xlu0 %v350, 72
      %v685 = vpop.permute.xlu0 %684
      %v687 = vsel %vm354, %v683, 0
      %v690 = vsel %vm354, %v685, 0
      %692 = vmatprep.subr.bf16.mxu0 0
      %693 = vmatpush1.bf16.xpose.msra.mxu0 %v690
      %694 = vmatprep.subr.bf16.mxu0 0
      %695 = vmatpush1.bf16.xpose.msra.mxu0 0
      %696 = vmatprep.subr.bf16.mxu0 0
      %697 = vmatpush1.bf16.xpose.msra.mxu0 0
      %698 = vmatprep.subr.bf16.mxu0 0
      %699 = vmatpush1.bf16.xpose.msra.mxu0 0
      %700 = vmatprep.subr.bf16.mxu0 0
      %701 = vmatpush1.bf16.xpose.msra.mxu0 0
      %702 = vmatprep.subr.bf16.mxu0 0
      %703 = vmatpush1.bf16.xpose.msra.mxu0 0
      %704 = vmatprep.subr.bf16.mxu0 0
      %705 = vmatpush1.bf16.xpose.msra.mxu0 0
      %706 = vmatprep.subr.bf16.mxu0 0
      %707 = vmatpush1.bf16.xpose.msra.mxu0 0
      %708 = vmatprep.subr.bf16.mxu0 0
      %709 = vmatpush1.bf16.xpose.msra.mxu0 0
      %710 = vmatprep.subr.bf16.mxu0 0
      %711 = vmatpush1.bf16.xpose.msra.mxu0 0
      %712 = vmatprep.subr.bf16.mxu0 0
      %713 = vmatpush1.bf16.xpose.msra.mxu0 0
      %714 = vmatprep.subr.bf16.mxu0 0
      %715 = vmatpush1.bf16.xpose.msra.mxu0 0
      %716 = vmatprep.subr.bf16.mxu0 0
      %717 = vmatpush1.bf16.xpose.msra.mxu0 0
      %718 = vmatprep.subr.bf16.mxu0 0
      %719 = vmatpush1.bf16.xpose.msra.mxu0 0
      %720 = vmatprep.subr.bf16.mxu0 0
      %721 = vmatpush1.bf16.xpose.msra.mxu0 0
      %722 = vmatprep.subr.bf16.mxu0 0
      %723 = vmatpush1.bf16.xpose.msra.mxu0 0
      %724 = vmatprep.mubr.bf16.mxu0 0
      %725 = vmatmul.mubr.bf16.gmra.mrb[0].mxu0 %v687
      %v726 = vpop.f32.mrb[0].mxu0
      %v727 = vadd.f32 %v349, %v726
      %v728 = vpop.f32.mrb[0].mxu0
      %v729 = vpop.f32.mrb[0].mxu0
      %v730 = vpop.f32.mrb[0].mxu0
      %731 = vdwg.mxu0
      %v732 = vsel %vm354, %v727, -inf
      %733 = vmax.xlane.f32.xlu0 %v732
      %v734 = vpop.xlane.xlu0 %733
      %v735 = vsub.f32 %v727, %v734
      %v736 = vmul.f32 %v735, 1.442695
      %v737 = vpow.pop %v736
      %v738 = vsel %vm354, %v737, 0.0
      %739 = vadd.xlane.f32.xlu0 %v738
      %v740 = vpop.xlane.xlu0 %739
      %v741 = vrcp.pop %v740
      %v742 = vmul.f32 %v737, %v741
      %v743 = vpack.c.bf16 %v742, %v742
      %744 = vrot.lane.b32.xlu0 %v350, 40
      %v745 = vpop.permute.xlu0 %744
      %v747 = vsel %vm354, %v743, 0
      %v750 = vsel %vm418, %v745, 0
      %752 = vmatprep.subr.bf16.mxu0 0
      %753 = vmatpush1.bf16.msra.mxu0 %v750
      %754 = vmatprep.subr.bf16.mxu0 0
      %755 = vmatpush1.bf16.msra.mxu0 0
      %756 = vmatprep.subr.bf16.mxu0 0
      %757 = vmatpush1.bf16.msra.mxu0 0
      %758 = vmatprep.subr.bf16.mxu0 0
      %759 = vmatpush1.bf16.msra.mxu0 0
      %760 = vmatprep.subr.bf16.mxu0 0
      %761 = vmatpush1.bf16.msra.mxu0 0
      %762 = vmatprep.subr.bf16.mxu0 0
      %763 = vmatpush1.bf16.msra.mxu0 0
      %764 = vmatprep.subr.bf16.mxu0 0
      %765 = vmatpush1.bf16.msra.mxu0 0
      %766 = vmatprep.subr.bf16.mxu0 0
      %767 = vmatpush1.bf16.msra.mxu0 0
      %768 = vmatprep.subr.bf16.mxu0 0
      %769 = vmatpush1.bf16.msra.mxu0 0
      %770 = vmatprep.subr.bf16.mxu0 0
      %771 = vmatpush1.bf16.msra.mxu0 0
      %772 = vmatprep.subr.bf16.mxu0 0
      %773 = vmatpush1.bf16.msra.mxu0 0
      %774 = vmatprep.subr.bf16.mxu0 0
      %775 = vmatpush1.bf16.msra.mxu0 0
      %776 = vmatprep.subr.bf16.mxu0 0
      %777 = vmatpush1.bf16.msra.mxu0 0
      %778 = vmatprep.subr.bf16.mxu0 0
      %779 = vmatpush1.bf16.msra.mxu0 0
      %780 = vmatprep.subr.bf16.mxu0 0
      %781 = vmatpush1.bf16.msra.mxu0 0
      %782 = vmatprep.subr.bf16.mxu0 0
      %783 = vmatpush1.bf16.msra.mxu0 0
      %784 = vmatprep.mubr.bf16.mxu0 0
      %785 = vmatmul.mubr.bf16.gmra.mrb[0].mxu0 %v747
      %v786 = vpop.f32.mrb[0].mxu0
      %v787 = vadd.f32 0.0, %v786
      %v788 = vpop.f32.mrb[0].mxu0
      %v789 = vpop.f32.mrb[0].mxu0
      %v790 = vpop.f32.mrb[0].mxu0
      %791 = vdwg.mxu0
      %793 = vrot.lane.b32.xlu0 %v567, 8
      %v794 = vpop.permute.xlu0 %793
      %797 = vrot.lane.b32.xlu0 %v677, 16
      %v798 = vpop.permute.xlu0 %797
      %801 = vrot.lane.b32.xlu0 %v787, 24
      %v802 = vpop.permute.xlu0 %801
      %v804 = vsel %vm354, %v457, %v794
      %vm805 = vcmask 130048
      %v806 = vsel %vm805, %v804, %v798
      %vm807 = vcmask 195584
      %v808 = vsel %vm807, %v806, %v802
      %v809 = vld [vmem:[%s3] sm:$0xf]
      %v810 = vld [vmem:[%s3 + $0x4] sm:$0xf]
      %v811 = vld [vmem:[%s3 + $0x8] sm:$0xf]
      %v812 = vld [vmem:[%s3 + $0xc] sm:$0xf]
      %v813 = vpack.c.bf16 %v808, %v808
      %v818 = vunpack.c.l.b16 %v809
      %v819 = vunpack.c.l.b16 %v810
      %v820 = vunpack.c.l.b16 %v811
      %v821 = vunpack.c.l.b16 %v812
      %v822 = vpack.c.b16 %v819, %v818
      %v823 = vpack.c.b16 %v821, %v820
      %v827 = vsel %vm300, %v813, 0
      %829 = vmatprep.subr.bf16.mxu0 0
      %830 = vmatpush1.bf16.msra.mxu0 %v822
      %831 = vmatprep.subr.bf16.mxu0 0
      %832 = vmatpush1.bf16.msra.mxu0 %v823
      %833 = vmatprep.subr.bf16.mxu0 0
      %834 = vmatpush1.bf16.msra.mxu0 0
      %835 = vmatprep.subr.bf16.mxu0 0
      %836 = vmatpush1.bf16.msra.mxu0 0
      %837 = vmatprep.subr.bf16.mxu0 0
      %838 = vmatpush1.bf16.msra.mxu0 0
      %839 = vmatprep.subr.bf16.mxu0 0
      %840 = vmatpush1.bf16.msra.mxu0 0
      %841 = vmatprep.subr.bf16.mxu0 0
      %842 = vmatpush1.bf16.msra.mxu0 0
      %843 = vmatprep.subr.bf16.mxu0 0
      %844 = vmatpush1.bf16.msra.mxu0 0
      %845 = vmatprep.subr.bf16.mxu0 0
      %846 = vmatpush1.bf16.msra.mxu0 0
      %847 = vmatprep.subr.bf16.mxu0 0
      %848 = vmatpush1.bf16.msra.mxu0 0
      %849 = vmatprep.subr.bf16.mxu0 0
      %850 = vmatpush1.bf16.msra.mxu0 0
      %851 = vmatprep.subr.bf16.mxu0 0
      %852 = vmatpush1.bf16.msra.mxu0 0
      %853 = vmatprep.subr.bf16.mxu0 0
      %854 = vmatpush1.bf16.msra.mxu0 0
      %855 = vmatprep.subr.bf16.mxu0 0
      %856 = vmatpush1.bf16.msra.mxu0 0
      %857 = vmatprep.subr.bf16.mxu0 0
      %858 = vmatpush1.bf16.msra.mxu0 0
      %859 = vmatprep.subr.bf16.mxu0 0
      %860 = vmatpush1.bf16.msra.mxu0 0
      %861 = vmatprep.mubr.bf16.mxu0 0
      %862 = vmatmul.mubr.bf16.gmra.mrb[0].mxu0 %v827
      %v863 = vpop.f32.mrb[0].mxu0
      %v864 = vadd.f32 0.0, %v863
      %v865 = vpop.f32.mrb[0].mxu0
      %v866 = vpop.f32.mrb[0].mxu0
      %v867 = vpop.f32.mrb[0].mxu0
      %868 = vdwg.mxu0
      %v869 = vadd.f32 %v275, %v864
      %v870 = vld [vmem:[%s4] sm:$0x1]
      %v872 = vlaneseq
      %v873 = vshrl.u32 %v872, 7
      %v874 = vsub.s32 0, %v873
      %v875 = vrot.slane %v870, %v874
      %v877 = vadd.f32 %v869, %v875
      %v878 = vld [vmem:[%s5] sm:$0x1]
      %v879 = vld [vmem:[%s6] sm:$0x1]
      %v880 = vsel %vm300, %v877, 0.0
      %881 = vadd.xlane.f32.xlu0 %v880
      %v882 = vpop.xlane.xlu0 %881
      %v883 = vrcp.pop 32.0
      %v884 = vmul.f32 %v882, %v883
      %v885 = vsub.f32 %v877, %v884
      %v886 = vmul.f32 %v885, %v885
      %v887 = vsel %vm300, %v886, 0.0
      %888 = vadd.xlane.f32.xlu0 %v887
      %v889 = vpop.xlane.xlu0 %888
      %v890 = vmul.f32 %v889, %v883
      %v891 = vadd.f32 %v890, 1e-05
      %v892 = vrsqrt.pop %v891
      %v893 = vmul.f32 %v885, %v892
      %v895 = vlaneseq
      %v896 = vshrl.u32 %v895, 7
      %v897 = vsub.s32 0, %v896
      %v898 = vrot.slane %v878, %v897
      %v900 = vmul.f32 %v893, %v898
      %v902 = vlaneseq
      %v903 = vshrl.u32 %v902, 7
      %v904 = vsub.s32 0, %v903
      %v905 = vrot.slane %v879, %v904
      %v907 = vadd.f32 %v900, %v905
      %908 = vst.msk [vmem:[%s273] sm:$0xff] %vm300, %v907
      %p909 = scmp.lt.s32.totalorder %s18, 1
      %s910 = scalar_select %p909, %s18, 1
      %s911 = smul.addr %s910, 8
      %s912 = scalar_lea.vmem %s7, %s911
      // Predicated region
      $region49: #{transformer_model_forward.14} parent=47 // pred_check
        %p913 = pneg %p188
      $region50: #{transformer_model_forward.14} parent=47 // pred_check_branch
        %915 = sbr.rel (%p913) target = $region52
      $region51: #{transformer_model_forward.14} parent=47 // pred_region
        _
      $region52: #{transformer_model_forward.14} parent=47 // pred_fallthru
        _
    $region48: #{transformer_model_forward.14} parent=5 // pred_fallthru
      _
    %p916 = scmp.le.s32.totalorder 2, %s13
    // Predicated region
    $region53: #{transformer_model_forward.14} parent=5 // pred_check
      %p917 = pneg %p916
    $region54: #{transformer_model_forward.14} parent=5 // pred_check_branch
      %919 = sbr.rel (%p917) target = $region56
    $region55: #{transformer_model_forward.14} parent=5 // pred_region
      %s920 = ssub.s32 %s13, 2
      // Predicated region
      $region57: #{transformer_model_forward.14} parent=55 // pred_check
        %p921 = pneg %p194
      $region58: #{transformer_model_forward.14} parent=55 // pred_check_branch
        %923 = sbr.rel (%p921) target = $region60
      $region59: #{transformer_model_forward.14} parent=55 // pred_region
        %p924 = scmp.lt.s32.totalorder %s19, 1
        %s925 = scalar_select %p924, %s19, 1
        %s926 = smul.addr %s925, 8
        %s927 = scalar_lea.vmem %s7, %s926
      $region60: #{transformer_model_forward.14} parent=55 // pred_fallthru
        _
    $region56: #{transformer_model_forward.14} parent=5 // pred_fallthru
      _
  $region6: #{transformer_model_forward.14} parent=0 // loop_footer
    %s17 = sadd.s32 1, %s13
  $region7: #{transformer_model_forward.14} parent=0 // loop_footer_branch
    %12 = sbr.rel target = $region3
  $region8: #{transformer_model_forward.14} parent=0 // loop_exit
    _

// kernel: transformer_model_forward.18
$region0: #{transformer_model_forward.18}
  #allocation0 [shape = 'u32[]', space=smem, size = 0x4, offset = 0x4, fixed_abs, tag = 'smem constant byte address 0x4 - core index']
  #allocation1 [shape = 'u32[144,128]{1,0:T(1,128)}', space=vmem, size = 0x12000, scoped, tag = 'internal scratch']
  %s0 = inlined_call_operand.vmem [shape: f32[16,32], index: 0, kind: input, shape index: {}]
  %s1 = inlined_call_operand.vmem [shape: f32[1,32], index: 1, kind: input, shape index: {}]
  %s2 = inlined_call_operand.vmem [shape: f32[1,32], index: 2, kind: input, shape index: {}]
  %s3 = inlined_call_operand.vmem [shape: f32[16,32], index: 3, kind: output, shape index: {}]
  %s4 = sld [smem:[#allocation0]]
  $region45: #{transformer_model_forward.18} parent=0
    _
  %s6 = ssub.s32 1, %s4
  %s7 = scalar_select 0, %s6, %s4
  loop: start=0, step=1, limit=4
  $region2: #{transformer_model_forward.18} parent=0 // loop_pre_header
    _
  $region3: #{transformer_model_forward.18} parent=0 // loop_header
    %s9 = sphi 0, %s13
    %p10 = scmp.ge.s32.totalorder %s9, 4
    %s19 = sphi 0, %s21
    %s22 = sphi 0, %s19
    %s23 = sphi 0, %s22
    %s39 = sphi 0, %s23
    %s43 = sphi 0, %s43
    %s45 = sphi 0, %s43
    %s46 = sphi 0, %s45
    %s60 = sphi 0, %s46
    %s64 = sphi 0, %s64
    %s66 = sphi 0, %s64
    %s67 = sphi 0, %s66
    %s81 = sphi 0, %s67
    %s87 = sphi 0, %s89
    %s90 = sphi 0, %s87
    %s91 = sphi 0, %s90
    %s107 = sphi 0, %s91
  $region4: #{transformer_model_forward.18} parent=0 // loop_header_branch
    %12 = sbr.rel (%p10) target = $region8
  $region5: #{transformer_model_forward.18} parent=0 // loop_body
    %s14 = ssub.s32 %s9, 1
    %s15 = ssub.s32 %s9, 2
    %s16 = sadd.s32 %s9, 1
    %s17 = ssub.s32 %s9, %s16
    %p18 = scmp.eq.s32.totalorder %s17, 0
    %s20 = sadd.s32 %s19, 1
    %s21 = scalar_select %p18, %s19, %s20
    %p24 = pneg %p18
    %p25 = scmp.eq.s32.totalorder %s9, 1
    %p26 = por %p24, %p25
    %p27 = scmp.ne.s32.totalorder %s19, %s22
    %p28 = scmp.eq.s32.totalorder %s9, 0
    %p29 = por %p27, %p28
    %p30 = scmp.ne.s32.totalorder %s19, %s22
    %p31 = scmp.eq.s32.totalorder %s14, 1
    %p32 = por %p30, %p31
    %p33 = scmp.ne.s32.totalorder %s22, %s23
    %p34 = scmp.eq.s32.totalorder %s14, 0
    %p35 = por %p33, %p34
    %p36 = scmp.ne.s32.totalorder %s22, %s23
    %p37 = scmp.eq.s32.totalorder %s15, 1
    %p38 = por %p36, %p37
    %p40 = scmp.ne.s32.totalorder %s23, %s39
    %p41 = scmp.eq.s32.totalorder %s15, 0
    %p42 = por %p40, %p41
    %s44 = sadd.s32 %s43, 1
    %p47 = scmp.eq.s32.totalorder %s9, 1
    %p48 = scmp.ne.s32.totalorder %s43, %s45
    %p49 = scmp.eq.s32.totalorder %s9, 0
    %p50 = por %p48, %p49
    %p51 = scmp.ne.s32.totalorder %s43, %s45
    %p52 = scmp.eq.s32.totalorder %s14, 1
    %p53 = por %p51, %p52
    %p54 = scmp.ne.s32.totalorder %s45, %s46
    %p55 = scmp.eq.s32.totalorder %s14, 0
    %p56 = por %p54, %p55
    %p57 = scmp.ne.s32.totalorder %s45, %s46
    %p58 = scmp.eq.s32.totalorder %s15, 1
    %p59 = por %p57, %p58
    %p61 = scmp.ne.s32.totalorder %s46, %s60
    %p62 = scmp.eq.s32.totalorder %s15, 0
    %p63 = por %p61, %p62
    %s65 = sadd.s32 %s64, 1
    %p68 = scmp.eq.s32.totalorder %s9, 1
    %p69 = scmp.ne.s32.totalorder %s64, %s66
    %p70 = scmp.eq.s32.totalorder %s9, 0
    %p71 = por %p69, %p70
    %p72 = scmp.ne.s32.totalorder %s64, %s66
    %p73 = scmp.eq.s32.totalorder %s14, 1
    %p74 = por %p72, %p73
    %p75 = scmp.ne.s32.totalorder %s66, %s67
    %p76 = scmp.eq.s32.totalorder %s14, 0
    %p77 = por %p75, %p76
    %p78 = scmp.ne.s32.totalorder %s66, %s67
    %p79 = scmp.eq.s32.totalorder %s15, 1
    %p80 = por %p78, %p79
    %p82 = scmp.ne.s32.totalorder %s67, %s81
    %p83 = scmp.eq.s32.totalorder %s15, 0
    %p84 = por %p82, %p83
    %s85 = ssub.s32 %s9, %s16
    %p86 = scmp.eq.s32.totalorder %s85, 0
    %s88 = sadd.s32 %s87, 1
    %s89 = scalar_select %p86, %s87, %s88
    %p92 = pneg %p86
    %p93 = scmp.eq.s32.totalorder %s9, 1
    %p94 = por %p92, %p93
    %p95 = scmp.ne.s32.totalorder %s87, %s90
    %p96 = scmp.eq.s32.totalorder %s9, 0
    %p97 = por %p95, %p96
    %p98 = scmp.ne.s32.totalorder %s87, %s90
    %p99 = scmp.eq.s32.totalorder %s14, 1
    %p100 = por %p98, %p99
    %p101 = scmp.ne.s32.totalorder %s90, %s91
    %p102 = scmp.eq.s32.totalorder %s14, 0
    %p103 = por %p101, %p102
    %p104 = scmp.ne.s32.totalorder %s90, %s91
    %p105 = scmp.eq.s32.totalorder %s15, 1
    %p106 = por %p104, %p105
    %p108 = scmp.ne.s32.totalorder %s91, %s107
    %p109 = scmp.eq.s32.totalorder %s15, 0
    %p110 = por %p108, %p109
    %p111 = scmp.le.s32.totalorder 1, %s9
    %p112 = scmp.lt.s32.totalorder %s9, 3
    %p113 = pnand %p111, %p112
    %p114 = pneg %p113
    // Predicated region
    $region9: #{transformer_model_forward.18} parent=5 // pred_check
      _
    $region10: #{transformer_model_forward.18} parent=5 // pred_check_branch
      %116 = sbr.rel (%p113) target = $region12
    $region11: #{transformer_model_forward.18} parent=5 // pred_region
      %s117 = ssub.s32 %s9, 1
      // Predicated region
      $region13: #{transformer_model_forward.18} parent=11 // pred_check
        %p118 = pneg %p56
      $region14: #{transformer_model_forward.18} parent=11 // pred_check_branch
        %120 = sbr.rel (%p118) target = $region16
      $region15: #{transformer_model_forward.18} parent=11 // pred_region
        _
      $region16: #{transformer_model_forward.18} parent=11 // pred_fallthru
        _
      // Predicated region
      $region17: #{transformer_model_forward.18} parent=11 // pred_check
        %p121 = pneg %p77
      $region18: #{transformer_model_forward.18} parent=11 // pred_check_branch
        %123 = sbr.rel (%p121) target = $region20
      $region19: #{transformer_model_forward.18} parent=11 // pred_region
        _
      $region20: #{transformer_model_forward.18} parent=11 // pred_fallthru
        _
    $region12: #{transformer_model_forward.18} parent=5 // pred_fallthru
      _
    %p124 = scmp.lt.s32.totalorder %s9, 2
    // Predicated region
    $region21: #{transformer_model_forward.18} parent=5 // pred_check
      %p125 = pneg %p124
    $region22: #{transformer_model_forward.18} parent=5 // pred_check_branch
      %127 = sbr.rel (%p125) target = $region24
    $region23: #{transformer_model_forward.18} parent=5 // pred_region
      // Predicated region
      $region25: #{transformer_model_forward.18} parent=23 // pred_check
        %p128 = pneg %p29
      $region26: #{transformer_model_forward.18} parent=23 // pred_check_branch
        %130 = sbr.rel (%p128) target = $region28
      $region27: #{transformer_model_forward.18} parent=23 // pred_region
        %p131 = scmp.lt.s32.totalorder %s9, 1
        %s132 = scalar_select %p131, %s9, 1
        %s133 = smul.addr %s132, 8
        %s134 = scalar_lea.vmem %s0, %s133
      $region28: #{transformer_model_forward.18} parent=23 // pred_fallthru
        _
    $region24: #{transformer_model_forward.18} parent=5 // pred_fallthru
      _
    %p135 = scmp.le.s32.totalorder 1, %s9
    %p136 = scmp.lt.s32.totalorder %s9, 3
    %p137 = pnand %p135, %p136
    %p138 = pneg %p137
    // Predicated region
    $region29: #{transformer_model_forward.18} parent=5 // pred_check
      _
    $region30: #{transformer_model_forward.18} parent=5 // pred_check_branch
      %140 = sbr.rel (%p137) target = $region32
    $region31: #{transformer_model_forward.18} parent=5 // pred_region
      %s141 = ssub.s32 %s9, 1
      %p142 = scmp.lt.s32.totalorder %s14, 1
      %s143 = scalar_select %p142, %s14, 1
      %s144 = smul.addr %s143, 8
      %s145 = scalar_lea.vmem %s0, %s144
      %p146 = pneg %p35
      %p147 = pneg %p32
      %p148 = pneg %p56
      %p149 = pneg %p53
      %p150 = pneg %p77
      %p151 = pneg %p74
      %p152 = pneg %p103
      %p153 = pneg %p100
      %p154 = scmp.lt.s32.totalorder %s14, 1
      %s155 = scalar_select %p154, %s14, 1
      %s156 = smul.addr %s155, 8
      %s157 = scalar_lea.vmem %s3, %s156
      %p158 = scmp.lt.s32.totalorder %s14, 1
      %s159 = scalar_select %p158, %s14, 1
      %s160 = smul.addr %s159, 8
      %s161 = scalar_lea.vmem %s0, %s160
      %p162 = scmp.lt.s32.totalorder %s14, 1
      %s163 = scalar_select %p162, %s14, 1
      %s164 = smul.addr %s163, 8
      %s165 = scalar_lea.vmem %s3, %s164
      %v166 = vld [vmem:[%s161] sm:$0xff]
      %v167 = vld [vmem:[%s1] sm:$0x1]
      %v168 = vld [vmem:[%s2] sm:$0x1]
      %vm169 = vcmask 261120
      %v170 = vsel %vm169, %v166, 0.0
      %171 = vadd.xlane.f32.xlu0 %v170
      %v172 = vpop.xlane.xlu0 %171
      %v173 = vrcp.pop 32.0
      %v174 = vmul.f32 %v172, %v173
      %v175 = vsub.f32 %v166, %v174
      %v176 = vmul.f32 %v175, %v175
      %v177 = vsel %vm169, %v176, 0.0
      %178 = vadd.xlane.f32.xlu0 %v177
      %v179 = vpop.xlane.xlu0 %178
      %v180 = vmul.f32 %v179, %v173
      %v181 = vadd.f32 %v180, 1e-05
      %v182 = vrsqrt.pop %v181
      %v183 = vmul.f32 %v175, %v182
      %v185 = vlaneseq
      %v186 = vshrl.u32 %v185, 7
      %v187 = vsub.s32 0, %v186
      %v188 = vrot.slane %v167, %v187
      %v190 = vmul.f32 %v183, %v188
      %v192 = vlaneseq
      %v193 = vshrl.u32 %v192, 7
      %v194 = vsub.s32 0, %v193
      %v195 = vrot.slane %v168, %v194
      %v197 = vadd.f32 %v190, %v195
      %198 = vst.msk [vmem:[%s165] sm:$0xff] %vm169, %v197
      %p199 = scmp.lt.s32.totalorder %s14, 1
      %s200 = scalar_select %p199, %s14, 1
      %s201 = smul.addr %s200, 8
      %s202 = scalar_lea.vmem %s3, %s201
      // Predicated region
      $region33: #{transformer_model_forward.18} parent=31 // pred_check
        %p203 = pneg %p100
      $region34: #{transformer_model_forward.18} parent=31 // pred_check_branch
        %205 = sbr.rel (%p203) target = $region36
      $region35: #{transformer_model_forward.18} parent=31 // pred_region
        _
      $region36: #{transformer_model_forward.18} parent=31 // pred_fallthru
        _
    $region32: #{transformer_model_forward.18} parent=5 // pred_fallthru
      _
    %p206 = scmp.le.s32.totalorder 2, %s9
    // Predicated region
    $region37: #{transformer_model_forward.18} parent=5 // pred_check
      %p207 = pneg %p206
    $region38: #{transformer_model_forward.18} parent=5 // pred_check_branch
      %209 = sbr.rel (%p207) target = $region40
    $region39: #{transformer_model_forward.18} parent=5 // pred_region
      %s210 = ssub.s32 %s9, 2
      // Predicated region
      $region41: #{transformer_model_forward.18} parent=39 // pred_check
        %p211 = pneg %p106
      $region42: #{transformer_model_forward.18} parent=39 // pred_check_branch
        %213 = sbr.rel (%p211) target = $region44
      $region43: #{transformer_model_forward.18} parent=39 // pred_region
        %p214 = scmp.lt.s32.totalorder %s15, 1
        %s215 = scalar_select %p214, %s15, 1
        %s216 = smul.addr %s215, 8
        %s217 = scalar_lea.vmem %s3, %s216
      $region44: #{transformer_model_forward.18} parent=39 // pred_fallthru
        _
    $region40: #{transformer_model_forward.18} parent=5 // pred_fallthru
      _
  $region6: #{transformer_model_forward.18} parent=0 // loop_footer
    %s13 = sadd.s32 1, %s9
  $region7: #{transformer_model_forward.18} parent=0 // loop_footer_branch
    %8 = sbr.rel target = $region3
  $region8: #{transformer_model_forward.18} parent=0 // loop_exit
    _

// kernel: transformer_model_forward.15
$region0: #{transformer_model_forward.15}
  #allocation0 [shape = 'u32[]', space=smem, size = 0x4, offset = 0x4, fixed_abs, tag = 'smem constant byte address 0x4 - core index']
  #allocation1 [shape = 'u32[144,128]{1,0:T(1,128)}', space=vmem, size = 0x12000, scoped, tag = 'internal scratch']
  #allocation2 [shape = 'f32[8,32]{1,0:T(8,128)}', space=vmem, size = 0x1000, scoped, tag = 'scratch operand']
  %s0 = inlined_call_operand.vmem [shape: f32[16,32], index: 0, kind: input, shape index: {}]
  %s1 = inlined_call_operand.vmem [shape: bf16[32,64], index: 1, kind: input, shape index: {}]
  %s2 = inlined_call_operand.vmem [shape: f32[1,64], index: 2, kind: input, shape index: {}]
  %s3 = inlined_call_operand.vmem [shape: bf16[64,32], index: 3, kind: input, shape index: {}]
  %s4 = inlined_call_operand.vmem [shape: f32[1,32], index: 4, kind: input, shape index: {}]
  %s5 = inlined_call_operand.vmem [shape: f32[1,32], index: 5, kind: input, shape index: {}]
  %s6 = inlined_call_operand.vmem [shape: f32[1,32], index: 6, kind: input, shape index: {}]
  %s7 = inlined_call_operand.vmem [shape: f32[16,32], index: 7, kind: output, shape index: {}]
  %s8 = sld [smem:[#allocation0]]
  $region69: #{transformer_model_forward.15} parent=0
    _
  %s10 = ssub.s32 1, %s8
  %s11 = scalar_select 0, %s10, %s8
  loop: start=0, step=1, limit=4
  $region2: #{transformer_model_forward.15} parent=0 // loop_pre_header
    _
  $region3: #{transformer_model_forward.15} parent=0 // loop_header
    %s13 = sphi 0, %s17
    %p14 = scmp.ge.s32.totalorder %s13, 4
    %s20 = sphi 0, %s32
    %s21 = sphi 0, %s28
    %s22 = sphi 0, %s20
    %s23 = sphi 0, %s21
    %s24 = sphi 0, %s22
    %s25 = sphi 0, %s23
    %s35 = sphi 0, %s37
    %s38 = sphi 0, %s35
    %s39 = sphi 0, %s38
    %s55 = sphi 0, %s39
    %s61 = sphi 0, %s63
    %s64 = sphi 0, %s61
    %s65 = sphi 0, %s64
    %s81 = sphi 0, %s65
    %s87 = sphi 0, %s89
    %s90 = sphi 0, %s87
    %s91 = sphi 0, %s90
    %s107 = sphi 0, %s91
    %s113 = sphi 0, %s115
    %s116 = sphi 0, %s113
    %s117 = sphi 0, %s116
    %s133 = sphi 0, %s117
    %s137 = sphi 0, %s137
    %s139 = sphi 0, %s137
    %s140 = sphi 0, %s139
    %s154 = sphi 0, %s140
    %s158 = sphi 0, %s158
    %s160 = sphi 0, %s158
    %s161 = sphi 0, %s160
    %s175 = sphi 0, %s161
    %s179 = sphi 0, %s179
    %s181 = sphi 0, %s179
    %s182 = sphi 0, %s181
    %s196 = sphi 0, %s182
    %s202 = sphi 0, %s204
    %s205 = sphi 0, %s202
    %s206 = sphi 0, %s205
    %s222 = sphi 0, %s206
  $region4: #{transformer_model_forward.15} parent=0 // loop_header_branch
    %16 = sbr.rel (%p14) target = $region8
  $region5: #{transformer_model_forward.15} parent=0 // loop_body
    %s18 = ssub.s32 %s13, 1
    %s19 = ssub.s32 %s13, 2
    %s26 = sadd.s32 1, %s21
    %p27 = scmp.ge.s32.totalorder %s26, 1
    %s28 = scalar_select %p27, 0, %s26
    %s29 = sadd.s32 1, %s20
    %s30 = scalar_select %p27, %s29, %s20
    %p31 = scmp.ge.s32.totalorder %s30, 2
    %s32 = scalar_select %p31, 0, %s30
    %s33 = ssub.s32 %s20, %s32
    %p34 = scmp.eq.s32.totalorder %s33, 0
    %s36 = sadd.s32 %s35, 1
    %s37 = scalar_select %p34, %s35, %s36
    %p40 = pneg %p34
    %p41 = scmp.eq.s32.totalorder %s13, 1
    %p42 = por %p40, %p41
    %p43 = scmp.ne.s32.totalorder %s35, %s38
    %p44 = scmp.eq.s32.totalorder %s13, 0
    %p45 = por %p43, %p44
    %p46 = scmp.ne.s32.totalorder %s35, %s38
    %p47 = scmp.eq.s32.totalorder %s18, 1
    %p48 = por %p46, %p47
    %p49 = scmp.ne.s32.totalorder %s38, %s39
    %p50 = scmp.eq.s32.totalorder %s18, 0
    %p51 = por %p49, %p50
    %p52 = scmp.ne.s32.totalorder %s38, %s39
    %p53 = scmp.eq.s32.totalorder %s19, 1
    %p54 = por %p52, %p53
    %p56 = scmp.ne.s32.totalorder %s39, %s55
    %p57 = scmp.eq.s32.totalorder %s19, 0
    %p58 = por %p56, %p57
    %s59 = ssub.s32 %s21, %s28
    %p60 = scmp.eq.s32.totalorder %s59, 0
    %s62 = sadd.s32 %s61, 1
    %s63 = scalar_select %p60, %s61, %s62
    %p66 = pneg %p60
    %p67 = scmp.eq.s32.totalorder %s13, 1
    %p68 = por %p66, %p67
    %p69 = scmp.ne.s32.totalorder %s61, %s64
    %p70 = scmp.eq.s32.totalorder %s13, 0
    %p71 = por %p69, %p70
    %p72 = scmp.ne.s32.totalorder %s61, %s64
    %p73 = scmp.eq.s32.totalorder %s18, 1
    %p74 = por %p72, %p73
    %p75 = scmp.ne.s32.totalorder %s64, %s65
    %p76 = scmp.eq.s32.totalorder %s18, 0
    %p77 = por %p75, %p76
    %p78 = scmp.ne.s32.totalorder %s64, %s65
    %p79 = scmp.eq.s32.totalorder %s19, 1
    %p80 = por %p78, %p79
    %p82 = scmp.ne.s32.totalorder %s65, %s81
    %p83 = scmp.eq.s32.totalorder %s19, 0
    %p84 = por %p82, %p83
    %s85 = ssub.s32 %s21, %s28
    %p86 = scmp.eq.s32.totalorder %s85, 0
    %s88 = sadd.s32 %s87, 1
    %s89 = scalar_select %p86, %s87, %s88
    %p92 = pneg %p86
    %p93 = scmp.eq.s32.totalorder %s13, 1
    %p94 = por %p92, %p93
    %p95 = scmp.ne.s32.totalorder %s87, %s90
    %p96 = scmp.eq.s32.totalorder %s13, 0
    %p97 = por %p95, %p96
    %p98 = scmp.ne.s32.totalorder %s87, %s90
    %p99 = scmp.eq.s32.totalorder %s18, 1
    %p100 = por %p98, %p99
    %p101 = scmp.ne.s32.totalorder %s90, %s91
    %p102 = scmp.eq.s32.totalorder %s18, 0
    %p103 = por %p101, %p102
    %p104 = scmp.ne.s32.totalorder %s90, %s91
    %p105 = scmp.eq.s32.totalorder %s19, 1
    %p106 = por %p104, %p105
    %p108 = scmp.ne.s32.totalorder %s91, %s107
    %p109 = scmp.eq.s32.totalorder %s19, 0
    %p110 = por %p108, %p109
    %s111 = ssub.s32 %s21, %s28
    %p112 = scmp.eq.s32.totalorder %s111, 0
    %s114 = sadd.s32 %s113, 1
    %s115 = scalar_select %p112, %s113, %s114
    %p118 = pneg %p112
    %p119 = scmp.eq.s32.totalorder %s13, 1
    %p120 = por %p118, %p119
    %p121 = scmp.ne.s32.totalorder %s113, %s116
    %p122 = scmp.eq.s32.totalorder %s13, 0
    %p123 = por %p121, %p122
    %p124 = scmp.ne.s32.totalorder %s113, %s116
    %p125 = scmp.eq.s32.totalorder %s18, 1
    %p126 = por %p124, %p125
    %p127 = scmp.ne.s32.totalorder %s116, %s117
    %p128 = scmp.eq.s32.totalorder %s18, 0
    %p129 = por %p127, %p128
    %p130 = scmp.ne.s32.totalorder %s116, %s117
    %p131 = scmp.eq.s32.totalorder %s19, 1
    %p132 = por %p130, %p131
    %p134 = scmp.ne.s32.totalorder %s117, %s133
    %p135 = scmp.eq.s32.totalorder %s19, 0
    %p136 = por %p134, %p135
    %s138 = sadd.s32 %s137, 1
    %p141 = scmp.eq.s32.totalorder %s13, 1
    %p142 = scmp.ne.s32.totalorder %s137, %s139
    %p143 = scmp.eq.s32.totalorder %s13, 0
    %p144 = por %p142, %p143
    %p145 = scmp.ne.s32.totalorder %s137, %s139
    %p146 = scmp.eq.s32.totalorder %s18, 1
    %p147 = por %p145, %p146
    %p148 = scmp.ne.s32.totalorder %s139, %s140
    %p149 = scmp.eq.s32.totalorder %s18, 0
    %p150 = por %p148, %p149
    %p151 = scmp.ne.s32.totalorder %s139, %s140
    %p152 = scmp.eq.s32.totalorder %s19, 1
    %p153 = por %p151, %p152
    %p155 = scmp.ne.s32.totalorder %s140, %s154
    %p156 = scmp.eq.s32.totalorder %s19, 0
    %p157 = por %p155, %p156
    %s159 = sadd.s32 %s158, 1
    %p162 = scmp.eq.s32.totalorder %s13, 1
    %p163 = scmp.ne.s32.totalorder %s158, %s160
    %p164 = scmp.eq.s32.totalorder %s13, 0
    %p165 = por %p163, %p164
    %p166 = scmp.ne.s32.totalorder %s158, %s160
    %p167 = scmp.eq.s32.totalorder %s18, 1
    %p168 = por %p166, %p167
    %p169 = scmp.ne.s32.totalorder %s160, %s161
    %p170 = scmp.eq.s32.totalorder %s18, 0
    %p171 = por %p169, %p170
    %p172 = scmp.ne.s32.totalorder %s160, %s161
    %p173 = scmp.eq.s32.totalorder %s19, 1
    %p174 = por %p172, %p173
    %p176 = scmp.ne.s32.totalorder %s161, %s175
    %p177 = scmp.eq.s32.totalorder %s19, 0
    %p178 = por %p176, %p177
    %s180 = sadd.s32 %s179, 1
    %p183 = scmp.eq.s32.totalorder %s13, 1
    %p184 = scmp.ne.s32.totalorder %s179, %s181
    %p185 = scmp.eq.s32.totalorder %s13, 0
    %p186 = por %p184, %p185
    %p187 = scmp.ne.s32.totalorder %s179, %s181
    %p188 = scmp.eq.s32.totalorder %s18, 1
    %p189 = por %p187, %p188
    %p190 = scmp.ne.s32.totalorder %s181, %s182
    %p191 = scmp.eq.s32.totalorder %s18, 0
    %p192 = por %p190, %p191
    %p193 = scmp.ne.s32.totalorder %s181, %s182
    %p194 = scmp.eq.s32.totalorder %s19, 1
    %p195 = por %p193, %p194
    %p197 = scmp.ne.s32.totalorder %s182, %s196
    %p198 = scmp.eq.s32.totalorder %s19, 0
    %p199 = por %p197, %p198
    %s200 = ssub.s32 %s20, %s32
    %p201 = scmp.eq.s32.totalorder %s200, 0
    %s203 = sadd.s32 %s202, 1
    %s204 = scalar_select %p201, %s202, %s203
    %p207 = pneg %p201
    %p208 = scmp.eq.s32.totalorder %s13, 1
    %p209 = por %p207, %p208
    %p210 = scmp.ne.s32.totalorder %s202, %s205
    %p211 = scmp.eq.s32.totalorder %s13, 0
    %p212 = por %p210, %p211
    %p213 = scmp.ne.s32.totalorder %s202, %s205
    %p214 = scmp.eq.s32.totalorder %s18, 1
    %p215 = por %p213, %p214
    %p216 = scmp.ne.s32.totalorder %s205, %s206
    %p217 = scmp.eq.s32.totalorder %s18, 0
    %p218 = por %p216, %p217
    %p219 = scmp.ne.s32.totalorder %s205, %s206
    %p220 = scmp.eq.s32.totalorder %s19, 1
    %p221 = por %p219, %p220
    %p223 = scmp.ne.s32.totalorder %s206, %s222
    %p224 = scmp.eq.s32.totalorder %s19, 0
    %p225 = por %p223, %p224
    %p226 = scmp.le.s32.totalorder 1, %s13
    %p227 = scmp.lt.s32.totalorder %s13, 3
    %p228 = pnand %p226, %p227
    %p229 = pneg %p228
    // Predicated region
    $region9: #{transformer_model_forward.15} parent=5 // pred_check
      _
    $region10: #{transformer_model_forward.15} parent=5 // pred_check_branch
      %231 = sbr.rel (%p228) target = $region12
    $region11: #{transformer_model_forward.15} parent=5 // pred_region
      %s232 = ssub.s32 %s13, 1
      // Predicated region
      $region13: #{transformer_model_forward.15} parent=11 // pred_check
        %p233 = pneg %p77
      $region14: #{transformer_model_forward.15} parent=11 // pred_check_branch
        %235 = sbr.rel (%p233) target = $region16
      $region15: #{transformer_model_forward.15} parent=11 // pred_region
        %p236 = scmp.lt.s32.totalorder %s23, 0
        %s237 = scalar_select %p236, %s23, 0
        %s238 = smul.addr %s237, 4
        %s239 = scalar_lea.vmem %s1, %s238
      $region16: #{transformer_model_forward.15} parent=11 // pred_fallthru
        _
      // Predicated region
      $region17: #{transformer_model_forward.15} parent=11 // pred_check
        %p240 = pneg %p103
      $region18: #{transformer_model_forward.15} parent=11 // pred_check_branch
        %242 = sbr.rel (%p240) target = $region20
      $region19: #{transformer_model_forward.15} parent=11 // pred_region
        %p243 = scmp.lt.s32.totalorder %s23, 0
        %s244 = scalar_select %p243, %s23, 0
        %s245 = scalar_lea.vmem %s2, %s244
      $region20: #{transformer_model_forward.15} parent=11 // pred_fallthru
        _
      // Predicated region
      $region21: #{transformer_model_forward.15} parent=11 // pred_check
        %p246 = pneg %p129
      $region22: #{transformer_model_forward.15} parent=11 // pred_check_branch
        %248 = sbr.rel (%p246) target = $region24
      $region23: #{transformer_model_forward.15} parent=11 // pred_region
        %s249 = smul.u32 8, %s23
        %p250 = scmp.lt.s32.totalorder %s249, 7
        %s251 = scalar_select %p250, %s249, 7
        %s252 = smul.addr %s251, 4
        %s253 = scalar_lea.vmem %s3, %s252
        %s254 = smul.u32 8, %s23
      $region24: #{transformer_model_forward.15} parent=11 // pred_fallthru
        _
      // Predicated region
      $region25: #{transformer_model_forward.15} parent=11 // pred_check
        %p255 = pneg %p150
      $region26: #{transformer_model_forward.15} parent=11 // pred_check_branch
        %257 = sbr.rel (%p255) target = $region28
      $region27: #{transformer_model_forward.15} parent=11 // pred_region
        _
      $region28: #{transformer_model_forward.15} parent=11 // pred_fallthru
        _
      // Predicated region
      $region29: #{transformer_model_forward.15} parent=11 // pred_check
        %p258 = pneg %p171
      $region30: #{transformer_model_forward.15} parent=11 // pred_check_branch
        %260 = sbr.rel (%p258) target = $region32
      $region31: #{transformer_model_forward.15} parent=11 // pred_region
        _
      $region32: #{transformer_model_forward.15} parent=11 // pred_fallthru
        _
      // Predicated region
      $region33: #{transformer_model_forward.15} parent=11 // pred_check
        %p261 = pneg %p192
      $region34: #{transformer_model_forward.15} parent=11 // pred_check_branch
        %263 = sbr.rel (%p261) target = $region36
      $region35: #{transformer_model_forward.15} parent=11 // pred_region
        _
      $region36: #{transformer_model_forward.15} parent=11 // pred_fallthru
        _
    $region12: #{transformer_model_forward.15} parent=5 // pred_fallthru
      _
    %p264 = scmp.lt.s32.totalorder %s13, 2
    // Predicated region
    $region37: #{transformer_model_forward.15} parent=5 // pred_check
      %p265 = pneg %p264
    $region38: #{transformer_model_forward.15} parent=5 // pred_check_branch
      %267 = sbr.rel (%p265) target = $region40
    $region39: #{transformer_model_forward.15} parent=5 // pred_region
      // Predicated region
      $region41: #{transformer_model_forward.15} parent=39 // pred_check
        %p268 = pneg %p45
      $region42: #{transformer_model_forward.15} parent=39 // pred_check_branch
        %270 = sbr.rel (%p268) target = $region44
      $region43: #{transformer_model_forward.15} parent=39 // pred_region
        %p271 = scmp.lt.s32.totalorder %s20, 1
        %s272 = scalar_select %p271, %s20, 1
        %s273 = smul.addr %s272, 8
        %s274 = scalar_lea.vmem %s0, %s273
      $region44: #{transformer_model_forward.15} parent=39 // pred_fallthru
        _
    $region40: #{transformer_model_forward.15} parent=5 // pred_fallthru
      _
    %p275 = scmp.le.s32.totalorder 1, %s13
    %p276 = scmp.lt.s32.totalorder %s13, 3
    %p277 = pnand %p275, %p276
    %p278 = pneg %p277
    // Predicated region
    $region45: #{transformer_model_forward.15} parent=5 // pred_check
      _
    $region46: #{transformer_model_forward.15} parent=5 // pred_check_branch
      %280 = sbr.rel (%p277) target = $region48
    $region47: #{transformer_model_forward.15} parent=5 // pred_region
      %s281 = ssub.s32 %s13, 1
      %p282 = scmp.lt.s32.totalorder %s22, 1
      %s283 = scalar_select %p282, %s22, 1
      %s284 = smul.addr %s283, 8
      %s285 = scalar_lea.vmem %s0, %s284
      %p286 = pneg %p51
      %p287 = pneg %p48
      %p288 = scmp.lt.s32.totalorder %s23, 0
      %s289 = scalar_select %p288, %s23, 0
      %s290 = smul.addr %s289, 4
      %s291 = scalar_lea.vmem %s1, %s290
      %p292 = pneg %p77
      %p293 = pneg %p74
      %p294 = scmp.lt.s32.totalorder %s23, 0
      %s295 = scalar_select %p294, %s23, 0
      %s296 = scalar_lea.vmem %s2, %s295
      %p297 = pneg %p103
      %p298 = pneg %p100
      %s299 = smul.u32 8, %s23
      %p300 = scmp.lt.s32.totalorder %s299, 7
      %s301 = scalar_select %p300, %s299, 7
      %s302 = smul.addr %s301, 4
      %s303 = scalar_lea.vmem %s3, %s302
      %p304 = pneg %p129
      %p305 = pneg %p126
      %p306 = pneg %p150
      %p307 = pneg %p147
      %p308 = pneg %p171
      %p309 = pneg %p168
      %p310 = pneg %p192
      %p311 = pneg %p189
      %p312 = pneg %p218
      %p313 = pneg %p215
      %p314 = scmp.lt.s32.totalorder %s22, 1
      %s315 = scalar_select %p314, %s22, 1
      %s316 = smul.addr %s315, 8
      %s317 = scalar_lea.vmem %s7, %s316
      %p318 = scmp.lt.s32.totalorder %s22, 1
      %s319 = scalar_select %p318, %s22, 1
      %s320 = smul.addr %s319, 8
      %s321 = scalar_lea.vmem %s0, %s320
      %p322 = scmp.lt.s32.totalorder %s23, 0
      %s323 = scalar_select %p322, %s23, 0
      %s324 = smul.addr %s323, 4
      %s325 = scalar_lea.vmem %s1, %s324
      %p326 = scmp.lt.s32.totalorder %s23, 0
      %s327 = scalar_select %p326, %s23, 0
      %s328 = scalar_lea.vmem %s2, %s327
      %s329 = smul.u32 8, %s23
      %p330 = scmp.lt.s32.totalorder %s329, 7
      %s331 = scalar_select %p330, %s329, 7
      %s332 = smul.addr %s331, 4
      %s333 = scalar_lea.vmem %s3, %s332
      %s334 = smul.u32 8, %s23
      %p335 = scmp.lt.s32.totalorder %s22, 1
      %s336 = scalar_select %p335, %s22, 1
      %s337 = smul.addr %s336, 8
      %s338 = scalar_lea.vmem %s7, %s337
      %p340 = scmp.eq.s32.totalorder %s23, 0
      // Predicated region
      $region49: #{transformer_model_forward.15} parent=47 // pred_check
        %p341 = pneg %p340
      $region50: #{transformer_model_forward.15} parent=47 // pred_check_branch
        %343 = sbr.rel (%p341) target = $region52
      $region51: #{transformer_model_forward.15} parent=47 // pred_region
        %vm344 = vcmask 261120
        %345 = vst.msk [vmem:[#allocation2] sm:$0xff] %vm344, 0.0
      $region52: #{transformer_model_forward.15} parent=47 // pred_fallthru
        _
      %v346 = vld [vmem:[%s321] sm:$0xff]
      %v347 = vld [vmem:[%s325] sm:$0xf]
      %v348 = vld [vmem:[%s325 + $0x4] sm:$0xf]
      %v349 = vld [vmem:[%s325 + $0x8] sm:$0xf]
      %v350 = vld [vmem:[%s325 + $0xc] sm:$0xf]
      %v351 = vpack.c.bf16 %v346, %v346
      %v352 = vld [vmem:[%s328] sm:$0x1]
      %v354 = vlaneseq
      %v355 = vshrl.u32 %v354, 7
      %v356 = vsub.s32 0, %v355
      %v357 = vrot.slane %v352, %v356
      %v363 = vunpack.c.l.b16 %v347
      %v364 = vunpack.c.l.b16 %v348
      %v365 = vunpack.c.l.b16 %v349
      %v366 = vunpack.c.l.b16 %v350
      %v367 = vpack.c.b16 %v364, %v363
      %v368 = vpack.c.b16 %v366, %v365
      %vm371 = vcmask 261120
      %v373 = vsel %vm371, %v351, 0
      %375 = vmatprep.subr.bf16.mxu0 0
      %376 = vmatpush1.bf16.msra.mxu0 %v367
      %377 = vmatprep.subr.bf16.mxu0 0
      %378 = vmatpush1.bf16.msra.mxu0 %v368
      %379 = vmatprep.subr.bf16.mxu0 0
      %380 = vmatpush1.bf16.msra.mxu0 0
      %381 = vmatprep.subr.bf16.mxu0 0
      %382 = vmatpush1.bf16.msra.mxu0 0
      %383 = vmatprep.subr.bf16.mxu0 0
      %384 = vmatpush1.bf16.msra.mxu0 0
      %385 = vmatprep.subr.bf16.mxu0 0
      %386 = vmatpush1.bf16.msra.mxu0 0
      %387 = vmatprep.subr.bf16.mxu0 0
      %388 = vmatpush1.bf16.msra.mxu0 0
      %389 = vmatprep.subr.bf16.mxu0 0
      %390 = vmatpush1.bf16.msra.mxu0 0
      %391 = vmatprep.subr.bf16.mxu0 0
      %392 = vmatpush1.bf16.msra.mxu0 0
      %393 = vmatprep.subr.bf16.mxu0 0
      %394 = vmatpush1.bf16.msra.mxu0 0
      %395 = vmatprep.subr.bf16.mxu0 0
      %396 = vmatpush1.bf16.msra.mxu0 0
      %397 = vmatprep.subr.bf16.mxu0 0
      %398 = vmatpush1.bf16.msra.mxu0 0
      %399 = vmatprep.subr.bf16.mxu0 0
      %400 = vmatpush1.bf16.msra.mxu0 0
      %401 = vmatprep.subr.bf16.mxu0 0
      %402 = vmatpush1.bf16.msra.mxu0 0
      %403 = vmatprep.subr.bf16.mxu0 0
      %404 = vmatpush1.bf16.msra.mxu0 0
      %405 = vmatprep.subr.bf16.mxu0 0
      %406 = vmatpush1.bf16.msra.mxu0 0
      %407 = vmatprep.mubr.bf16.mxu0 0
      %408 = vmatmul.mubr.bf16.gmra.mrb[0].mxu0 %v373
      %v409 = vpop.f32.mrb[0].mxu0
      %v410 = vadd.f32 %v357, %v409
      %v411 = vpop.f32.mrb[0].mxu0
      %v412 = vpop.f32.mrb[0].mxu0
      %v413 = vpop.f32.mrb[0].mxu0
      %414 = vdwg.mxu0
      %v415 = vmax.f32 %v410, 0.0
      %v416 = vld [vmem:[#allocation2] sm:$0xff]
      %v417 = vld [vmem:[%s333] sm:$0xf]
      %v418 = vld [vmem:[%s333 + $0x4] sm:$0xf]
      %v419 = vld [vmem:[%s333 + $0x8] sm:$0xf]
      %v420 = vld [vmem:[%s333 + $0xc] sm:$0xf]
      %v421 = vld [vmem:[%s333 + $0x10] sm:$0xf]
      %v422 = vld [vmem:[%s333 + $0x14] sm:$0xf]
      %v423 = vld [vmem:[%s333 + $0x18] sm:$0xf]
      %v424 = vld [vmem:[%s333 + $0x1c] sm:$0xf]
      %v425 = vpack.c.bf16 %v415, %v415
      %v434 = vunpack.c.l.b16 %v417
      %v435 = vunpack.c.l.b16 %v418
      %v436 = vunpack.c.l.b16 %v419
      %v437 = vunpack.c.l.b16 %v420
      %v438 = vunpack.c.l.b16 %v421
      %v439 = vunpack.c.l.b16 %v422
      %v440 = vunpack.c.l.b16 %v423
      %v441 = vunpack.c.l.b16 %v424
      %v442 = vpack.c.b16 %v435, %v434
      %v443 = vpack.c.b16 %v437, %v436
      %v444 = vpack.c.b16 %v439, %v438
      %v445 = vpack.c.b16 %v441, %v440
      %vm450 = vcmask 523264
      %v452 = vsel %vm450, %v425, 0
      %454 = vmatprep.subr.bf16.mxu0 0
      %455 = vmatpush1.bf16.msra.mxu0 %v442
      %456 = vmatprep.subr.bf16.mxu0 0
      %457 = vmatpush1.bf16.msra.mxu0 %v443
      %458 = vmatprep.subr.bf16.mxu0 0
      %459 = vmatpush1.bf16.msra.mxu0 %v444
      %460 = vmatprep.subr.bf16.mxu0 0
      %461 = vmatpush1.bf16.msra.mxu0 %v445
      %462 = vmatprep.subr.bf16.mxu0 0
      %463 = vmatpush1.bf16.msra.mxu0 0
      %464 = vmatprep.subr.bf16.mxu0 0
      %465 = vmatpush1.bf16.msra.mxu0 0
      %466 = vmatprep.subr.bf16.mxu0 0
      %467 = vmatpush1.bf16.msra.mxu0 0
      %468 = vmatprep.subr.bf16.mxu0 0
      %469 = vmatpush1.bf16.msra.mxu0 0
      %470 = vmatprep.subr.bf16.mxu0 0
      %471 = vmatpush1.bf16.msra.mxu0 0
      %472 = vmatprep.subr.bf16.mxu0 0
      %473 = vmatpush1.bf16.msra.mxu0 0
      %474 = vmatprep.subr.bf16.mxu0 0
      %475 = vmatpush1.bf16.msra.mxu0 0
      %476 = vmatprep.subr.bf16.mxu0 0
      %477 = vmatpush1.bf16.msra.mxu0 0
      %478 = vmatprep.subr.bf16.mxu0 0
      %479 = vmatpush1.bf16.msra.mxu0 0
      %480 = vmatprep.subr.bf16.mxu0 0
      %481 = vmatpush1.bf16.msra.mxu0 0
      %482 = vmatprep.subr.bf16.mxu0 0
      %483 = vmatpush1.bf16.msra.mxu0 0
      %484 = vmatprep.subr.bf16.mxu0 0
      %485 = vmatpush1.bf16.msra.mxu0 0
      %486 = vmatprep.mubr.bf16.mxu0 0
      %487 = vmatmul.mubr.bf16.gmra.mrb[0].mxu0 %v452
      %v488 = vpop.f32.mrb[0].mxu0
      %v489 = vadd.f32 0.0, %v488
      %v490 = vpop.f32.mrb[0].mxu0
      %v491 = vpop.f32.mrb[0].mxu0
      %v492 = vpop.f32.mrb[0].mxu0
      %493 = vdwg.mxu0
      %v494 = vadd.f32 %v416, %v489
      %495 = vst.msk [vmem:[#allocation2] sm:$0xff] %vm371, %v494
      // Predicated region
      $region53: #{transformer_model_forward.15} parent=47 // pred_check
        %p496 = pneg %p340
      $region54: #{transformer_model_forward.15} parent=47 // pred_check_branch
        %498 = sbr.rel (%p496) target = $region56
      $region55: #{transformer_model_forward.15} parent=47 // pred_region
        %v499 = vld [vmem:[#allocation2] sm:$0xff]
        %v500 = vadd.f32 %v346, %v499
        %v501 = vld [vmem:[%s4] sm:$0x1]
        %v503 = vlaneseq
        %v504 = vshrl.u32 %v503, 7
        %v505 = vsub.s32 0, %v504
        %v506 = vrot.slane %v501, %v505
        %v508 = vadd.f32 %v500, %v506
        %v509 = vld [vmem:[%s5] sm:$0x1]
        %v510 = vld [vmem:[%s6] sm:$0x1]
        %v511 = vsel %vm371, %v508, 0.0
        %512 = vadd.xlane.f32.xlu0 %v511
        %v513 = vpop.xlane.xlu0 %512
        %v514 = vrcp.pop 32.0
        %v515 = vmul.f32 %v513, %v514
        %v516 = vsub.f32 %v508, %v515
        %v517 = vmul.f32 %v516, %v516
        %v518 = vsel %vm371, %v517, 0.0
        %519 = vadd.xlane.f32.xlu0 %v518
        %v520 = vpop.xlane.xlu0 %519
        %v521 = vmul.f32 %v520, %v514
        %v522 = vadd.f32 %v521, 1e-05
        %v523 = vrsqrt.pop %v522
        %v524 = vmul.f32 %v516, %v523
        %v526 = vlaneseq
        %v527 = vshrl.u32 %v526, 7
        %v528 = vsub.s32 0, %v527
        %v529 = vrot.slane %v509, %v528
        %v531 = vmul.f32 %v524, %v529
        %v533 = vlaneseq
        %v534 = vshrl.u32 %v533, 7
        %v535 = vsub.s32 0, %v534
        %v536 = vrot.slane %v510, %v535
        %v538 = vadd.f32 %v531, %v536
        %539 = vst.msk [vmem:[%s338] sm:$0xff] %vm371, %v538
      $region56: #{transformer_model_forward.15} parent=47 // pred_fallthru
        _
      %p540 = scmp.lt.s32.totalorder %s22, 1
      %s541 = scalar_select %p540, %s22, 1
      %s542 = smul.addr %s541, 8
      %s543 = scalar_lea.vmem %s7, %s542
      // Predicated region
      $region57: #{transformer_model_forward.15} parent=47 // pred_check
        %p544 = pneg %p215
      $region58: #{transformer_model_forward.15} parent=47 // pred_check_branch
        %546 = sbr.rel (%p544) target = $region60
      $region59: #{transformer_model_forward.15} parent=47 // pred_region
        _
      $region60: #{transformer_model_forward.15} parent=47 // pred_fallthru
        _
    $region48: #{transformer_model_forward.15} parent=5 // pred_fallthru
      _
    %p547 = scmp.le.s32.totalorder 2, %s13
    // Predicated region
    $region61: #{transformer_model_forward.15} parent=5 // pred_check
      %p548 = pneg %p547
    $region62: #{transformer_model_forward.15} parent=5 // pred_check_branch
      %550 = sbr.rel (%p548) target = $region64
    $region63: #{transformer_model_forward.15} parent=5 // pred_region
      %s551 = ssub.s32 %s13, 2
      // Predicated region
      $region65: #{transformer_model_forward.15} parent=63 // pred_check
        %p552 = pneg %p221
      $region66: #{transformer_model_forward.15} parent=63 // pred_check_branch
        %554 = sbr.rel (%p552) target = $region68
      $region67: #{transformer_model_forward.15} parent=63 // pred_region
        %p555 = scmp.lt.s32.totalorder %s24, 1
        %s556 = scalar_select %p555, %s24, 1
        %s557 = smul.addr %s556, 8
        %s558 = scalar_lea.vmem %s7, %s557
      $region68: #{transformer_model_forward.15} parent=63 // pred_fallthru
        _
    $region64: #{transformer_model_forward.15} parent=5 // pred_fallthru
      _
  $region6: #{transformer_model_forward.15} parent=0 // loop_footer
    %s17 = sadd.s32 1, %s13
  $region7: #{transformer_model_forward.15} parent=0 // loop_footer_branch
    %12 = sbr.rel target = $region3
  $region8: #{transformer_model_forward.15} parent=0 // loop_exit
    _

// kernel: transformer_model_forward.19
$region0: #{transformer_model_forward.19}
  #allocation0 [shape = 'u32[]', space=smem, size = 0x4, offset = 0x4, fixed_abs, tag = 'smem constant byte address 0x4 - core index']
  #allocation1 [shape = 'u32[144,128]{1,0:T(1,128)}', space=vmem, size = 0x12000, scoped, tag = 'internal scratch']
  %s0 = inlined_call_operand.vmem [shape: f32[2,8,32], index: 0, kind: input, shape index: {}]
  %s1 = inlined_call_operand.vmem [shape: bf16[32,96], index: 1, kind: input, shape index: {}]
  %s2 = inlined_call_operand.vmem [shape: f32[1,96], index: 2, kind: input, shape index: {}]
  %s3 = inlined_call_operand.vmem [shape: bf16[32,32], index: 3, kind: input, shape index: {}]
  %s4 = inlined_call_operand.vmem [shape: f32[1,32], index: 4, kind: input, shape index: {}]
  %s5 = inlined_call_operand.vmem [shape: f32[1,32], index: 5, kind: input, shape index: {}]
  %s6 = inlined_call_operand.vmem [shape: f32[1,32], index: 6, kind: input, shape index: {}]
  %s7 = inlined_call_operand.vmem [shape: f32[2,8,32], index: 7, kind: output, shape index: {}]
  %s8 = sld [smem:[#allocation0]]
  $region61: #{transformer_model_forward.19} parent=0
    _
  %s10 = ssub.s32 1, %s8
  %s11 = scalar_select 0, %s10, %s8
  loop: start=0, step=1, limit=4
  $region2: #{transformer_model_forward.19} parent=0 // loop_pre_header
    _
  $region3: #{transformer_model_forward.19} parent=0 // loop_header
    %s13 = sphi 0, %s17
    %p14 = scmp.ge.s32.totalorder %s13, 4
    %s23 = sphi 0, %s25
    %s26 = sphi 0, %s23
    %s27 = sphi 0, %s26
    %s43 = sphi 0, %s27
    %s47 = sphi 0, %s47
    %s49 = sphi 0, %s47
    %s50 = sphi 0, %s49
    %s64 = sphi 0, %s50
    %s68 = sphi 0, %s68
    %s70 = sphi 0, %s68
    %s71 = sphi 0, %s70
    %s85 = sphi 0, %s71
    %s89 = sphi 0, %s89
    %s91 = sphi 0, %s89
    %s92 = sphi 0, %s91
    %s106 = sphi 0, %s92
    %s110 = sphi 0, %s110
    %s112 = sphi 0, %s110
    %s113 = sphi 0, %s112
    %s127 = sphi 0, %s113
    %s131 = sphi 0, %s131
    %s133 = sphi 0, %s131
    %s134 = sphi 0, %s133
    %s148 = sphi 0, %s134
    %s152 = sphi 0, %s152
    %s154 = sphi 0, %s152
    %s155 = sphi 0, %s154
    %s169 = sphi 0, %s155
    %s175 = sphi 0, %s177
    %s178 = sphi 0, %s175
    %s179 = sphi 0, %s178
    %s195 = sphi 0, %s179
  $region4: #{transformer_model_forward.19} parent=0 // loop_header_branch
    %16 = sbr.rel (%p14) target = $region8
  $region5: #{transformer_model_forward.19} parent=0 // loop_body
    %s18 = ssub.s32 %s13, 1
    %s19 = ssub.s32 %s13, 2
    %s20 = sadd.s32 %s13, 1
    %s21 = ssub.s32 %s13, %s20
    %p22 = scmp.eq.s32.totalorder %s21, 0
    %s24 = sadd.s32 %s23, 1
    %s25 = scalar_select %p22, %s23, %s24
    %p28 = pneg %p22
    %p29 = scmp.eq.s32.totalorder %s13, 1
    %p30 = por %p28, %p29
    %p31 = scmp.ne.s32.totalorder %s23, %s26
    %p32 = scmp.eq.s32.totalorder %s13, 0
    %p33 = por %p31, %p32
    %p34 = scmp.ne.s32.totalorder %s23, %s26
    %p35 = scmp.eq.s32.totalorder %s18, 1
    %p36 = por %p34, %p35
    %p37 = scmp.ne.s32.totalorder %s26, %s27
    %p38 = scmp.eq.s32.totalorder %s18, 0
    %p39 = por %p37, %p38
    %p40 = scmp.ne.s32.totalorder %s26, %s27
    %p41 = scmp.eq.s32.totalorder %s19, 1
    %p42 = por %p40, %p41
    %p44 = scmp.ne.s32.totalorder %s27, %s43
    %p45 = scmp.eq.s32.totalorder %s19, 0
    %p46 = por %p44, %p45
    %s48 = sadd.s32 %s47, 1
    %p51 = scmp.eq.s32.totalorder %s13, 1
    %p52 = scmp.ne.s32.totalorder %s47, %s49
    %p53 = scmp.eq.s32.totalorder %s13, 0
    %p54 = por %p52, %p53
    %p55 = scmp.ne.s32.totalorder %s47, %s49
    %p56 = scmp.eq.s32.totalorder %s18, 1
    %p57 = por %p55, %p56
    %p58 = scmp.ne.s32.totalorder %s49, %s50
    %p59 = scmp.eq.s32.totalorder %s18, 0
    %p60 = por %p58, %p59
    %p61 = scmp.ne.s32.totalorder %s49, %s50
    %p62 = scmp.eq.s32.totalorder %s19, 1
    %p63 = por %p61, %p62
    %p65 = scmp.ne.s32.totalorder %s50, %s64
    %p66 = scmp.eq.s32.totalorder %s19, 0
    %p67 = por %p65, %p66
    %s69 = sadd.s32 %s68, 1
    %p72 = scmp.eq.s32.totalorder %s13, 1
    %p73 = scmp.ne.s32.totalorder %s68, %s70
    %p74 = scmp.eq.s32.totalorder %s13, 0
    %p75 = por %p73, %p74
    %p76 = scmp.ne.s32.totalorder %s68, %s70
    %p77 = scmp.eq.s32.totalorder %s18, 1
    %p78 = por %p76, %p77
    %p79 = scmp.ne.s32.totalorder %s70, %s71
    %p80 = scmp.eq.s32.totalorder %s18, 0
    %p81 = por %p79, %p80
    %p82 = scmp.ne.s32.totalorder %s70, %s71
    %p83 = scmp.eq.s32.totalorder %s19, 1
    %p84 = por %p82, %p83
    %p86 = scmp.ne.s32.totalorder %s71, %s85
    %p87 = scmp.eq.s32.totalorder %s19, 0
    %p88 = por %p86, %p87
    %s90 = sadd.s32 %s89, 1
    %p93 = scmp.eq.s32.totalorder %s13, 1
    %p94 = scmp.ne.s32.totalorder %s89, %s91
    %p95 = scmp.eq.s32.totalorder %s13, 0
    %p96 = por %p94, %p95
    %p97 = scmp.ne.s32.totalorder %s89, %s91
    %p98 = scmp.eq.s32.totalorder %s18, 1
    %p99 = por %p97, %p98
    %p100 = scmp.ne.s32.totalorder %s91, %s92
    %p101 = scmp.eq.s32.totalorder %s18, 0
    %p102 = por %p100, %p101
    %p103 = scmp.ne.s32.totalorder %s91, %s92
    %p104 = scmp.eq.s32.totalorder %s19, 1
    %p105 = por %p103, %p104
    %p107 = scmp.ne.s32.totalorder %s92, %s106
    %p108 = scmp.eq.s32.totalorder %s19, 0
    %p109 = por %p107, %p108
    %s111 = sadd.s32 %s110, 1
    %p114 = scmp.eq.s32.totalorder %s13, 1
    %p115 = scmp.ne.s32.totalorder %s110, %s112
    %p116 = scmp.eq.s32.totalorder %s13, 0
    %p117 = por %p115, %p116
    %p118 = scmp.ne.s32.totalorder %s110, %s112
    %p119 = scmp.eq.s32.totalorder %s18, 1
    %p120 = por %p118, %p119
    %p121 = scmp.ne.s32.totalorder %s112, %s113
    %p122 = scmp.eq.s32.totalorder %s18, 0
    %p123 = por %p121, %p122
    %p124 = scmp.ne.s32.totalorder %s112, %s113
    %p125 = scmp.eq.s32.totalorder %s19, 1
    %p126 = por %p124, %p125
    %p128 = scmp.ne.s32.totalorder %s113, %s127
    %p129 = scmp.eq.s32.totalorder %s19, 0
    %p130 = por %p128, %p129
    %s132 = sadd.s32 %s131, 1
    %p135 = scmp.eq.s32.totalorder %s13, 1
    %p136 = scmp.ne.s32.totalorder %s131, %s133
    %p137 = scmp.eq.s32.totalorder %s13, 0
    %p138 = por %p136, %p137
    %p139 = scmp.ne.s32.totalorder %s131, %s133
    %p140 = scmp.eq.s32.totalorder %s18, 1
    %p141 = por %p139, %p140
    %p142 = scmp.ne.s32.totalorder %s133, %s134
    %p143 = scmp.eq.s32.totalorder %s18, 0
    %p144 = por %p142, %p143
    %p145 = scmp.ne.s32.totalorder %s133, %s134
    %p146 = scmp.eq.s32.totalorder %s19, 1
    %p147 = por %p145, %p146
    %p149 = scmp.ne.s32.totalorder %s134, %s148
    %p150 = scmp.eq.s32.totalorder %s19, 0
    %p151 = por %p149, %p150
    %s153 = sadd.s32 %s152, 1
    %p156 = scmp.eq.s32.totalorder %s13, 1
    %p157 = scmp.ne.s32.totalorder %s152, %s154
    %p158 = scmp.eq.s32.totalorder %s13, 0
    %p159 = por %p157, %p158
    %p160 = scmp.ne.s32.totalorder %s152, %s154
    %p161 = scmp.eq.s32.totalorder %s18, 1
    %p162 = por %p160, %p161
    %p163 = scmp.ne.s32.totalorder %s154, %s155
    %p164 = scmp.eq.s32.totalorder %s18, 0
    %p165 = por %p163, %p164
    %p166 = scmp.ne.s32.totalorder %s154, %s155
    %p167 = scmp.eq.s32.totalorder %s19, 1
    %p168 = por %p166, %p167
    %p170 = scmp.ne.s32.totalorder %s155, %s169
    %p171 = scmp.eq.s32.totalorder %s19, 0
    %p172 = por %p170, %p171
    %s173 = ssub.s32 %s13, %s20
    %p174 = scmp.eq.s32.totalorder %s173, 0
    %s176 = sadd.s32 %s175, 1
    %s177 = scalar_select %p174, %s175, %s176
    %p180 = pneg %p174
    %p181 = scmp.eq.s32.totalorder %s13, 1
    %p182 = por %p180, %p181
    %p183 = scmp.ne.s32.totalorder %s175, %s178
    %p184 = scmp.eq.s32.totalorder %s13, 0
    %p185 = por %p183, %p184
    %p186 = scmp.ne.s32.totalorder %s175, %s178
    %p187 = scmp.eq.s32.totalorder %s18, 1
    %p188 = por %p186, %p187
    %p189 = scmp.ne.s32.totalorder %s178, %s179
    %p190 = scmp.eq.s32.totalorder %s18, 0
    %p191 = por %p189, %p190
    %p192 = scmp.ne.s32.totalorder %s178, %s179
    %p193 = scmp.eq.s32.totalorder %s19, 1
    %p194 = por %p192, %p193
    %p196 = scmp.ne.s32.totalorder %s179, %s195
    %p197 = scmp.eq.s32.totalorder %s19, 0
    %p198 = por %p196, %p197
    %p199 = scmp.le.s32.totalorder 1, %s13
    %p200 = scmp.lt.s32.totalorder %s13, 3
    %p201 = pnand %p199, %p200
    %p202 = pneg %p201
    // Predicated region
    $region9: #{transformer_model_forward.19} parent=5 // pred_check
      _
    $region10: #{transformer_model_forward.19} parent=5 // pred_check_branch
      %204 = sbr.rel (%p201) target = $region12
    $region11: #{transformer_model_forward.19} parent=5 // pred_region
      %s205 = ssub.s32 %s13, 1
      // Predicated region
      $region13: #{transformer_model_forward.19} parent=11 // pred_check
        %p206 = pneg %p60
      $region14: #{transformer_model_forward.19} parent=11 // pred_check_branch
        %208 = sbr.rel (%p206) target = $region16
      $region15: #{transformer_model_forward.19} parent=11 // pred_region
        _
      $region16: #{transformer_model_forward.19} parent=11 // pred_fallthru
        _
      // Predicated region
      $region17: #{transformer_model_forward.19} parent=11 // pred_check
        %p209 = pneg %p81
      $region18: #{transformer_model_forward.19} parent=11 // pred_check_branch
        %211 = sbr.rel (%p209) target = $region20
      $region19: #{transformer_model_forward.19} parent=11 // pred_region
        _
      $region20: #{transformer_model_forward.19} parent=11 // pred_fallthru
        _
      // Predicated region
      $region21: #{transformer_model_forward.19} parent=11 // pred_check
        %p212 = pneg %p102
      $region22: #{transformer_model_forward.19} parent=11 // pred_check_branch
        %214 = sbr.rel (%p212) target = $region24
      $region23: #{transformer_model_forward.19} parent=11 // pred_region
        _
      $region24: #{transformer_model_forward.19} parent=11 // pred_fallthru
        _
      // Predicated region
      $region25: #{transformer_model_forward.19} parent=11 // pred_check
        %p215 = pneg %p123
      $region26: #{transformer_model_forward.19} parent=11 // pred_check_branch
        %217 = sbr.rel (%p215) target = $region28
      $region27: #{transformer_model_forward.19} parent=11 // pred_region
        _
      $region28: #{transformer_model_forward.19} parent=11 // pred_fallthru
        _
      // Predicated region
      $region29: #{transformer_model_forward.19} parent=11 // pred_check
        %p218 = pneg %p144
      $region30: #{transformer_model_forward.19} parent=11 // pred_check_branch
        %220 = sbr.rel (%p218) target = $region32
      $region31: #{transformer_model_forward.19} parent=11 // pred_region
        _
      $region32: #{transformer_model_forward.19} parent=11 // pred_fallthru
        _
      // Predicated region
      $region33: #{transformer_model_forward.19} parent=11 // pred_check
        %p221 = pneg %p165
      $region34: #{transformer_model_forward.19} parent=11 // pred_check_branch
        %223 = sbr.rel (%p221) target = $region36
      $region35: #{transformer_model_forward.19} parent=11 // pred_region
        _
      $region36: #{transformer_model_forward.19} parent=11 // pred_fallthru
        _
    $region12: #{transformer_model_forward.19} parent=5 // pred_fallthru
      _
    %p224 = scmp.lt.s32.totalorder %s13, 2
    // Predicated region
    $region37: #{transformer_model_forward.19} parent=5 // pred_check
      %p225 = pneg %p224
    $region38: #{transformer_model_forward.19} parent=5 // pred_check_branch
      %227 = sbr.rel (%p225) target = $region40
    $region39: #{transformer_model_forward.19} parent=5 // pred_region
      // Predicated region
      $region41: #{transformer_model_forward.19} parent=39 // pred_check
        %p228 = pneg %p33
      $region42: #{transformer_model_forward.19} parent=39 // pred_check_branch
        %230 = sbr.rel (%p228) target = $region44
      $region43: #{transformer_model_forward.19} parent=39 // pred_region
        %p231 = scmp.lt.s32.totalorder %s13, 1
        %s232 = scalar_select %p231, %s13, 1
        %s233 = smul.addr %s232, 8
        %s234 = scalar_lea.vmem %s0, %s233
      $region44: #{transformer_model_forward.19} parent=39 // pred_fallthru
        _
    $region40: #{transformer_model_forward.19} parent=5 // pred_fallthru
      _
    %p235 = scmp.le.s32.totalorder 1, %s13
    %p236 = scmp.lt.s32.totalorder %s13, 3
    %p237 = pnand %p235, %p236
    %p238 = pneg %p237
    // Predicated region
    $region45: #{transformer_model_forward.19} parent=5 // pred_check
      _
    $region46: #{transformer_model_forward.19} parent=5 // pred_check_branch
      %240 = sbr.rel (%p237) target = $region48
    $region47: #{transformer_model_forward.19} parent=5 // pred_region
      %s241 = ssub.s32 %s13, 1
      %p242 = scmp.lt.s32.totalorder %s18, 1
      %s243 = scalar_select %p242, %s18, 1
      %s244 = smul.addr %s243, 8
      %s245 = scalar_lea.vmem %s0, %s244
      %p246 = pneg %p39
      %p247 = pneg %p36
      %p248 = pneg %p60
      %p249 = pneg %p57
      %p250 = pneg %p81
      %p251 = pneg %p78
      %p252 = pneg %p102
      %p253 = pneg %p99
      %p254 = pneg %p123
      %p255 = pneg %p120
      %p256 = pneg %p144
      %p257 = pneg %p141
      %p258 = pneg %p165
      %p259 = pneg %p162
      %p260 = pneg %p191
      %p261 = pneg %p188
      %p262 = scmp.lt.s32.totalorder %s18, 1
      %s263 = scalar_select %p262, %s18, 1
      %s264 = smul.addr %s263, 8
      %s265 = scalar_lea.vmem %s7, %s264
      %p266 = scmp.lt.s32.totalorder %s18, 1
      %s267 = scalar_select %p266, %s18, 1
      %s268 = smul.addr %s267, 8
      %s269 = scalar_lea.vmem %s0, %s268
      %p270 = scmp.lt.s32.totalorder %s18, 1
      %s271 = scalar_select %p270, %s18, 1
      %s272 = smul.addr %s271, 8
      %s273 = scalar_lea.vmem %s7, %s272
      %v275 = vld [vmem:[%s269] sm:$0xff]
      %v276 = vld [vmem:[%s1] sm:$0xf]
      %v277 = vld [vmem:[%s1 + $0x4] sm:$0xf]
      %v278 = vld [vmem:[%s1 + $0x8] sm:$0xf]
      %v279 = vld [vmem:[%s1 + $0xc] sm:$0xf]
      %v280 = vpack.c.bf16 %v275, %v275
      %v281 = vld [vmem:[%s2] sm:$0x1]
      %v283 = vlaneseq
      %v284 = vshrl.u32 %v283, 7
      %v285 = vsub.s32 0, %v284
      %v286 = vrot.slane %v281, %v285
      %v292 = vunpack.c.l.b16 %v276
      %v293 = vunpack.c.l.b16 %v277
      %v294 = vunpack.c.l.b16 %v278
      %v295 = vunpack.c.l.b16 %v279
      %v296 = vpack.c.b16 %v293, %v292
      %v297 = vpack.c.b16 %v295, %v294
      %vm300 = vcmask 261120
      %v302 = vsel %vm300, %v280, 0
      %304 = vmatprep.subr.bf16.mxu0 0
      %305 = vmatpush1.bf16.msra.mxu0 %v296
      %306 = vmatprep.subr.bf16.mxu0 0
      %307 = vmatpush1.bf16.msra.mxu0 %v297
      %308 = vmatprep.subr.bf16.mxu0 0
      %309 = vmatpush1.bf16.msra.mxu0 0
      %310 = vmatprep.subr.bf16.mxu0 0
      %311 = vmatpush1.bf16.msra.mxu0 0
      %312 = vmatprep.subr.bf16.mxu0 0
      %313 = vmatpush1.bf16.msra.mxu0 0
      %314 = vmatprep.subr.bf16.mxu0 0
      %315 = vmatpush1.bf16.msra.mxu0 0
      %316 = vmatprep.subr.bf16.mxu0 0
      %317 = vmatpush1.bf16.msra.mxu0 0
      %318 = vmatprep.subr.bf16.mxu0 0
      %319 = vmatpush1.bf16.msra.mxu0 0
      %320 = vmatprep.subr.bf16.mxu0 0
      %321 = vmatpush1.bf16.msra.mxu0 0
      %322 = vmatprep.subr.bf16.mxu0 0
      %323 = vmatpush1.bf16.msra.mxu0 0
      %324 = vmatprep.subr.bf16.mxu0 0
      %325 = vmatpush1.bf16.msra.mxu0 0
      %326 = vmatprep.subr.bf16.mxu0 0
      %327 = vmatpush1.bf16.msra.mxu0 0
      %328 = vmatprep.subr.bf16.mxu0 0
      %329 = vmatpush1.bf16.msra.mxu0 0
      %330 = vmatprep.subr.bf16.mxu0 0
      %331 = vmatpush1.bf16.msra.mxu0 0
      %332 = vmatprep.subr.bf16.mxu0 0
      %333 = vmatpush1.bf16.msra.mxu0 0
      %334 = vmatprep.subr.bf16.mxu0 0
      %335 = vmatpush1.bf16.msra.mxu0 0
      %336 = vmatprep.mubr.bf16.mxu0 0
      %337 = vmatmul.mubr.bf16.gmra.mrb[0].mxu0 %v302
      %v338 = vpop.f32.mrb[0].mxu0
      %v339 = vadd.f32 %v286, %v338
      %v340 = vpop.f32.mrb[0].mxu0
      %v341 = vpop.f32.mrb[0].mxu0
      %v342 = vpop.f32.mrb[0].mxu0
      %343 = vdwg.mxu0
      %v344 = vpack.c.bf16 %v339, %v339
      %346 = vrot.lane.b32.xlu0 %v344, 96
      %v347 = vpop.permute.xlu0 %346
      %vm348 = vcmask 64512
      %v350 = vsel %vm348, %v344, 0
      %v353 = vsel %vm348, %v347, 0
      %355 = vmatprep.subr.bf16.mxu0 0
      %356 = vmatpush1.bf16.xpose.msra.mxu0 %v353
      %357 = vmatprep.subr.bf16.mxu0 0
      %358 = vmatpush1.bf16.xpose.msra.mxu0 0
      %359 = vmatprep.subr.bf16.mxu0 0
      %360 = vmatpush1.bf16.xpose.msra.mxu0 0
      %361 = vmatprep.subr.bf16.mxu0 0
      %362 = vmatpush1.bf16.xpose.msra.mxu0 0
      %363 = vmatprep.subr.bf16.mxu0 0
      %364 = vmatpush1.bf16.xpose.msra.mxu0 0
      %365 = vmatprep.subr.bf16.mxu0 0
      %366 = vmatpush1.bf16.xpose.msra.mxu0 0
      %367 = vmatprep.subr.bf16.mxu0 0
      %368 = vmatpush1.bf16.xpose.msra.mxu0 0
      %369 = vmatprep.subr.bf16.mxu0 0
      %370 = vmatpush1.bf16.xpose.msra.mxu0 0
      %371 = vmatprep.subr.bf16.mxu0 0
      %372 = vmatpush1.bf16.xpose.msra.mxu0 0
      %373 = vmatprep.subr.bf16.mxu0 0
      %374 = vmatpush1.bf16.xpose.msra.mxu0 0
      %375 = vmatprep.subr.bf16.mxu0 0
      %376 = vmatpush1.bf16.xpose.msra.mxu0 0
      %377 = vmatprep.subr.bf16.mxu0 0
      %378 = vmatpush1.bf16.xpose.msra.mxu0 0
      %379 = vmatprep.subr.bf16.mxu0 0
      %380 = vmatpush1.bf16.xpose.msra.mxu0 0
      %381 = vmatprep.subr.bf16.mxu0 0
      %382 = vmatpush1.bf16.xpose.msra.mxu0 0
      %383 = vmatprep.subr.bf16.mxu0 0
      %384 = vmatpush1.bf16.xpose.msra.mxu0 0
      %385 = vmatprep.subr.bf16.mxu0 0
      %386 = vmatpush1.bf16.xpose.msra.mxu0 0
      %387 = vmatprep.mubr.bf16.mxu0 0
      %388 = vmatmul.mubr.bf16.gmra.mrb[0].mxu0 %v350
      %v389 = vpop.f32.mrb[0].mxu0
      %v390 = vadd.f32 0.0, %v389
      %v391 = vpop.f32.mrb[0].mxu0
      %v392 = vpop.f32.mrb[0].mxu0
      %v393 = vpop.f32.mrb[0].mxu0
      %394 = vdwg.mxu0
      %v395 = vsel %vm348, %v390, -inf
      %396 = vmax.xlane.f32.xlu0 %v395
      %v397 = vpop.xlane.xlu0 %396
      %v398 = vsub.f32 %v390, %v397
      %v399 = vmul.f32 %v398, 1.442695
      %v400 = vpow.pop %v399
      %v401 = vsel %vm348, %v400, 0.0
      %402 = vadd.xlane.f32.xlu0 %v401
      %v403 = vpop.xlane.xlu0 %402
      %v404 = vrcp.pop %v403
      %v405 = vmul.f32 %v400, %v404
      %v406 = vpack.c.bf16 %v405, %v405
      %407 = vrot.lane.b32.xlu0 %v344, 64
      %v408 = vpop.permute.xlu0 %407
      %v410 = vsel %vm348, %v406, 0
      %vm412 = vcmask 1043456
      %v414 = vsel %vm412, %v408, 0
      %416 = vmatprep.subr.bf16.mxu0 0
      %417 = vmatpush1.bf16.msra.mxu0 %v414
      %418 = vmatprep.subr.bf16.mxu0 0
      %419 = vmatpush1.bf16.msra.mxu0 0
      %420 = vmatprep.subr.bf16.mxu0 0
      %421 = vmatpush1.bf16.msra.mxu0 0
      %422 = vmatprep.subr.bf16.mxu0 0
      %423 = vmatpush1.bf16.msra.mxu0 0
      %424 = vmatprep.subr.bf16.mxu0 0
      %425 = vmatpush1.bf16.msra.mxu0 0
      %426 = vmatprep.subr.bf16.mxu0 0
      %427 = vmatpush1.bf16.msra.mxu0 0
      %428 = vmatprep.subr.bf16.mxu0 0
      %429 = vmatpush1.bf16.msra.mxu0 0
      %430 = vmatprep.subr.bf16.mxu0 0
      %431 = vmatpush1.bf16.msra.mxu0 0
      %432 = vmatprep.subr.bf16.mxu0 0
      %433 = vmatpush1.bf16.msra.mxu0 0
      %434 = vmatprep.subr.bf16.mxu0 0
      %435 = vmatpush1.bf16.msra.mxu0 0
      %436 = vmatprep.subr.bf16.mxu0 0
      %437 = vmatpush1.bf16.msra.mxu0 0
      %438 = vmatprep.subr.bf16.mxu0 0
      %439 = vmatpush1.bf16.msra.mxu0 0
      %440 = vmatprep.subr.bf16.mxu0 0
      %441 = vmatpush1.bf16.msra.mxu0 0
      %442 = vmatprep.subr.bf16.mxu0 0
      %443 = vmatpush1.bf16.msra.mxu0 0
      %444 = vmatprep.subr.bf16.mxu0 0
      %445 = vmatpush1.bf16.msra.mxu0 0
      %446 = vmatprep.subr.bf16.mxu0 0
      %447 = vmatpush1.bf16.msra.mxu0 0
      %448 = vmatprep.mubr.bf16.mxu0 0
      %449 = vmatmul.mubr.bf16.gmra.mrb[0].mxu0 %v410
      %v450 = vpop.f32.mrb[0].mxu0
      %v451 = vadd.f32 0.0, %v450
      %v452 = vpop.f32.mrb[0].mxu0
      %v453 = vpop.f32.mrb[0].mxu0
      %v454 = vpop.f32.mrb[0].mxu0
      %455 = vdwg.mxu0
      %456 = vrot.lane.b32.xlu0 %v344, 120
      %v457 = vpop.permute.xlu0 %456
      %458 = vrot.lane.b32.xlu0 %v344, 88
      %v459 = vpop.permute.xlu0 %458
      %v461 = vsel %vm348, %v457, 0
      %v464 = vsel %vm348, %v459, 0
      %466 = vmatprep.subr.bf16.mxu0 0
      %467 = vmatpush1.bf16.xpose.msra.mxu0 %v464
      %468 = vmatprep.subr.bf16.mxu0 0
      %469 = vmatpush1.bf16.xpose.msra.mxu0 0
      %470 = vmatprep.subr.bf16.mxu0 0
      %471 = vmatpush1.bf16.xpose.msra.mxu0 0
      %472 = vmatprep.subr.bf16.mxu0 0
      %473 = vmatpush1.bf16.xpose.msra.mxu0 0
      %474 = vmatprep.subr.bf16.mxu0 0
      %475 = vmatpush1.bf16.xpose.msra.mxu0 0
      %476 = vmatprep.subr.bf16.mxu0 0
      %477 = vmatpush1.bf16.xpose.msra.mxu0 0
      %478 = vmatprep.subr.bf16.mxu0 0
      %479 = vmatpush1.bf16.xpose.msra.mxu0 0
      %480 = vmatprep.subr.bf16.mxu0 0
      %481 = vmatpush1.bf16.xpose.msra.mxu0 0
      %482 = vmatprep.subr.bf16.mxu0 0
      %483 = vmatpush1.bf16.xpose.msra.mxu0 0
      %484 = vmatprep.subr.bf16.mxu0 0
      %485 = vmatpush1.bf16.xpose.msra.mxu0 0
      %486 = vmatprep.subr.bf16.mxu0 0
      %487 = vmatpush1.bf16.xpose.msra.mxu0 0
      %488 = vmatprep.subr.bf16.mxu0 0
      %489 = vmatpush1.bf16.xpose.msra.mxu0 0
      %490 = vmatprep.subr.bf16.mxu0 0
      %491 = vmatpush1.bf16.xpose.msra.mxu0 0
      %492 = vmatprep.subr.bf16.mxu0 0
      %493 = vmatpush1.bf16.xpose.msra.mxu0 0
      %494 = vmatprep.subr.bf16.mxu0 0
      %495 = vmatpush1.bf16.xpose.msra.mxu0 0
      %496 = vmatprep.subr.bf16.mxu0 0
      %497 = vmatpush1.bf16.xpose.msra.mxu0 0
      %498 = vmatprep.mubr.bf16.mxu0 0
      %499 = vmatmul.mubr.bf16.gmra.mrb[0].mxu0 %v461
      %v500 = vpop.f32.mrb[0].mxu0
      %v501 = vadd.f32 0.0, %v500
      %v502 = vpop.f32.mrb[0].mxu0
      %v503 = vpop.f32.mrb[0].mxu0
      %v504 = vpop.f32.mrb[0].mxu0
      %505 = vdwg.mxu0
      %v506 = vsel %vm348, %v501, -inf
      %507 = vmax.xlane.f32.xlu0 %v506
      %v508 = vpop.xlane.xlu0 %507
      %v509 = vsub.f32 %v501, %v508
      %v510 = vmul.f32 %v509, 1.442695
      %v511 = vpow.pop %v510
      %v512 = vsel %vm348, %v511, 0.0
      %513 = vadd.xlane.f32.xlu0 %v512
      %v514 = vpop.xlane.xlu0 %513
      %v515 = vrcp.pop %v514
      %v516 = vmul.f32 %v511, %v515
      %v517 = vpack.c.bf16 %v516, %v516
      %518 = vrot.lane.b32.xlu0 %v344, 56
      %v519 = vpop.permute.xlu0 %518
      %v521 = vsel %vm348, %v517, 0
      %v524 = vsel %vm412, %v519, 0
      %526 = vmatprep.subr.bf16.mxu0 0
      %527 = vmatpush1.bf16.msra.mxu0 %v524
      %528 = vmatprep.subr.bf16.mxu0 0
      %529 = vmatpush1.bf16.msra.mxu0 0
      %530 = vmatprep.subr.bf16.mxu0 0
      %531 = vmatpush1.bf16.msra.mxu0 0
      %532 = vmatprep.subr.bf16.mxu0 0
      %533 = vmatpush1.bf16.msra.mxu0 0
      %534 = vmatprep.subr.bf16.mxu0 0
      %535 = vmatpush1.bf16.msra.mxu0 0
      %536 = vmatprep.subr.bf16.mxu0 0
      %537 = vmatpush1.bf16.msra.mxu0 0
      %538 = vmatprep.subr.bf16.mxu0 0
      %539 = vmatpush1.bf16.msra.mxu0 0
      %540 = vmatprep.subr.bf16.mxu0 0
      %541 = vmatpush1.bf16.msra.mxu0 0
      %542 = vmatprep.subr.bf16.mxu0 0
      %543 = vmatpush1.bf16.msra.mxu0 0
      %544 = vmatprep.subr.bf16.mxu0 0
      %545 = vmatpush1.bf16.msra.mxu0 0
      %546 = vmatprep.subr.bf16.mxu0 0
      %547 = vmatpush1.bf16.msra.mxu0 0
      %548 = vmatprep.subr.bf16.mxu0 0
      %549 = vmatpush1.bf16.msra.mxu0 0
      %550 = vmatprep.subr.bf16.mxu0 0
      %551 = vmatpush1.bf16.msra.mxu0 0
      %552 = vmatprep.subr.bf16.mxu0 0
      %553 = vmatpush1.bf16.msra.mxu0 0
      %554 = vmatprep.subr.bf16.mxu0 0
      %555 = vmatpush1.bf16.msra.mxu0 0
      %556 = vmatprep.subr.bf16.mxu0 0
      %557 = vmatpush1.bf16.msra.mxu0 0
      %558 = vmatprep.mubr.bf16.mxu0 0
      %559 = vmatmul.mubr.bf16.gmra.mrb[0].mxu0 %v521
      %v560 = vpop.f32.mrb[0].mxu0
      %v561 = vadd.f32 0.0, %v560
      %v562 = vpop.f32.mrb[0].mxu0
      %v563 = vpop.f32.mrb[0].mxu0
      %v564 = vpop.f32.mrb[0].mxu0
      %565 = vdwg.mxu0
      %566 = vrot.lane.b32.xlu0 %v344, 112
      %v567 = vpop.permute.xlu0 %566
      %568 = vrot.lane.b32.xlu0 %v344, 80
      %v569 = vpop.permute.xlu0 %568
      %v571 = vsel %vm348, %v567, 0
      %v574 = vsel %vm348, %v569, 0
      %576 = vmatprep.subr.bf16.mxu0 0
      %577 = vmatpush1.bf16.xpose.msra.mxu0 %v574
      %578 = vmatprep.subr.bf16.mxu0 0
      %579 = vmatpush1.bf16.xpose.msra.mxu0 0
      %580 = vmatprep.subr.bf16.mxu0 0
      %581 = vmatpush1.bf16.xpose.msra.mxu0 0
      %582 = vmatprep.subr.bf16.mxu0 0
      %583 = vmatpush1.bf16.xpose.msra.mxu0 0
      %584 = vmatprep.subr.bf16.mxu0 0
      %585 = vmatpush1.bf16.xpose.msra.mxu0 0
      %586 = vmatprep.subr.bf16.mxu0 0
      %587 = vmatpush1.bf16.xpose.msra.mxu0 0
      %588 = vmatprep.subr.bf16.mxu0 0
      %589 = vmatpush1.bf16.xpose.msra.mxu0 0
      %590 = vmatprep.subr.bf16.mxu0 0
      %591 = vmatpush1.bf16.xpose.msra.mxu0 0
      %592 = vmatprep.subr.bf16.mxu0 0
      %593 = vmatpush1.bf16.xpose.msra.mxu0 0
      %594 = vmatprep.subr.bf16.mxu0 0
      %595 = vmatpush1.bf16.xpose.msra.mxu0 0
      %596 = vmatprep.subr.bf16.mxu0 0
      %597 = vmatpush1.bf16.xpose.msra.mxu0 0
      %598 = vmatprep.subr.bf16.mxu0 0
      %599 = vmatpush1.bf16.xpose.msra.mxu0 0
      %600 = vmatprep.subr.bf16.mxu0 0
      %601 = vmatpush1.bf16.xpose.msra.mxu0 0
      %602 = vmatprep.subr.bf16.mxu0 0
      %603 = vmatpush1.bf16.xpose.msra.mxu0 0
      %604 = vmatprep.subr.bf16.mxu0 0
      %605 = vmatpush1.bf16.xpose.msra.mxu0 0
      %606 = vmatprep.subr.bf16.mxu0 0
      %607 = vmatpush1.bf16.xpose.msra.mxu0 0
      %608 = vmatprep.mubr.bf16.mxu0 0
      %609 = vmatmul.mubr.bf16.gmra.mrb[0].mxu0 %v571
      %v610 = vpop.f32.mrb[0].mxu0
      %v611 = vadd.f32 0.0, %v610
      %v612 = vpop.f32.mrb[0].mxu0
      %v613 = vpop.f32.mrb[0].mxu0
      %v614 = vpop.f32.mrb[0].mxu0
      %615 = vdwg.mxu0
      %v616 = vsel %vm348, %v611, -inf
      %617 = vmax.xlane.f32.xlu0 %v616
      %v618 = vpop.xlane.xlu0 %617
      %v619 = vsub.f32 %v611, %v618
      %v620 = vmul.f32 %v619, 1.442695
      %v621 = vpow.pop %v620
      %v622 = vsel %vm348, %v621, 0.0
      %623 = vadd.xlane.f32.xlu0 %v622
      %v624 = vpop.xlane.xlu0 %623
      %v625 = vrcp.pop %v624
      %v626 = vmul.f32 %v621, %v625
      %v627 = vpack.c.bf16 %v626, %v626
      %628 = vrot.lane.b32.xlu0 %v344, 48
      %v629 = vpop.permute.xlu0 %628
      %v631 = vsel %vm348, %v627, 0
      %v634 = vsel %vm412, %v629, 0
      %636 = vmatprep.subr.bf16.mxu0 0
      %637 = vmatpush1.bf16.msra.mxu0 %v634
      %638 = vmatprep.subr.bf16.mxu0 0
      %639 = vmatpush1.bf16.msra.mxu0 0
      %640 = vmatprep.subr.bf16.mxu0 0
      %641 = vmatpush1.bf16.msra.mxu0 0
      %642 = vmatprep.subr.bf16.mxu0 0
      %643 = vmatpush1.bf16.msra.mxu0 0
      %644 = vmatprep.subr.bf16.mxu0 0
      %645 = vmatpush1.bf16.msra.mxu0 0
      %646 = vmatprep.subr.bf16.mxu0 0
      %647 = vmatpush1.bf16.msra.mxu0 0
      %648 = vmatprep.subr.bf16.mxu0 0
      %649 = vmatpush1.bf16.msra.mxu0 0
      %650 = vmatprep.subr.bf16.mxu0 0
      %651 = vmatpush1.bf16.msra.mxu0 0
      %652 = vmatprep.subr.bf16.mxu0 0
      %653 = vmatpush1.bf16.msra.mxu0 0
      %654 = vmatprep.subr.bf16.mxu0 0
      %655 = vmatpush1.bf16.msra.mxu0 0
      %656 = vmatprep.subr.bf16.mxu0 0
      %657 = vmatpush1.bf16.msra.mxu0 0
      %658 = vmatprep.subr.bf16.mxu0 0
      %659 = vmatpush1.bf16.msra.mxu0 0
      %660 = vmatprep.subr.bf16.mxu0 0
      %661 = vmatpush1.bf16.msra.mxu0 0
      %662 = vmatprep.subr.bf16.mxu0 0
      %663 = vmatpush1.bf16.msra.mxu0 0
      %664 = vmatprep.subr.bf16.mxu0 0
      %665 = vmatpush1.bf16.msra.mxu0 0
      %666 = vmatprep.subr.bf16.mxu0 0
      %667 = vmatpush1.bf16.msra.mxu0 0
      %668 = vmatprep.mubr.bf16.mxu0 0
      %669 = vmatmul.mubr.bf16.gmra.mrb[0].mxu0 %v631
      %v670 = vpop.f32.mrb[0].mxu0
      %v671 = vadd.f32 0.0, %v670
      %v672 = vpop.f32.mrb[0].mxu0
      %v673 = vpop.f32.mrb[0].mxu0
      %v674 = vpop.f32.mrb[0].mxu0
      %675 = vdwg.mxu0
      %676 = vrot.lane.b32.xlu0 %v344, 104
      %v677 = vpop.permute.xlu0 %676
      %678 = vrot.lane.b32.xlu0 %v344, 72
      %v679 = vpop.permute.xlu0 %678
      %v681 = vsel %vm348, %v677, 0
      %v684 = vsel %vm348, %v679, 0
      %686 = vmatprep.subr.bf16.mxu0 0
      %687 = vmatpush1.bf16.xpose.msra.mxu0 %v684
      %688 = vmatprep.subr.bf16.mxu0 0
      %689 = vmatpush1.bf16.xpose.msra.mxu0 0
      %690 = vmatprep.subr.bf16.mxu0 0
      %691 = vmatpush1.bf16.xpose.msra.mxu0 0
      %692 = vmatprep.subr.bf16.mxu0 0
      %693 = vmatpush1.bf16.xpose.msra.mxu0 0
      %694 = vmatprep.subr.bf16.mxu0 0
      %695 = vmatpush1.bf16.xpose.msra.mxu0 0
      %696 = vmatprep.subr.bf16.mxu0 0
      %697 = vmatpush1.bf16.xpose.msra.mxu0 0
      %698 = vmatprep.subr.bf16.mxu0 0
      %699 = vmatpush1.bf16.xpose.msra.mxu0 0
      %700 = vmatprep.subr.bf16.mxu0 0
      %701 = vmatpush1.bf16.xpose.msra.mxu0 0
      %702 = vmatprep.subr.bf16.mxu0 0
      %703 = vmatpush1.bf16.xpose.msra.mxu0 0
      %704 = vmatprep.subr.bf16.mxu0 0
      %705 = vmatpush1.bf16.xpose.msra.mxu0 0
      %706 = vmatprep.subr.bf16.mxu0 0
      %707 = vmatpush1.bf16.xpose.msra.mxu0 0
      %708 = vmatprep.subr.bf16.mxu0 0
      %709 = vmatpush1.bf16.xpose.msra.mxu0 0
      %710 = vmatprep.subr.bf16.mxu0 0
      %711 = vmatpush1.bf16.xpose.msra.mxu0 0
      %712 = vmatprep.subr.bf16.mxu0 0
      %713 = vmatpush1.bf16.xpose.msra.mxu0 0
      %714 = vmatprep.subr.bf16.mxu0 0
      %715 = vmatpush1.bf16.xpose.msra.mxu0 0
      %716 = vmatprep.subr.bf16.mxu0 0
      %717 = vmatpush1.bf16.xpose.msra.mxu0 0
      %718 = vmatprep.mubr.bf16.mxu0 0
      %719 = vmatmul.mubr.bf16.gmra.mrb[0].mxu0 %v681
      %v720 = vpop.f32.mrb[0].mxu0
      %v721 = vadd.f32 0.0, %v720
      %v722 = vpop.f32.mrb[0].mxu0
      %v723 = vpop.f32.mrb[0].mxu0
      %v724 = vpop.f32.mrb[0].mxu0
      %725 = vdwg.mxu0
      %v726 = vsel %vm348, %v721, -inf
      %727 = vmax.xlane.f32.xlu0 %v726
      %v728 = vpop.xlane.xlu0 %727
      %v729 = vsub.f32 %v721, %v728
      %v730 = vmul.f32 %v729, 1.442695
      %v731 = vpow.pop %v730
      %v732 = vsel %vm348, %v731, 0.0
      %733 = vadd.xlane.f32.xlu0 %v732
      %v734 = vpop.xlane.xlu0 %733
      %v735 = vrcp.pop %v734
      %v736 = vmul.f32 %v731, %v735
      %v737 = vpack.c.bf16 %v736, %v736
      %738 = vrot.lane.b32.xlu0 %v344, 40
      %v739 = vpop.permute.xlu0 %738
      %v741 = vsel %vm348, %v737, 0
      %v744 = vsel %vm412, %v739, 0
      %746 = vmatprep.subr.bf16.mxu0 0
      %747 = vmatpush1.bf16.msra.mxu0 %v744
      %748 = vmatprep.subr.bf16.mxu0 0
      %749 = vmatpush1.bf16.msra.mxu0 0
      %750 = vmatprep.subr.bf16.mxu0 0
      %751 = vmatpush1.bf16.msra.mxu0 0
      %752 = vmatprep.subr.bf16.mxu0 0
      %753 = vmatpush1.bf16.msra.mxu0 0
      %754 = vmatprep.subr.bf16.mxu0 0
      %755 = vmatpush1.bf16.msra.mxu0 0
      %756 = vmatprep.subr.bf16.mxu0 0
      %757 = vmatpush1.bf16.msra.mxu0 0
      %758 = vmatprep.subr.bf16.mxu0 0
      %759 = vmatpush1.bf16.msra.mxu0 0
      %760 = vmatprep.subr.bf16.mxu0 0
      %761 = vmatpush1.bf16.msra.mxu0 0
      %762 = vmatprep.subr.bf16.mxu0 0
      %763 = vmatpush1.bf16.msra.mxu0 0
      %764 = vmatprep.subr.bf16.mxu0 0
      %765 = vmatpush1.bf16.msra.mxu0 0
      %766 = vmatprep.subr.bf16.mxu0 0
      %767 = vmatpush1.bf16.msra.mxu0 0
      %768 = vmatprep.subr.bf16.mxu0 0
      %769 = vmatpush1.bf16.msra.mxu0 0
      %770 = vmatprep.subr.bf16.mxu0 0
      %771 = vmatpush1.bf16.msra.mxu0 0
      %772 = vmatprep.subr.bf16.mxu0 0
      %773 = vmatpush1.bf16.msra.mxu0 0
      %774 = vmatprep.subr.bf16.mxu0 0
      %775 = vmatpush1.bf16.msra.mxu0 0
      %776 = vmatprep.subr.bf16.mxu0 0
      %777 = vmatpush1.bf16.msra.mxu0 0
      %778 = vmatprep.mubr.bf16.mxu0 0
      %779 = vmatmul.mubr.bf16.gmra.mrb[0].mxu0 %v741
      %v780 = vpop.f32.mrb[0].mxu0
      %v781 = vadd.f32 0.0, %v780
      %v782 = vpop.f32.mrb[0].mxu0
      %v783 = vpop.f32.mrb[0].mxu0
      %v784 = vpop.f32.mrb[0].mxu0
      %785 = vdwg.mxu0
      %787 = vrot.lane.b32.xlu0 %v561, 8
      %v788 = vpop.permute.xlu0 %787
      %791 = vrot.lane.b32.xlu0 %v671, 16
      %v792 = vpop.permute.xlu0 %791
      %795 = vrot.lane.b32.xlu0 %v781, 24
      %v796 = vpop.permute.xlu0 %795
      %v798 = vsel %vm348, %v451, %v788
      %vm799 = vcmask 130048
      %v800 = vsel %vm799, %v798, %v792
      %vm801 = vcmask 195584
      %v802 = vsel %vm801, %v800, %v796
      %v803 = vld [vmem:[%s3] sm:$0xf]
      %v804 = vld [vmem:[%s3 + $0x4] sm:$0xf]
      %v805 = vld [vmem:[%s3 + $0x8] sm:$0xf]
      %v806 = vld [vmem:[%s3 + $0xc] sm:$0xf]
      %v807 = vpack.c.bf16 %v802, %v802
      %v812 = vunpack.c.l.b16 %v803
      %v813 = vunpack.c.l.b16 %v804
      %v814 = vunpack.c.l.b16 %v805
      %v815 = vunpack.c.l.b16 %v806
      %v816 = vpack.c.b16 %v813, %v812
      %v817 = vpack.c.b16 %v815, %v814
      %v821 = vsel %vm300, %v807, 0
      %823 = vmatprep.subr.bf16.mxu0 0
      %824 = vmatpush1.bf16.msra.mxu0 %v816
      %825 = vmatprep.subr.bf16.mxu0 0
      %826 = vmatpush1.bf16.msra.mxu0 %v817
      %827 = vmatprep.subr.bf16.mxu0 0
      %828 = vmatpush1.bf16.msra.mxu0 0
      %829 = vmatprep.subr.bf16.mxu0 0
      %830 = vmatpush1.bf16.msra.mxu0 0
      %831 = vmatprep.subr.bf16.mxu0 0
      %832 = vmatpush1.bf16.msra.mxu0 0
      %833 = vmatprep.subr.bf16.mxu0 0
      %834 = vmatpush1.bf16.msra.mxu0 0
      %835 = vmatprep.subr.bf16.mxu0 0
      %836 = vmatpush1.bf16.msra.mxu0 0
      %837 = vmatprep.subr.bf16.mxu0 0
      %838 = vmatpush1.bf16.msra.mxu0 0
      %839 = vmatprep.subr.bf16.mxu0 0
      %840 = vmatpush1.bf16.msra.mxu0 0
      %841 = vmatprep.subr.bf16.mxu0 0
      %842 = vmatpush1.bf16.msra.mxu0 0
      %843 = vmatprep.subr.bf16.mxu0 0
      %844 = vmatpush1.bf16.msra.mxu0 0
      %845 = vmatprep.subr.bf16.mxu0 0
      %846 = vmatpush1.bf16.msra.mxu0 0
      %847 = vmatprep.subr.bf16.mxu0 0
      %848 = vmatpush1.bf16.msra.mxu0 0
      %849 = vmatprep.subr.bf16.mxu0 0
      %850 = vmatpush1.bf16.msra.mxu0 0
      %851 = vmatprep.subr.bf16.mxu0 0
      %852 = vmatpush1.bf16.msra.mxu0 0
      %853 = vmatprep.subr.bf16.mxu0 0
      %854 = vmatpush1.bf16.msra.mxu0 0
      %855 = vmatprep.mubr.bf16.mxu0 0
      %856 = vmatmul.mubr.bf16.gmra.mrb[0].mxu0 %v821
      %v857 = vpop.f32.mrb[0].mxu0
      %v858 = vadd.f32 0.0, %v857
      %v859 = vpop.f32.mrb[0].mxu0
      %v860 = vpop.f32.mrb[0].mxu0
      %v861 = vpop.f32.mrb[0].mxu0
      %862 = vdwg.mxu0
      %v863 = vadd.f32 %v275, %v858
      %v864 = vld [vmem:[%s4] sm:$0x1]
      %v866 = vlaneseq
      %v867 = vshrl.u32 %v866, 7
      %v868 = vsub.s32 0, %v867
      %v869 = vrot.slane %v864, %v868
      %v871 = vadd.f32 %v863, %v869
      %v872 = vld [vmem:[%s5] sm:$0x1]
      %v873 = vld [vmem:[%s6] sm:$0x1]
      %v874 = vsel %vm300, %v871, 0.0
      %875 = vadd.xlane.f32.xlu0 %v874
      %v876 = vpop.xlane.xlu0 %875
      %v877 = vrcp.pop 32.0
      %v878 = vmul.f32 %v876, %v877
      %v879 = vsub.f32 %v871, %v878
      %v880 = vmul.f32 %v879, %v879
      %v881 = vsel %vm300, %v880, 0.0
      %882 = vadd.xlane.f32.xlu0 %v881
      %v883 = vpop.xlane.xlu0 %882
      %v884 = vmul.f32 %v883, %v877
      %v885 = vadd.f32 %v884, 1e-05
      %v886 = vrsqrt.pop %v885
      %v887 = vmul.f32 %v879, %v886
      %v889 = vlaneseq
      %v890 = vshrl.u32 %v889, 7
      %v891 = vsub.s32 0, %v890
      %v892 = vrot.slane %v872, %v891
      %v894 = vmul.f32 %v887, %v892
      %v896 = vlaneseq
      %v897 = vshrl.u32 %v896, 7
      %v898 = vsub.s32 0, %v897
      %v899 = vrot.slane %v873, %v898
      %v901 = vadd.f32 %v894, %v899
      %902 = vst.msk [vmem:[%s273] sm:$0xff] %vm300, %v901
      %p903 = scmp.lt.s32.totalorder %s18, 1
      %s904 = scalar_select %p903, %s18, 1
      %s905 = smul.addr %s904, 8
      %s906 = scalar_lea.vmem %s7, %s905
      // Predicated region
      $region49: #{transformer_model_forward.19} parent=47 // pred_check
        %p907 = pneg %p188
      $region50: #{transformer_model_forward.19} parent=47 // pred_check_branch
        %909 = sbr.rel (%p907) target = $region52
      $region51: #{transformer_model_forward.19} parent=47 // pred_region
        _
      $region52: #{transformer_model_forward.19} parent=47 // pred_fallthru
        _
    $region48: #{transformer_model_forward.19} parent=5 // pred_fallthru
      _
    %p910 = scmp.le.s32.totalorder 2, %s13
    // Predicated region
    $region53: #{transformer_model_forward.19} parent=5 // pred_check
      %p911 = pneg %p910
    $region54: #{transformer_model_forward.19} parent=5 // pred_check_branch
      %913 = sbr.rel (%p911) target = $region56
    $region55: #{transformer_model_forward.19} parent=5 // pred_region
      %s914 = ssub.s32 %s13, 2
      // Predicated region
      $region57: #{transformer_model_forward.19} parent=55 // pred_check
        %p915 = pneg %p194
      $region58: #{transformer_model_forward.19} parent=55 // pred_check_branch
        %917 = sbr.rel (%p915) target = $region60
      $region59: #{transformer_model_forward.19} parent=55 // pred_region
        %p918 = scmp.lt.s32.totalorder %s19, 1
        %s919 = scalar_select %p918, %s19, 1
        %s920 = smul.addr %s919, 8
        %s921 = scalar_lea.vmem %s7, %s920
      $region60: #{transformer_model_forward.19} parent=55 // pred_fallthru
        _
    $region56: #{transformer_model_forward.19} parent=5 // pred_fallthru
      _
  $region6: #{transformer_model_forward.19} parent=0 // loop_footer
    %s17 = sadd.s32 1, %s13
  $region7: #{transformer_model_forward.19} parent=0 // loop_footer_branch
    %12 = sbr.rel target = $region3
  $region8: #{transformer_model_forward.19} parent=0 // loop_exit
    _

// kernel: transformer_model_forward.25
$region0: #{transformer_model_forward.25}
  #allocation0 [shape = 'u32[]', space=smem, size = 0x4, offset = 0x4, fixed_abs, tag = 'smem constant byte address 0x4 - core index']
  #allocation1 [shape = 'u32[144,128]{1,0:T(1,128)}', space=vmem, size = 0x12000, scoped, tag = 'internal scratch']
  %s0 = inlined_call_operand.vmem [shape: f32[16,32], index: 0, kind: input, shape index: {}]
  %s1 = inlined_call_operand.vmem [shape: f32[1,32], index: 1, kind: input, shape index: {}]
  %s2 = inlined_call_operand.vmem [shape: f32[1,32], index: 2, kind: input, shape index: {}]
  %s3 = inlined_call_operand.vmem [shape: bf16[32,8], index: 3, kind: input, shape index: {}]
  %s4 = inlined_call_operand.vmem [shape: f32[1,8], index: 4, kind: input, shape index: {}]
  %s5 = inlined_call_operand.vmem [shape: f32[16,8], index: 5, kind: output, shape index: {}]
  %s6 = sld [smem:[#allocation0]]
  $region53: #{transformer_model_forward.25} parent=0
    _
  %s8 = ssub.s32 1, %s6
  %s9 = scalar_select 0, %s8, %s6
  loop: start=0, step=1, limit=4
  $region2: #{transformer_model_forward.25} parent=0 // loop_pre_header
    _
  $region3: #{transformer_model_forward.25} parent=0 // loop_header
    %s11 = sphi 0, %s15
    %p12 = scmp.ge.s32.totalorder %s11, 4
    %s21 = sphi 0, %s23
    %s24 = sphi 0, %s21
    %s25 = sphi 0, %s24
    %s41 = sphi 0, %s25
    %s45 = sphi 0, %s45
    %s47 = sphi 0, %s45
    %s48 = sphi 0, %s47
    %s62 = sphi 0, %s48
    %s66 = sphi 0, %s66
    %s68 = sphi 0, %s66
    %s69 = sphi 0, %s68
    %s83 = sphi 0, %s69
    %s87 = sphi 0, %s87
    %s89 = sphi 0, %s87
    %s90 = sphi 0, %s89
    %s104 = sphi 0, %s90
    %s108 = sphi 0, %s108
    %s110 = sphi 0, %s108
    %s111 = sphi 0, %s110
    %s125 = sphi 0, %s111
    %s131 = sphi 0, %s133
    %s134 = sphi 0, %s131
    %s135 = sphi 0, %s134
    %s151 = sphi 0, %s135
  $region4: #{transformer_model_forward.25} parent=0 // loop_header_branch
    %14 = sbr.rel (%p12) target = $region8
  $region5: #{transformer_model_forward.25} parent=0 // loop_body
    %s16 = ssub.s32 %s11, 1
    %s17 = ssub.s32 %s11, 2
    %s18 = sadd.s32 %s11, 1
    %s19 = ssub.s32 %s11, %s18
    %p20 = scmp.eq.s32.totalorder %s19, 0
    %s22 = sadd.s32 %s21, 1
    %s23 = scalar_select %p20, %s21, %s22
    %p26 = pneg %p20
    %p27 = scmp.eq.s32.totalorder %s11, 1
    %p28 = por %p26, %p27
    %p29 = scmp.ne.s32.totalorder %s21, %s24
    %p30 = scmp.eq.s32.totalorder %s11, 0
    %p31 = por %p29, %p30
    %p32 = scmp.ne.s32.totalorder %s21, %s24
    %p33 = scmp.eq.s32.totalorder %s16, 1
    %p34 = por %p32, %p33
    %p35 = scmp.ne.s32.totalorder %s24, %s25
    %p36 = scmp.eq.s32.totalorder %s16, 0
    %p37 = por %p35, %p36
    %p38 = scmp.ne.s32.totalorder %s24, %s25
    %p39 = scmp.eq.s32.totalorder %s17, 1
    %p40 = por %p38, %p39
    %p42 = scmp.ne.s32.totalorder %s25, %s41
    %p43 = scmp.eq.s32.totalorder %s17, 0
    %p44 = por %p42, %p43
    %s46 = sadd.s32 %s45, 1
    %p49 = scmp.eq.s32.totalorder %s11, 1
    %p50 = scmp.ne.s32.totalorder %s45, %s47
    %p51 = scmp.eq.s32.totalorder %s11, 0
    %p52 = por %p50, %p51
    %p53 = scmp.ne.s32.totalorder %s45, %s47
    %p54 = scmp.eq.s32.totalorder %s16, 1
    %p55 = por %p53, %p54
    %p56 = scmp.ne.s32.totalorder %s47, %s48
    %p57 = scmp.eq.s32.totalorder %s16, 0
    %p58 = por %p56, %p57
    %p59 = scmp.ne.s32.totalorder %s47, %s48
    %p60 = scmp.eq.s32.totalorder %s17, 1
    %p61 = por %p59, %p60
    %p63 = scmp.ne.s32.totalorder %s48, %s62
    %p64 = scmp.eq.s32.totalorder %s17, 0
    %p65 = por %p63, %p64
    %s67 = sadd.s32 %s66, 1
    %p70 = scmp.eq.s32.totalorder %s11, 1
    %p71 = scmp.ne.s32.totalorder %s66, %s68
    %p72 = scmp.eq.s32.totalorder %s11, 0
    %p73 = por %p71, %p72
    %p74 = scmp.ne.s32.totalorder %s66, %s68
    %p75 = scmp.eq.s32.totalorder %s16, 1
    %p76 = por %p74, %p75
    %p77 = scmp.ne.s32.totalorder %s68, %s69
    %p78 = scmp.eq.s32.totalorder %s16, 0
    %p79 = por %p77, %p78
    %p80 = scmp.ne.s32.totalorder %s68, %s69
    %p81 = scmp.eq.s32.totalorder %s17, 1
    %p82 = por %p80, %p81
    %p84 = scmp.ne.s32.totalorder %s69, %s83
    %p85 = scmp.eq.s32.totalorder %s17, 0
    %p86 = por %p84, %p85
    %s88 = sadd.s32 %s87, 1
    %p91 = scmp.eq.s32.totalorder %s11, 1
    %p92 = scmp.ne.s32.totalorder %s87, %s89
    %p93 = scmp.eq.s32.totalorder %s11, 0
    %p94 = por %p92, %p93
    %p95 = scmp.ne.s32.totalorder %s87, %s89
    %p96 = scmp.eq.s32.totalorder %s16, 1
    %p97 = por %p95, %p96
    %p98 = scmp.ne.s32.totalorder %s89, %s90
    %p99 = scmp.eq.s32.totalorder %s16, 0
    %p100 = por %p98, %p99
    %p101 = scmp.ne.s32.totalorder %s89, %s90
    %p102 = scmp.eq.s32.totalorder %s17, 1
    %p103 = por %p101, %p102
    %p105 = scmp.ne.s32.totalorder %s90, %s104
    %p106 = scmp.eq.s32.totalorder %s17, 0
    %p107 = por %p105, %p106
    %s109 = sadd.s32 %s108, 1
    %p112 = scmp.eq.s32.totalorder %s11, 1
    %p113 = scmp.ne.s32.totalorder %s108, %s110
    %p114 = scmp.eq.s32.totalorder %s11, 0
    %p115 = por %p113, %p114
    %p116 = scmp.ne.s32.totalorder %s108, %s110
    %p117 = scmp.eq.s32.totalorder %s16, 1
    %p118 = por %p116, %p117
    %p119 = scmp.ne.s32.totalorder %s110, %s111
    %p120 = scmp.eq.s32.totalorder %s16, 0
    %p121 = por %p119, %p120
    %p122 = scmp.ne.s32.totalorder %s110, %s111
    %p123 = scmp.eq.s32.totalorder %s17, 1
    %p124 = por %p122, %p123
    %p126 = scmp.ne.s32.totalorder %s111, %s125
    %p127 = scmp.eq.s32.totalorder %s17, 0
    %p128 = por %p126, %p127
    %s129 = ssub.s32 %s11, %s18
    %p130 = scmp.eq.s32.totalorder %s129, 0
    %s132 = sadd.s32 %s131, 1
    %s133 = scalar_select %p130, %s131, %s132
    %p136 = pneg %p130
    %p137 = scmp.eq.s32.totalorder %s11, 1
    %p138 = por %p136, %p137
    %p139 = scmp.ne.s32.totalorder %s131, %s134
    %p140 = scmp.eq.s32.totalorder %s11, 0
    %p141 = por %p139, %p140
    %p142 = scmp.ne.s32.totalorder %s131, %s134
    %p143 = scmp.eq.s32.totalorder %s16, 1
    %p144 = por %p142, %p143
    %p145 = scmp.ne.s32.totalorder %s134, %s135
    %p146 = scmp.eq.s32.totalorder %s16, 0
    %p147 = por %p145, %p146
    %p148 = scmp.ne.s32.totalorder %s134, %s135
    %p149 = scmp.eq.s32.totalorder %s17, 1
    %p150 = por %p148, %p149
    %p152 = scmp.ne.s32.totalorder %s135, %s151
    %p153 = scmp.eq.s32.totalorder %s17, 0
    %p154 = por %p152, %p153
    %p155 = scmp.le.s32.totalorder 1, %s11
    %p156 = scmp.lt.s32.totalorder %s11, 3
    %p157 = pnand %p155, %p156
    %p158 = pneg %p157
    // Predicated region
    $region9: #{transformer_model_forward.25} parent=5 // pred_check
      _
    $region10: #{transformer_model_forward.25} parent=5 // pred_check_branch
      %160 = sbr.rel (%p157) target = $region12
    $region11: #{transformer_model_forward.25} parent=5 // pred_region
      %s161 = ssub.s32 %s11, 1
      // Predicated region
      $region13: #{transformer_model_forward.25} parent=11 // pred_check
        %p162 = pneg %p58
      $region14: #{transformer_model_forward.25} parent=11 // pred_check_branch
        %164 = sbr.rel (%p162) target = $region16
      $region15: #{transformer_model_forward.25} parent=11 // pred_region
        _
      $region16: #{transformer_model_forward.25} parent=11 // pred_fallthru
        _
      // Predicated region
      $region17: #{transformer_model_forward.25} parent=11 // pred_check
        %p165 = pneg %p79
      $region18: #{transformer_model_forward.25} parent=11 // pred_check_branch
        %167 = sbr.rel (%p165) target = $region20
      $region19: #{transformer_model_forward.25} parent=11 // pred_region
        _
      $region20: #{transformer_model_forward.25} parent=11 // pred_fallthru
        _
      // Predicated region
      $region21: #{transformer_model_forward.25} parent=11 // pred_check
        %p168 = pneg %p100
      $region22: #{transformer_model_forward.25} parent=11 // pred_check_branch
        %170 = sbr.rel (%p168) target = $region24
      $region23: #{transformer_model_forward.25} parent=11 // pred_region
        _
      $region24: #{transformer_model_forward.25} parent=11 // pred_fallthru
        _
      // Predicated region
      $region25: #{transformer_model_forward.25} parent=11 // pred_check
        %p171 = pneg %p121
      $region26: #{transformer_model_forward.25} parent=11 // pred_check_branch
        %173 = sbr.rel (%p171) target = $region28
      $region27: #{transformer_model_forward.25} parent=11 // pred_region
        _
      $region28: #{transformer_model_forward.25} parent=11 // pred_fallthru
        _
    $region12: #{transformer_model_forward.25} parent=5 // pred_fallthru
      _
    %p174 = scmp.lt.s32.totalorder %s11, 2
    // Predicated region
    $region29: #{transformer_model_forward.25} parent=5 // pred_check
      %p175 = pneg %p174
    $region30: #{transformer_model_forward.25} parent=5 // pred_check_branch
      %177 = sbr.rel (%p175) target = $region32
    $region31: #{transformer_model_forward.25} parent=5 // pred_region
      // Predicated region
      $region33: #{transformer_model_forward.25} parent=31 // pred_check
        %p178 = pneg %p31
      $region34: #{transformer_model_forward.25} parent=31 // pred_check_branch
        %180 = sbr.rel (%p178) target = $region36
      $region35: #{transformer_model_forward.25} parent=31 // pred_region
        %p181 = scmp.lt.s32.totalorder %s11, 1
        %s182 = scalar_select %p181, %s11, 1
        %s183 = smul.addr %s182, 8
        %s184 = scalar_lea.vmem %s0, %s183
      $region36: #{transformer_model_forward.25} parent=31 // pred_fallthru
        _
    $region32: #{transformer_model_forward.25} parent=5 // pred_fallthru
      _
    %p185 = scmp.le.s32.totalorder 1, %s11
    %p186 = scmp.lt.s32.totalorder %s11, 3
    %p187 = pnand %p185, %p186
    %p188 = pneg %p187
    // Predicated region
    $region37: #{transformer_model_forward.25} parent=5 // pred_check
      _
    $region38: #{transformer_model_forward.25} parent=5 // pred_check_branch
      %190 = sbr.rel (%p187) target = $region40
    $region39: #{transformer_model_forward.25} parent=5 // pred_region
      %s191 = ssub.s32 %s11, 1
      %p192 = scmp.lt.s32.totalorder %s16, 1
      %s193 = scalar_select %p192, %s16, 1
      %s194 = smul.addr %s193, 8
      %s195 = scalar_lea.vmem %s0, %s194
      %p196 = pneg %p37
      %p197 = pneg %p34
      %p198 = pneg %p58
      %p199 = pneg %p55
      %p200 = pneg %p79
      %p201 = pneg %p76
      %p202 = pneg %p100
      %p203 = pneg %p97
      %p204 = pneg %p121
      %p205 = pneg %p118
      %p206 = pneg %p147
      %p207 = pneg %p144
      %p208 = scmp.lt.s32.totalorder %s16, 1
      %s209 = scalar_select %p208, %s16, 1
      %s210 = smul.addr %s209, 8
      %s211 = scalar_lea.vmem %s5, %s210
      %p212 = scmp.lt.s32.totalorder %s16, 1
      %s213 = scalar_select %p212, %s16, 1
      %s214 = smul.addr %s213, 8
      %s215 = scalar_lea.vmem %s0, %s214
      %p216 = scmp.lt.s32.totalorder %s16, 1
      %s217 = scalar_select %p216, %s16, 1
      %s218 = smul.addr %s217, 8
      %s219 = scalar_lea.vmem %s5, %s218
      %v221 = vld [vmem:[%s215] sm:$0xff]
      %v222 = vld [vmem:[%s1] sm:$0x1]
      %v223 = vld [vmem:[%s2] sm:$0x1]
      %vm224 = vcmask 261120
      %v225 = vsel %vm224, %v221, 0.0
      %226 = vadd.xlane.f32.xlu0 %v225
      %v227 = vpop.xlane.xlu0 %226
      %v228 = vrcp.pop 32.0
      %v229 = vmul.f32 %v227, %v228
      %v230 = vsub.f32 %v221, %v229
      %v231 = vmul.f32 %v230, %v230
      %v232 = vsel %vm224, %v231, 0.0
      %233 = vadd.xlane.f32.xlu0 %v232
      %v234 = vpop.xlane.xlu0 %233
      %v235 = vmul.f32 %v234, %v228
      %v236 = vadd.f32 %v235, 1e-05
      %v237 = vrsqrt.pop %v236
      %v238 = vmul.f32 %v230, %v237
      %v240 = vlaneseq
      %v241 = vshrl.u32 %v240, 7
      %v242 = vsub.s32 0, %v241
      %v243 = vrot.slane %v222, %v242
      %v245 = vmul.f32 %v238, %v243
      %v247 = vlaneseq
      %v248 = vshrl.u32 %v247, 7
      %v249 = vsub.s32 0, %v248
      %v250 = vrot.slane %v223, %v249
      %v252 = vadd.f32 %v245, %v250
      %v253 = vld [vmem:[%s3] sm:$0xf]
      %v254 = vld [vmem:[%s3 + $0x4] sm:$0xf]
      %v255 = vld [vmem:[%s3 + $0x8] sm:$0xf]
      %v256 = vld [vmem:[%s3 + $0xc] sm:$0xf]
      %v257 = vpack.c.bf16 %v252, %v252
      %v258 = vld [vmem:[%s4] sm:$0x1]
      %v260 = vlaneseq
      %v261 = vshrl.u32 %v260, 7
      %v262 = vsub.s32 0, %v261
      %v263 = vrot.slane %v258, %v262
      %v269 = vunpack.c.l.b16 %v253
      %v270 = vunpack.c.l.b16 %v254
      %v271 = vunpack.c.l.b16 %v255
      %v272 = vunpack.c.l.b16 %v256
      %v273 = vpack.c.b16 %v270, %v269
      %v274 = vpack.c.b16 %v272, %v271
      %v278 = vsel %vm224, %v257, 0
      %280 = vmatprep.subr.bf16.mxu0 0
      %281 = vmatpush1.bf16.msra.mxu0 %v273
      %282 = vmatprep.subr.bf16.mxu0 0
      %283 = vmatpush1.bf16.msra.mxu0 %v274
      %284 = vmatprep.subr.bf16.mxu0 0
      %285 = vmatpush1.bf16.msra.mxu0 0
      %286 = vmatprep.subr.bf16.mxu0 0
      %287 = vmatpush1.bf16.msra.mxu0 0
      %288 = vmatprep.subr.bf16.mxu0 0
      %289 = vmatpush1.bf16.msra.mxu0 0
      %290 = vmatprep.subr.bf16.mxu0 0
      %291 = vmatpush1.bf16.msra.mxu0 0
      %292 = vmatprep.subr.bf16.mxu0 0
      %293 = vmatpush1.bf16.msra.mxu0 0
      %294 = vmatprep.subr.bf16.mxu0 0
      %295 = vmatpush1.bf16.msra.mxu0 0
      %296 = vmatprep.subr.bf16.mxu0 0
      %297 = vmatpush1.bf16.msra.mxu0 0
      %298 = vmatprep.subr.bf16.mxu0 0
      %299 = vmatpush1.bf16.msra.mxu0 0
      %300 = vmatprep.subr.bf16.mxu0 0
      %301 = vmatpush1.bf16.msra.mxu0 0
      %302 = vmatprep.subr.bf16.mxu0 0
      %303 = vmatpush1.bf16.msra.mxu0 0
      %304 = vmatprep.subr.bf16.mxu0 0
      %305 = vmatpush1.bf16.msra.mxu0 0
      %306 = vmatprep.subr.bf16.mxu0 0
      %307 = vmatpush1.bf16.msra.mxu0 0
      %308 = vmatprep.subr.bf16.mxu0 0
      %309 = vmatpush1.bf16.msra.mxu0 0
      %310 = vmatprep.subr.bf16.mxu0 0
      %311 = vmatpush1.bf16.msra.mxu0 0
      %312 = vmatprep.mubr.bf16.mxu0 0
      %313 = vmatmul.mubr.bf16.gmra.mrb[0].mxu0 %v278
      %v314 = vpop.f32.mrb[0].mxu0
      %v315 = vadd.f32 %v263, %v314
      %v316 = vpop.f32.mrb[0].mxu0
      %v317 = vpop.f32.mrb[0].mxu0
      %v318 = vpop.f32.mrb[0].mxu0
      %319 = vdwg.mxu0
      %vm320 = vcmask 64512
      %321 = vst.msk [vmem:[%s219] sm:$0xff] %vm320, %v315
      %p322 = scmp.lt.s32.totalorder %s16, 1
      %s323 = scalar_select %p322, %s16, 1
      %s324 = smul.addr %s323, 8
      %s325 = scalar_lea.vmem %s5, %s324
      // Predicated region
      $region41: #{transformer_model_forward.25} parent=39 // pred_check
        %p326 = pneg %p144
      $region42: #{transformer_model_forward.25} parent=39 // pred_check_branch
        %328 = sbr.rel (%p326) target = $region44
      $region43: #{transformer_model_forward.25} parent=39 // pred_region
        _
      $region44: #{transformer_model_forward.25} parent=39 // pred_fallthru
        _
    $region40: #{transformer_model_forward.25} parent=5 // pred_fallthru
      _
    %p329 = scmp.le.s32.totalorder 2, %s11
    // Predicated region
    $region45: #{transformer_model_forward.25} parent=5 // pred_check
      %p330 = pneg %p329
    $region46: #{transformer_model_forward.25} parent=5 // pred_check_branch
      %332 = sbr.rel (%p330) target = $region48
    $region47: #{transformer_model_forward.25} parent=5 // pred_region
      %s333 = ssub.s32 %s11, 2
      // Predicated region
      $region49: #{transformer_model_forward.25} parent=47 // pred_check
        %p334 = pneg %p150
      $region50: #{transformer_model_forward.25} parent=47 // pred_check_branch
        %336 = sbr.rel (%p334) target = $region52
      $region51: #{transformer_model_forward.25} parent=47 // pred_region
        %p337 = scmp.lt.s32.totalorder %s17, 1
        %s338 = scalar_select %p337, %s17, 1
        %s339 = smul.addr %s338, 8
        %s340 = scalar_lea.vmem %s5, %s339
      $region52: #{transformer_model_forward.25} parent=47 // pred_fallthru
        _
    $region48: #{transformer_model_forward.25} parent=5 // pred_fallthru
      _
  $region6: #{transformer_model_forward.25} parent=0 // loop_footer
    %s15 = sadd.s32 1, %s11
  $region7: #{transformer_model_forward.25} parent=0 // loop_footer_branch
    %10 = sbr.rel target = $region3
  $region8: #{transformer_model_forward.25} parent=0 // loop_exit
    _

// kernel: transformer_model_forward.20
$region0: #{transformer_model_forward.20}
  #allocation0 [shape = 'u32[]', space=smem, size = 0x4, offset = 0x4, fixed_abs, tag = 'smem constant byte address 0x4 - core index']
  #allocation1 [shape = 'u32[144,128]{1,0:T(1,128)}', space=vmem, size = 0x12000, scoped, tag = 'internal scratch']
  %s0 = inlined_call_operand.vmem [shape: f32[2,8,32], index: 0, kind: input, shape index: {}]
  %s1 = inlined_call_operand.vmem [shape: f32[2,8,32], index: 1, kind: input, shape index: {}]
  %s2 = inlined_call_operand.vmem [shape: bf16[32,32], index: 2, kind: input, shape index: {}]
  %s3 = inlined_call_operand.vmem [shape: f32[1,32], index: 3, kind: input, shape index: {}]
  %s4 = inlined_call_operand.vmem [shape: bf16[32,64], index: 4, kind: input, shape index: {}]
  %s5 = inlined_call_operand.vmem [shape: f32[1,64], index: 5, kind: input, shape index: {}]
  %s6 = inlined_call_operand.vmem [shape: bf16[32,32], index: 6, kind: input, shape index: {}]
  %s7 = inlined_call_operand.vmem [shape: f32[1,32], index: 7, kind: input, shape index: {}]
  %s8 = inlined_call_operand.vmem [shape: f32[1,32], index: 8, kind: input, shape index: {}]
  %s9 = inlined_call_operand.vmem [shape: f32[1,32], index: 9, kind: input, shape index: {}]
  %s10 = inlined_call_operand.vmem [shape: f32[2,8,32], index: 10, kind: output, shape index: {}]
  %s11 = sld [smem:[#allocation0]]
  $region73: #{transformer_model_forward.20} parent=0
    _
  %s13 = ssub.s32 1, %s11
  %s14 = scalar_select 0, %s13, %s11
  loop: start=0, step=1, limit=4
  $region2: #{transformer_model_forward.20} parent=0 // loop_pre_header
    _
  $region3: #{transformer_model_forward.20} parent=0 // loop_header
    %s16 = sphi 0, %s20
    %p17 = scmp.ge.s32.totalorder %s16, 4
    %s26 = sphi 0, %s28
    %s29 = sphi 0, %s26
    %s30 = sphi 0, %s29
    %s46 = sphi 0, %s30
    %s52 = sphi 0, %s54
    %s55 = sphi 0, %s52
    %s56 = sphi 0, %s55
    %s72 = sphi 0, %s56
    %s76 = sphi 0, %s76
    %s78 = sphi 0, %s76
    %s79 = sphi 0, %s78
    %s93 = sphi 0, %s79
    %s97 = sphi 0, %s97
    %s99 = sphi 0, %s97
    %s100 = sphi 0, %s99
    %s114 = sphi 0, %s100
    %s118 = sphi 0, %s118
    %s120 = sphi 0, %s118
    %s121 = sphi 0, %s120
    %s135 = sphi 0, %s121
    %s139 = sphi 0, %s139
    %s141 = sphi 0, %s139
    %s142 = sphi 0, %s141
    %s156 = sphi 0, %s142
    %s160 = sphi 0, %s160
    %s162 = sphi 0, %s160
    %s163 = sphi 0, %s162
    %s177 = sphi 0, %s163
    %s181 = sphi 0, %s181
    %s183 = sphi 0, %s181
    %s184 = sphi 0, %s183
    %s198 = sphi 0, %s184
    %s202 = sphi 0, %s202
    %s204 = sphi 0, %s202
    %s205 = sphi 0, %s204
    %s219 = sphi 0, %s205
    %s223 = sphi 0, %s223
    %s225 = sphi 0, %s223
    %s226 = sphi 0, %s225
    %s240 = sphi 0, %s226
    %s246 = sphi 0, %s248
    %s249 = sphi 0, %s246
    %s250 = sphi 0, %s249
    %s266 = sphi 0, %s250
  $region4: #{transformer_model_forward.20} parent=0 // loop_header_branch
    %19 = sbr.rel (%p17) target = $region8
  $region5: #{transformer_model_forward.20} parent=0 // loop_body
    %s21 = ssub.s32 %s16, 1
    %s22 = ssub.s32 %s16, 2
    %s23 = sadd.s32 %s16, 1
    %s24 = ssub.s32 %s16, %s23
    %p25 = scmp.eq.s32.totalorder %s24, 0
    %s27 = sadd.s32 %s26, 1
    %s28 = scalar_select %p25, %s26, %s27
    %p31 = pneg %p25
    %p32 = scmp.eq.s32.totalorder %s16, 1
    %p33 = por %p31, %p32
    %p34 = scmp.ne.s32.totalorder %s26, %s29
    %p35 = scmp.eq.s32.totalorder %s16, 0
    %p36 = por %p34, %p35
    %p37 = scmp.ne.s32.totalorder %s26, %s29
    %p38 = scmp.eq.s32.totalorder %s21, 1
    %p39 = por %p37, %p38
    %p40 = scmp.ne.s32.totalorder %s29, %s30
    %p41 = scmp.eq.s32.totalorder %s21, 0
    %p42 = por %p40, %p41
    %p43 = scmp.ne.s32.totalorder %s29, %s30
    %p44 = scmp.eq.s32.totalorder %s22, 1
    %p45 = por %p43, %p44
    %p47 = scmp.ne.s32.totalorder %s30, %s46
    %p48 = scmp.eq.s32.totalorder %s22, 0
    %p49 = por %p47, %p48
    %s50 = ssub.s32 %s16, %s23
    %p51 = scmp.eq.s32.totalorder %s50, 0
    %s53 = sadd.s32 %s52, 1
    %s54 = scalar_select %p51, %s52, %s53
    %p57 = pneg %p51
    %p58 = scmp.eq.s32.totalorder %s16, 1
    %p59 = por %p57, %p58
    %p60 = scmp.ne.s32.totalorder %s52, %s55
    %p61 = scmp.eq.s32.totalorder %s16, 0
    %p62 = por %p60, %p61
    %p63 = scmp.ne.s32.totalorder %s52, %s55
    %p64 = scmp.eq.s32.totalorder %s21, 1
    %p65 = por %p63, %p64
    %p66 = scmp.ne.s32.totalorder %s55, %s56
    %p67 = scmp.eq.s32.totalorder %s21, 0
    %p68 = por %p66, %p67
    %p69 = scmp.ne.s32.totalorder %s55, %s56
    %p70 = scmp.eq.s32.totalorder %s22, 1
    %p71 = por %p69, %p70
    %p73 = scmp.ne.s32.totalorder %s56, %s72
    %p74 = scmp.eq.s32.totalorder %s22, 0
    %p75 = por %p73, %p74
    %s77 = sadd.s32 %s76, 1
    %p80 = scmp.eq.s32.totalorder %s16, 1
    %p81 = scmp.ne.s32.totalorder %s76, %s78
    %p82 = scmp.eq.s32.totalorder %s16, 0
    %p83 = por %p81, %p82
    %p84 = scmp.ne.s32.totalorder %s76, %s78
    %p85 = scmp.eq.s32.totalorder %s21, 1
    %p86 = por %p84, %p85
    %p87 = scmp.ne.s32.totalorder %s78, %s79
    %p88 = scmp.eq.s32.totalorder %s21, 0
    %p89 = por %p87, %p88
    %p90 = scmp.ne.s32.totalorder %s78, %s79
    %p91 = scmp.eq.s32.totalorder %s22, 1
    %p92 = por %p90, %p91
    %p94 = scmp.ne.s32.totalorder %s79, %s93
    %p95 = scmp.eq.s32.totalorder %s22, 0
    %p96 = por %p94, %p95
    %s98 = sadd.s32 %s97, 1
    %p101 = scmp.eq.s32.totalorder %s16, 1
    %p102 = scmp.ne.s32.totalorder %s97, %s99
    %p103 = scmp.eq.s32.totalorder %s16, 0
    %p104 = por %p102, %p103
    %p105 = scmp.ne.s32.totalorder %s97, %s99
    %p106 = scmp.eq.s32.totalorder %s21, 1
    %p107 = por %p105, %p106
    %p108 = scmp.ne.s32.totalorder %s99, %s100
    %p109 = scmp.eq.s32.totalorder %s21, 0
    %p110 = por %p108, %p109
    %p111 = scmp.ne.s32.totalorder %s99, %s100
    %p112 = scmp.eq.s32.totalorder %s22, 1
    %p113 = por %p111, %p112
    %p115 = scmp.ne.s32.totalorder %s100, %s114
    %p116 = scmp.eq.s32.totalorder %s22, 0
    %p117 = por %p115, %p116
    %s119 = sadd.s32 %s118, 1
    %p122 = scmp.eq.s32.totalorder %s16, 1
    %p123 = scmp.ne.s32.totalorder %s118, %s120
    %p124 = scmp.eq.s32.totalorder %s16, 0
    %p125 = por %p123, %p124
    %p126 = scmp.ne.s32.totalorder %s118, %s120
    %p127 = scmp.eq.s32.totalorder %s21, 1
    %p128 = por %p126, %p127
    %p129 = scmp.ne.s32.totalorder %s120, %s121
    %p130 = scmp.eq.s32.totalorder %s21, 0
    %p131 = por %p129, %p130
    %p132 = scmp.ne.s32.totalorder %s120, %s121
    %p133 = scmp.eq.s32.totalorder %s22, 1
    %p134 = por %p132, %p133
    %p136 = scmp.ne.s32.totalorder %s121, %s135
    %p137 = scmp.eq.s32.totalorder %s22, 0
    %p138 = por %p136, %p137
    %s140 = sadd.s32 %s139, 1
    %p143 = scmp.eq.s32.totalorder %s16, 1
    %p144 = scmp.ne.s32.totalorder %s139, %s141
    %p145 = scmp.eq.s32.totalorder %s16, 0
    %p146 = por %p144, %p145
    %p147 = scmp.ne.s32.totalorder %s139, %s141
    %p148 = scmp.eq.s32.totalorder %s21, 1
    %p149 = por %p147, %p148
    %p150 = scmp.ne.s32.totalorder %s141, %s142
    %p151 = scmp.eq.s32.totalorder %s21, 0
    %p152 = por %p150, %p151
    %p153 = scmp.ne.s32.totalorder %s141, %s142
    %p154 = scmp.eq.s32.totalorder %s22, 1
    %p155 = por %p153, %p154
    %p157 = scmp.ne.s32.totalorder %s142, %s156
    %p158 = scmp.eq.s32.totalorder %s22, 0
    %p159 = por %p157, %p158
    %s161 = sadd.s32 %s160, 1
    %p164 = scmp.eq.s32.totalorder %s16, 1
    %p165 = scmp.ne.s32.totalorder %s160, %s162
    %p166 = scmp.eq.s32.totalorder %s16, 0
    %p167 = por %p165, %p166
    %p168 = scmp.ne.s32.totalorder %s160, %s162
    %p169 = scmp.eq.s32.totalorder %s21, 1
    %p170 = por %p168, %p169
    %p171 = scmp.ne.s32.totalorder %s162, %s163
    %p172 = scmp.eq.s32.totalorder %s21, 0
    %p173 = por %p171, %p172
    %p174 = scmp.ne.s32.totalorder %s162, %s163
    %p175 = scmp.eq.s32.totalorder %s22, 1
    %p176 = por %p174, %p175
    %p178 = scmp.ne.s32.totalorder %s163, %s177
    %p179 = scmp.eq.s32.totalorder %s22, 0
    %p180 = por %p178, %p179
    %s182 = sadd.s32 %s181, 1
    %p185 = scmp.eq.s32.totalorder %s16, 1
    %p186 = scmp.ne.s32.totalorder %s181, %s183
    %p187 = scmp.eq.s32.totalorder %s16, 0
    %p188 = por %p186, %p187
    %p189 = scmp.ne.s32.totalorder %s181, %s183
    %p190 = scmp.eq.s32.totalorder %s21, 1
    %p191 = por %p189, %p190
    %p192 = scmp.ne.s32.totalorder %s183, %s184
    %p193 = scmp.eq.s32.totalorder %s21, 0
    %p194 = por %p192, %p193
    %p195 = scmp.ne.s32.totalorder %s183, %s184
    %p196 = scmp.eq.s32.totalorder %s22, 1
    %p197 = por %p195, %p196
    %p199 = scmp.ne.s32.totalorder %s184, %s198
    %p200 = scmp.eq.s32.totalorder %s22, 0
    %p201 = por %p199, %p200
    %s203 = sadd.s32 %s202, 1
    %p206 = scmp.eq.s32.totalorder %s16, 1
    %p207 = scmp.ne.s32.totalorder %s202, %s204
    %p208 = scmp.eq.s32.totalorder %s16, 0
    %p209 = por %p207, %p208
    %p210 = scmp.ne.s32.totalorder %s202, %s204
    %p211 = scmp.eq.s32.totalorder %s21, 1
    %p212 = por %p210, %p211
    %p213 = scmp.ne.s32.totalorder %s204, %s205
    %p214 = scmp.eq.s32.totalorder %s21, 0
    %p215 = por %p213, %p214
    %p216 = scmp.ne.s32.totalorder %s204, %s205
    %p217 = scmp.eq.s32.totalorder %s22, 1
    %p218 = por %p216, %p217
    %p220 = scmp.ne.s32.totalorder %s205, %s219
    %p221 = scmp.eq.s32.totalorder %s22, 0
    %p222 = por %p220, %p221
    %s224 = sadd.s32 %s223, 1
    %p227 = scmp.eq.s32.totalorder %s16, 1
    %p228 = scmp.ne.s32.totalorder %s223, %s225
    %p229 = scmp.eq.s32.totalorder %s16, 0
    %p230 = por %p228, %p229
    %p231 = scmp.ne.s32.totalorder %s223, %s225
    %p232 = scmp.eq.s32.totalorder %s21, 1
    %p233 = por %p231, %p232
    %p234 = scmp.ne.s32.totalorder %s225, %s226
    %p235 = scmp.eq.s32.totalorder %s21, 0
    %p236 = por %p234, %p235
    %p237 = scmp.ne.s32.totalorder %s225, %s226
    %p238 = scmp.eq.s32.totalorder %s22, 1
    %p239 = por %p237, %p238
    %p241 = scmp.ne.s32.totalorder %s226, %s240
    %p242 = scmp.eq.s32.totalorder %s22, 0
    %p243 = por %p241, %p242
    %s244 = ssub.s32 %s16, %s23
    %p245 = scmp.eq.s32.totalorder %s244, 0
    %s247 = sadd.s32 %s246, 1
    %s248 = scalar_select %p245, %s246, %s247
    %p251 = pneg %p245
    %p252 = scmp.eq.s32.totalorder %s16, 1
    %p253 = por %p251, %p252
    %p254 = scmp.ne.s32.totalorder %s246, %s249
    %p255 = scmp.eq.s32.totalorder %s16, 0
    %p256 = por %p254, %p255
    %p257 = scmp.ne.s32.totalorder %s246, %s249
    %p258 = scmp.eq.s32.totalorder %s21, 1
    %p259 = por %p257, %p258
    %p260 = scmp.ne.s32.totalorder %s249, %s250
    %p261 = scmp.eq.s32.totalorder %s21, 0
    %p262 = por %p260, %p261
    %p263 = scmp.ne.s32.totalorder %s249, %s250
    %p264 = scmp.eq.s32.totalorder %s22, 1
    %p265 = por %p263, %p264
    %p267 = scmp.ne.s32.totalorder %s250, %s266
    %p268 = scmp.eq.s32.totalorder %s22, 0
    %p269 = por %p267, %p268
    %p270 = scmp.le.s32.totalorder 1, %s16
    %p271 = scmp.lt.s32.totalorder %s16, 3
    %p272 = pnand %p270, %p271
    %p273 = pneg %p272
    // Predicated region
    $region9: #{transformer_model_forward.20} parent=5 // pred_check
      _
    $region10: #{transformer_model_forward.20} parent=5 // pred_check_branch
      %275 = sbr.rel (%p272) target = $region12
    $region11: #{transformer_model_forward.20} parent=5 // pred_region
      %s276 = ssub.s32 %s16, 1
      // Predicated region
      $region13: #{transformer_model_forward.20} parent=11 // pred_check
        %p277 = pneg %p89
      $region14: #{transformer_model_forward.20} parent=11 // pred_check_branch
        %279 = sbr.rel (%p277) target = $region16
      $region15: #{transformer_model_forward.20} parent=11 // pred_region
        _
      $region16: #{transformer_model_forward.20} parent=11 // pred_fallthru
        _
      // Predicated region
      $region17: #{transformer_model_forward.20} parent=11 // pred_check
        %p280 = pneg %p110
      $region18: #{transformer_model_forward.20} parent=11 // pred_check_branch
        %282 = sbr.rel (%p280) target = $region20
      $region19: #{transformer_model_forward.20} parent=11 // pred_region
        _
      $region20: #{transformer_model_forward.20} parent=11 // pred_fallthru
        _
      // Predicated region
      $region21: #{transformer_model_forward.20} parent=11 // pred_check
        %p283 = pneg %p131
      $region22: #{transformer_model_forward.20} parent=11 // pred_check_branch
        %285 = sbr.rel (%p283) target = $region24
      $region23: #{transformer_model_forward.20} parent=11 // pred_region
        _
      $region24: #{transformer_model_forward.20} parent=11 // pred_fallthru
        _
      // Predicated region
      $region25: #{transformer_model_forward.20} parent=11 // pred_check
        %p286 = pneg %p152
      $region26: #{transformer_model_forward.20} parent=11 // pred_check_branch
        %288 = sbr.rel (%p286) target = $region28
      $region27: #{transformer_model_forward.20} parent=11 // pred_region
        _
      $region28: #{transformer_model_forward.20} parent=11 // pred_fallthru
        _
      // Predicated region
      $region29: #{transformer_model_forward.20} parent=11 // pred_check
        %p289 = pneg %p173
      $region30: #{transformer_model_forward.20} parent=11 // pred_check_branch
        %291 = sbr.rel (%p289) target = $region32
      $region31: #{transformer_model_forward.20} parent=11 // pred_region
        _
      $region32: #{transformer_model_forward.20} parent=11 // pred_fallthru
        _
      // Predicated region
      $region33: #{transformer_model_forward.20} parent=11 // pred_check
        %p292 = pneg %p194
      $region34: #{transformer_model_forward.20} parent=11 // pred_check_branch
        %294 = sbr.rel (%p292) target = $region36
      $region35: #{transformer_model_forward.20} parent=11 // pred_region
        _
      $region36: #{transformer_model_forward.20} parent=11 // pred_fallthru
        _
      // Predicated region
      $region37: #{transformer_model_forward.20} parent=11 // pred_check
        %p295 = pneg %p215
      $region38: #{transformer_model_forward.20} parent=11 // pred_check_branch
        %297 = sbr.rel (%p295) target = $region40
      $region39: #{transformer_model_forward.20} parent=11 // pred_region
        _
      $region40: #{transformer_model_forward.20} parent=11 // pred_fallthru
        _
      // Predicated region
      $region41: #{transformer_model_forward.20} parent=11 // pred_check
        %p298 = pneg %p236
      $region42: #{transformer_model_forward.20} parent=11 // pred_check_branch
        %300 = sbr.rel (%p298) target = $region44
      $region43: #{transformer_model_forward.20} parent=11 // pred_region
        _
      $region44: #{transformer_model_forward.20} parent=11 // pred_fallthru
        _
    $region12: #{transformer_model_forward.20} parent=5 // pred_fallthru
      _
    %p301 = scmp.lt.s32.totalorder %s16, 2
    // Predicated region
    $region45: #{transformer_model_forward.20} parent=5 // pred_check
      %p302 = pneg %p301
    $region46: #{transformer_model_forward.20} parent=5 // pred_check_branch
      %304 = sbr.rel (%p302) target = $region48
    $region47: #{transformer_model_forward.20} parent=5 // pred_region
      // Predicated region
      $region49: #{transformer_model_forward.20} parent=47 // pred_check
        %p305 = pneg %p36
      $region50: #{transformer_model_forward.20} parent=47 // pred_check_branch
        %307 = sbr.rel (%p305) target = $region52
      $region51: #{transformer_model_forward.20} parent=47 // pred_region
        %p308 = scmp.lt.s32.totalorder %s16, 1
        %s309 = scalar_select %p308, %s16, 1
        %s310 = smul.addr %s309, 8
        %s311 = scalar_lea.vmem %s0, %s310
      $region52: #{transformer_model_forward.20} parent=47 // pred_fallthru
        _
      // Predicated region
      $region53: #{transformer_model_forward.20} parent=47 // pred_check
        %p312 = pneg %p62
      $region54: #{transformer_model_forward.20} parent=47 // pred_check_branch
        %314 = sbr.rel (%p312) target = $region56
      $region55: #{transformer_model_forward.20} parent=47 // pred_region
        %p315 = scmp.lt.s32.totalorder %s16, 1
        %s316 = scalar_select %p315, %s16, 1
        %s317 = smul.addr %s316, 8
        %s318 = scalar_lea.vmem %s1, %s317
      $region56: #{transformer_model_forward.20} parent=47 // pred_fallthru
        _
    $region48: #{transformer_model_forward.20} parent=5 // pred_fallthru
      _
    %p319 = scmp.le.s32.totalorder 1, %s16
    %p320 = scmp.lt.s32.totalorder %s16, 3
    %p321 = pnand %p319, %p320
    %p322 = pneg %p321
    // Predicated region
    $region57: #{transformer_model_forward.20} parent=5 // pred_check
      _
    $region58: #{transformer_model_forward.20} parent=5 // pred_check_branch
      %324 = sbr.rel (%p321) target = $region60
    $region59: #{transformer_model_forward.20} parent=5 // pred_region
      %s325 = ssub.s32 %s16, 1
      %p326 = scmp.lt.s32.totalorder %s21, 1
      %s327 = scalar_select %p326, %s21, 1
      %s328 = smul.addr %s327, 8
      %s329 = scalar_lea.vmem %s0, %s328
      %p330 = pneg %p42
      %p331 = pneg %p39
      %p332 = scmp.lt.s32.totalorder %s21, 1
      %s333 = scalar_select %p332, %s21, 1
      %s334 = smul.addr %s333, 8
      %s335 = scalar_lea.vmem %s1, %s334
      %p336 = pneg %p68
      %p337 = pneg %p65
      %p338 = pneg %p89
      %p339 = pneg %p86
      %p340 = pneg %p110
      %p341 = pneg %p107
      %p342 = pneg %p131
      %p343 = pneg %p128
      %p344 = pneg %p152
      %p345 = pneg %p149
      %p346 = pneg %p173
      %p347 = pneg %p170
      %p348 = pneg %p194
      %p349 = pneg %p191
      %p350 = pneg %p215
      %p351 = pneg %p212
      %p352 = pneg %p236
      %p353 = pneg %p233
      %p354 = pneg %p262
      %p355 = pneg %p259
      %p356 = scmp.lt.s32.totalorder %s21, 1
      %s357 = scalar_select %p356, %s21, 1
      %s358 = smul.addr %s357, 8
      %s359 = scalar_lea.vmem %s10, %s358
      %p360 = scmp.lt.s32.totalorder %s21, 1
      %s361 = scalar_select %p360, %s21, 1
      %s362 = smul.addr %s361, 8
      %s363 = scalar_lea.vmem %s0, %s362
      %p364 = scmp.lt.s32.totalorder %s21, 1
      %s365 = scalar_select %p364, %s21, 1
      %s366 = smul.addr %s365, 8
      %s367 = scalar_lea.vmem %s1, %s366
      %p368 = scmp.lt.s32.totalorder %s21, 1
      %s369 = scalar_select %p368, %s21, 1
      %s370 = smul.addr %s369, 8
      %s371 = scalar_lea.vmem %s10, %s370
      %v373 = vld [vmem:[%s363] sm:$0xff]
      %v374 = vld [vmem:[%s367] sm:$0xff]
      %v375 = vld [vmem:[%s2] sm:$0xf]
      %v376 = vld [vmem:[%s2 + $0x4] sm:$0xf]
      %v377 = vld [vmem:[%s2 + $0x8] sm:$0xf]
      %v378 = vld [vmem:[%s2 + $0xc] sm:$0xf]
      %v379 = vpack.c.bf16 %v373, %v373
      %v380 = vld [vmem:[%s3] sm:$0x1]
      %v382 = vlaneseq
      %v383 = vshrl.u32 %v382, 7
      %v384 = vsub.s32 0, %v383
      %v385 = vrot.slane %v380, %v384
      %v391 = vunpack.c.l.b16 %v375
      %v392 = vunpack.c.l.b16 %v376
      %v393 = vunpack.c.l.b16 %v377
      %v394 = vunpack.c.l.b16 %v378
      %v395 = vpack.c.b16 %v392, %v391
      %v396 = vpack.c.b16 %v394, %v393
      %vm399 = vcmask 261120
      %v401 = vsel %vm399, %v379, 0
      %403 = vmatprep.subr.bf16.mxu0 0
      %404 = vmatpush1.bf16.msra.mxu0 %v395
      %405 = vmatprep.subr.bf16.mxu0 0
      %406 = vmatpush1.bf16.msra.mxu0 %v396
      %407 = vmatprep.subr.bf16.mxu0 0
      %408 = vmatpush1.bf16.msra.mxu0 0
      %409 = vmatprep.subr.bf16.mxu0 0
      %410 = vmatpush1.bf16.msra.mxu0 0
      %411 = vmatprep.subr.bf16.mxu0 0
      %412 = vmatpush1.bf16.msra.mxu0 0
      %413 = vmatprep.subr.bf16.mxu0 0
      %414 = vmatpush1.bf16.msra.mxu0 0
      %415 = vmatprep.subr.bf16.mxu0 0
      %416 = vmatpush1.bf16.msra.mxu0 0
      %417 = vmatprep.subr.bf16.mxu0 0
      %418 = vmatpush1.bf16.msra.mxu0 0
      %419 = vmatprep.subr.bf16.mxu0 0
      %420 = vmatpush1.bf16.msra.mxu0 0
      %421 = vmatprep.subr.bf16.mxu0 0
      %422 = vmatpush1.bf16.msra.mxu0 0
      %423 = vmatprep.subr.bf16.mxu0 0
      %424 = vmatpush1.bf16.msra.mxu0 0
      %425 = vmatprep.subr.bf16.mxu0 0
      %426 = vmatpush1.bf16.msra.mxu0 0
      %427 = vmatprep.subr.bf16.mxu0 0
      %428 = vmatpush1.bf16.msra.mxu0 0
      %429 = vmatprep.subr.bf16.mxu0 0
      %430 = vmatpush1.bf16.msra.mxu0 0
      %431 = vmatprep.subr.bf16.mxu0 0
      %432 = vmatpush1.bf16.msra.mxu0 0
      %433 = vmatprep.subr.bf16.mxu0 0
      %434 = vmatpush1.bf16.msra.mxu0 0
      %435 = vmatprep.mubr.bf16.mxu0 0
      %436 = vmatmul.mubr.bf16.gmra.mrb[0].mxu0 %v401
      %v437 = vpop.f32.mrb[0].mxu0
      %v438 = vadd.f32 %v385, %v437
      %v439 = vpop.f32.mrb[0].mxu0
      %v440 = vpop.f32.mrb[0].mxu0
      %v441 = vpop.f32.mrb[0].mxu0
      %442 = vdwg.mxu0
      %v443 = vld [vmem:[%s4] sm:$0xf]
      %v444 = vld [vmem:[%s4 + $0x4] sm:$0xf]
      %v445 = vld [vmem:[%s4 + $0x8] sm:$0xf]
      %v446 = vld [vmem:[%s4 + $0xc] sm:$0xf]
      %v447 = vpack.c.bf16 %v374, %v374
      %v448 = vld [vmem:[%s5] sm:$0x1]
      %v450 = vlaneseq
      %v451 = vshrl.u32 %v450, 7
      %v452 = vsub.s32 0, %v451
      %v453 = vrot.slane %v448, %v452
      %v459 = vunpack.c.l.b16 %v443
      %v460 = vunpack.c.l.b16 %v444
      %v461 = vunpack.c.l.b16 %v445
      %v462 = vunpack.c.l.b16 %v446
      %v463 = vpack.c.b16 %v460, %v459
      %v464 = vpack.c.b16 %v462, %v461
      %v468 = vsel %vm399, %v447, 0
      %470 = vmatprep.subr.bf16.mxu0 0
      %471 = vmatpush1.bf16.msra.mxu0 %v463
      %472 = vmatprep.subr.bf16.mxu0 0
      %473 = vmatpush1.bf16.msra.mxu0 %v464
      %474 = vmatprep.subr.bf16.mxu0 0
      %475 = vmatpush1.bf16.msra.mxu0 0
      %476 = vmatprep.subr.bf16.mxu0 0
      %477 = vmatpush1.bf16.msra.mxu0 0
      %478 = vmatprep.subr.bf16.mxu0 0
      %479 = vmatpush1.bf16.msra.mxu0 0
      %480 = vmatprep.subr.bf16.mxu0 0
      %481 = vmatpush1.bf16.msra.mxu0 0
      %482 = vmatprep.subr.bf16.mxu0 0
      %483 = vmatpush1.bf16.msra.mxu0 0
      %484 = vmatprep.subr.bf16.mxu0 0
      %485 = vmatpush1.bf16.msra.mxu0 0
      %486 = vmatprep.subr.bf16.mxu0 0
      %487 = vmatpush1.bf16.msra.mxu0 0
      %488 = vmatprep.subr.bf16.mxu0 0
      %489 = vmatpush1.bf16.msra.mxu0 0
      %490 = vmatprep.subr.bf16.mxu0 0
      %491 = vmatpush1.bf16.msra.mxu0 0
      %492 = vmatprep.subr.bf16.mxu0 0
      %493 = vmatpush1.bf16.msra.mxu0 0
      %494 = vmatprep.subr.bf16.mxu0 0
      %495 = vmatpush1.bf16.msra.mxu0 0
      %496 = vmatprep.subr.bf16.mxu0 0
      %497 = vmatpush1.bf16.msra.mxu0 0
      %498 = vmatprep.subr.bf16.mxu0 0
      %499 = vmatpush1.bf16.msra.mxu0 0
      %500 = vmatprep.subr.bf16.mxu0 0
      %501 = vmatpush1.bf16.msra.mxu0 0
      %502 = vmatprep.mubr.bf16.mxu0 0
      %503 = vmatmul.mubr.bf16.gmra.mrb[0].mxu0 %v468
      %v504 = vpop.f32.mrb[0].mxu0
      %v505 = vadd.f32 %v453, %v504
      %v506 = vpop.f32.mrb[0].mxu0
      %v507 = vpop.f32.mrb[0].mxu0
      %v508 = vpop.f32.mrb[0].mxu0
      %509 = vdwg.mxu0
      %v510 = vpack.c.bf16 %v438, %v438
      %v511 = vpack.c.bf16 %v505, %v505
      %vm512 = vcmask 64512
      %v514 = vsel %vm512, %v510, 0
      %v517 = vsel %vm512, %v511, 0
      %519 = vmatprep.subr.bf16.mxu0 0
      %520 = vmatpush1.bf16.xpose.msra.mxu0 %v517
      %521 = vmatprep.subr.bf16.mxu0 0
      %522 = vmatpush1.bf16.xpose.msra.mxu0 0
      %523 = vmatprep.subr.bf16.mxu0 0
      %524 = vmatpush1.bf16.xpose.msra.mxu0 0
      %525 = vmatprep.subr.bf16.mxu0 0
      %526 = vmatpush1.bf16.xpose.msra.mxu0 0
      %527 = vmatprep.subr.bf16.mxu0 0
      %528 = vmatpush1.bf16.xpose.msra.mxu0 0
      %529 = vmatprep.subr.bf16.mxu0 0
      %530 = vmatpush1.bf16.xpose.msra.mxu0 0
      %531 = vmatprep.subr.bf16.mxu0 0
      %532 = vmatpush1.bf16.xpose.msra.mxu0 0
      %533 = vmatprep.subr.bf16.mxu0 0
      %534 = vmatpush1.bf16.xpose.msra.mxu0 0
      %535 = vmatprep.subr.bf16.mxu0 0
      %536 = vmatpush1.bf16.xpose.msra.mxu0 0
      %537 = vmatprep.subr.bf16.mxu0 0
      %538 = vmatpush1.bf16.xpose.msra.mxu0 0
      %539 = vmatprep.subr.bf16.mxu0 0
      %540 = vmatpush1.bf16.xpose.msra.mxu0 0
      %541 = vmatprep.subr.bf16.mxu0 0
      %542 = vmatpush1.bf16.xpose.msra.mxu0 0
      %543 = vmatprep.subr.bf16.mxu0 0
      %544 = vmatpush1.bf16.xpose.msra.mxu0 0
      %545 = vmatprep.subr.bf16.mxu0 0
      %546 = vmatpush1.bf16.xpose.msra.mxu0 0
      %547 = vmatprep.subr.bf16.mxu0 0
      %548 = vmatpush1.bf16.xpose.msra.mxu0 0
      %549 = vmatprep.subr.bf16.mxu0 0
      %550 = vmatpush1.bf16.xpose.msra.mxu0 0
      %551 = vmatprep.mubr.bf16.mxu0 0
      %552 = vmatmul.mubr.bf16.gmra.mrb[0].mxu0 %v514
      %v553 = vpop.f32.mrb[0].mxu0
      %v554 = vadd.f32 0.0, %v553
      %v555 = vpop.f32.mrb[0].mxu0
      %v556 = vpop.f32.mrb[0].mxu0
      %v557 = vpop.f32.mrb[0].mxu0
      %558 = vdwg.mxu0
      %v559 = vsel %vm512, %v554, -inf
      %560 = vmax.xlane.f32.xlu0 %v559
      %v561 = vpop.xlane.xlu0 %560
      %v562 = vsub.f32 %v554, %v561
      %v563 = vmul.f32 %v562, 1.442695
      %v564 = vpow.pop %v563
      %v565 = vsel %vm512, %v564, 0.0
      %566 = vadd.xlane.f32.xlu0 %v565
      %v567 = vpop.xlane.xlu0 %566
      %v568 = vrcp.pop %v567
      %v569 = vmul.f32 %v564, %v568
      %v570 = vpack.c.bf16 %v569, %v569
      %572 = vrot.lane.b32.xlu0 %v511, 96
      %v573 = vpop.permute.xlu0 %572
      %v575 = vsel %vm512, %v570, 0
      %vm577 = vcmask 1043456
      %v579 = vsel %vm577, %v573, 0
      %581 = vmatprep.subr.bf16.mxu0 0
      %582 = vmatpush1.bf16.msra.mxu0 %v579
      %583 = vmatprep.subr.bf16.mxu0 0
      %584 = vmatpush1.bf16.msra.mxu0 0
      %585 = vmatprep.subr.bf16.mxu0 0
      %586 = vmatpush1.bf16.msra.mxu0 0
      %587 = vmatprep.subr.bf16.mxu0 0
      %588 = vmatpush1.bf16.msra.mxu0 0
      %589 = vmatprep.subr.bf16.mxu0 0
      %590 = vmatpush1.bf16.msra.mxu0 0
      %591 = vmatprep.subr.bf16.mxu0 0
      %592 = vmatpush1.bf16.msra.mxu0 0
      %593 = vmatprep.subr.bf16.mxu0 0
      %594 = vmatpush1.bf16.msra.mxu0 0
      %595 = vmatprep.subr.bf16.mxu0 0
      %596 = vmatpush1.bf16.msra.mxu0 0
      %597 = vmatprep.subr.bf16.mxu0 0
      %598 = vmatpush1.bf16.msra.mxu0 0
      %599 = vmatprep.subr.bf16.mxu0 0
      %600 = vmatpush1.bf16.msra.mxu0 0
      %601 = vmatprep.subr.bf16.mxu0 0
      %602 = vmatpush1.bf16.msra.mxu0 0
      %603 = vmatprep.subr.bf16.mxu0 0
      %604 = vmatpush1.bf16.msra.mxu0 0
      %605 = vmatprep.subr.bf16.mxu0 0
      %606 = vmatpush1.bf16.msra.mxu0 0
      %607 = vmatprep.subr.bf16.mxu0 0
      %608 = vmatpush1.bf16.msra.mxu0 0
      %609 = vmatprep.subr.bf16.mxu0 0
      %610 = vmatpush1.bf16.msra.mxu0 0
      %611 = vmatprep.subr.bf16.mxu0 0
      %612 = vmatpush1.bf16.msra.mxu0 0
      %613 = vmatprep.mubr.bf16.mxu0 0
      %614 = vmatmul.mubr.bf16.gmra.mrb[0].mxu0 %v575
      %v615 = vpop.f32.mrb[0].mxu0
      %v616 = vadd.f32 0.0, %v615
      %v617 = vpop.f32.mrb[0].mxu0
      %v618 = vpop.f32.mrb[0].mxu0
      %v619 = vpop.f32.mrb[0].mxu0
      %620 = vdwg.mxu0
      %622 = vrot.lane.b32.xlu0 %v510, 120
      %v623 = vpop.permute.xlu0 %622
      %624 = vrot.lane.b32.xlu0 %v511, 120
      %v625 = vpop.permute.xlu0 %624
      %v627 = vsel %vm512, %v623, 0
      %v630 = vsel %vm512, %v625, 0
      %632 = vmatprep.subr.bf16.mxu0 0
      %633 = vmatpush1.bf16.xpose.msra.mxu0 %v630
      %634 = vmatprep.subr.bf16.mxu0 0
      %635 = vmatpush1.bf16.xpose.msra.mxu0 0
      %636 = vmatprep.subr.bf16.mxu0 0
      %637 = vmatpush1.bf16.xpose.msra.mxu0 0
      %638 = vmatprep.subr.bf16.mxu0 0
      %639 = vmatpush1.bf16.xpose.msra.mxu0 0
      %640 = vmatprep.subr.bf16.mxu0 0
      %641 = vmatpush1.bf16.xpose.msra.mxu0 0
      %642 = vmatprep.subr.bf16.mxu0 0
      %643 = vmatpush1.bf16.xpose.msra.mxu0 0
      %644 = vmatprep.subr.bf16.mxu0 0
      %645 = vmatpush1.bf16.xpose.msra.mxu0 0
      %646 = vmatprep.subr.bf16.mxu0 0
      %647 = vmatpush1.bf16.xpose.msra.mxu0 0
      %648 = vmatprep.subr.bf16.mxu0 0
      %649 = vmatpush1.bf16.xpose.msra.mxu0 0
      %650 = vmatprep.subr.bf16.mxu0 0
      %651 = vmatpush1.bf16.xpose.msra.mxu0 0
      %652 = vmatprep.subr.bf16.mxu0 0
      %653 = vmatpush1.bf16.xpose.msra.mxu0 0
      %654 = vmatprep.subr.bf16.mxu0 0
      %655 = vmatpush1.bf16.xpose.msra.mxu0 0
      %656 = vmatprep.subr.bf16.mxu0 0
      %657 = vmatpush1.bf16.xpose.msra.mxu0 0
      %658 = vmatprep.subr.bf16.mxu0 0
      %659 = vmatpush1.bf16.xpose.msra.mxu0 0
      %660 = vmatprep.subr.bf16.mxu0 0
      %661 = vmatpush1.bf16.xpose.msra.mxu0 0
      %662 = vmatprep.subr.bf16.mxu0 0
      %663 = vmatpush1.bf16.xpose.msra.mxu0 0
      %664 = vmatprep.mubr.bf16.mxu0 0
      %665 = vmatmul.mubr.bf16.gmra.mrb[0].mxu0 %v627
      %v666 = vpop.f32.mrb[0].mxu0
      %v667 = vadd.f32 0.0, %v666
      %v668 = vpop.f32.mrb[0].mxu0
      %v669 = vpop.f32.mrb[0].mxu0
      %v670 = vpop.f32.mrb[0].mxu0
      %671 = vdwg.mxu0
      %v672 = vsel %vm512, %v667, -inf
      %673 = vmax.xlane.f32.xlu0 %v672
      %v674 = vpop.xlane.xlu0 %673
      %v675 = vsub.f32 %v667, %v674
      %v676 = vmul.f32 %v675, 1.442695
      %v677 = vpow.pop %v676
      %v678 = vsel %vm512, %v677, 0.0
      %679 = vadd.xlane.f32.xlu0 %v678
      %v680 = vpop.xlane.xlu0 %679
      %v681 = vrcp.pop %v680
      %v682 = vmul.f32 %v677, %v681
      %v683 = vpack.c.bf16 %v682, %v682
      %684 = vrot.lane.b32.xlu0 %v511, 88
      %v685 = vpop.permute.xlu0 %684
      %v687 = vsel %vm512, %v683, 0
      %v690 = vsel %vm577, %v685, 0
      %692 = vmatprep.subr.bf16.mxu0 0
      %693 = vmatpush1.bf16.msra.mxu0 %v690
      %694 = vmatprep.subr.bf16.mxu0 0
      %695 = vmatpush1.bf16.msra.mxu0 0
      %696 = vmatprep.subr.bf16.mxu0 0
      %697 = vmatpush1.bf16.msra.mxu0 0
      %698 = vmatprep.subr.bf16.mxu0 0
      %699 = vmatpush1.bf16.msra.mxu0 0
      %700 = vmatprep.subr.bf16.mxu0 0
      %701 = vmatpush1.bf16.msra.mxu0 0
      %702 = vmatprep.subr.bf16.mxu0 0
      %703 = vmatpush1.bf16.msra.mxu0 0
      %704 = vmatprep.subr.bf16.mxu0 0
      %705 = vmatpush1.bf16.msra.mxu0 0
      %706 = vmatprep.subr.bf16.mxu0 0
      %707 = vmatpush1.bf16.msra.mxu0 0
      %708 = vmatprep.subr.bf16.mxu0 0
      %709 = vmatpush1.bf16.msra.mxu0 0
      %710 = vmatprep.subr.bf16.mxu0 0
      %711 = vmatpush1.bf16.msra.mxu0 0
      %712 = vmatprep.subr.bf16.mxu0 0
      %713 = vmatpush1.bf16.msra.mxu0 0
      %714 = vmatprep.subr.bf16.mxu0 0
      %715 = vmatpush1.bf16.msra.mxu0 0
      %716 = vmatprep.subr.bf16.mxu0 0
      %717 = vmatpush1.bf16.msra.mxu0 0
      %718 = vmatprep.subr.bf16.mxu0 0
      %719 = vmatpush1.bf16.msra.mxu0 0
      %720 = vmatprep.subr.bf16.mxu0 0
      %721 = vmatpush1.bf16.msra.mxu0 0
      %722 = vmatprep.subr.bf16.mxu0 0
      %723 = vmatpush1.bf16.msra.mxu0 0
      %724 = vmatprep.mubr.bf16.mxu0 0
      %725 = vmatmul.mubr.bf16.gmra.mrb[0].mxu0 %v687
      %v726 = vpop.f32.mrb[0].mxu0
      %v727 = vadd.f32 0.0, %v726
      %v728 = vpop.f32.mrb[0].mxu0
      %v729 = vpop.f32.mrb[0].mxu0
      %v730 = vpop.f32.mrb[0].mxu0
      %731 = vdwg.mxu0
      %732 = vrot.lane.b32.xlu0 %v510, 112
      %v733 = vpop.permute.xlu0 %732
      %734 = vrot.lane.b32.xlu0 %v511, 112
      %v735 = vpop.permute.xlu0 %734
      %v737 = vsel %vm512, %v733, 0
      %v740 = vsel %vm512, %v735, 0
      %742 = vmatprep.subr.bf16.mxu0 0
      %743 = vmatpush1.bf16.xpose.msra.mxu0 %v740
      %744 = vmatprep.subr.bf16.mxu0 0
      %745 = vmatpush1.bf16.xpose.msra.mxu0 0
      %746 = vmatprep.subr.bf16.mxu0 0
      %747 = vmatpush1.bf16.xpose.msra.mxu0 0
      %748 = vmatprep.subr.bf16.mxu0 0
      %749 = vmatpush1.bf16.xpose.msra.mxu0 0
      %750 = vmatprep.subr.bf16.mxu0 0
      %751 = vmatpush1.bf16.xpose.msra.mxu0 0
      %752 = vmatprep.subr.bf16.mxu0 0
      %753 = vmatpush1.bf16.xpose.msra.mxu0 0
      %754 = vmatprep.subr.bf16.mxu0 0
      %755 = vmatpush1.bf16.xpose.msra.mxu0 0
      %756 = vmatprep.subr.bf16.mxu0 0
      %757 = vmatpush1.bf16.xpose.msra.mxu0 0
      %758 = vmatprep.subr.bf16.mxu0 0
      %759 = vmatpush1.bf16.xpose.msra.mxu0 0
      %760 = vmatprep.subr.bf16.mxu0 0
      %761 = vmatpush1.bf16.xpose.msra.mxu0 0
      %762 = vmatprep.subr.bf16.mxu0 0
      %763 = vmatpush1.bf16.xpose.msra.mxu0 0
      %764 = vmatprep.subr.bf16.mxu0 0
      %765 = vmatpush1.bf16.xpose.msra.mxu0 0
      %766 = vmatprep.subr.bf16.mxu0 0
      %767 = vmatpush1.bf16.xpose.msra.mxu0 0
      %768 = vmatprep.subr.bf16.mxu0 0
      %769 = vmatpush1.bf16.xpose.msra.mxu0 0
      %770 = vmatprep.subr.bf16.mxu0 0
      %771 = vmatpush1.bf16.xpose.msra.mxu0 0
      %772 = vmatprep.subr.bf16.mxu0 0
      %773 = vmatpush1.bf16.xpose.msra.mxu0 0
      %774 = vmatprep.mubr.bf16.mxu0 0
      %775 = vmatmul.mubr.bf16.gmra.mrb[0].mxu0 %v737
      %v776 = vpop.f32.mrb[0].mxu0
      %v777 = vadd.f32 0.0, %v776
      %v778 = vpop.f32.mrb[0].mxu0
      %v779 = vpop.f32.mrb[0].mxu0
      %v780 = vpop.f32.mrb[0].mxu0
      %781 = vdwg.mxu0
      %v782 = vsel %vm512, %v777, -inf
      %783 = vmax.xlane.f32.xlu0 %v782
      %v784 = vpop.xlane.xlu0 %783
      %v785 = vsub.f32 %v777, %v784
      %v786 = vmul.f32 %v785, 1.442695
      %v787 = vpow.pop %v786
      %v788 = vsel %vm512, %v787, 0.0
      %789 = vadd.xlane.f32.xlu0 %v788
      %v790 = vpop.xlane.xlu0 %789
      %v791 = vrcp.pop %v790
      %v792 = vmul.f32 %v787, %v791
      %v793 = vpack.c.bf16 %v792, %v792
      %794 = vrot.lane.b32.xlu0 %v511, 80
      %v795 = vpop.permute.xlu0 %794
      %v797 = vsel %vm512, %v793, 0
      %v800 = vsel %vm577, %v795, 0
      %802 = vmatprep.subr.bf16.mxu0 0
      %803 = vmatpush1.bf16.msra.mxu0 %v800
      %804 = vmatprep.subr.bf16.mxu0 0
      %805 = vmatpush1.bf16.msra.mxu0 0
      %806 = vmatprep.subr.bf16.mxu0 0
      %807 = vmatpush1.bf16.msra.mxu0 0
      %808 = vmatprep.subr.bf16.mxu0 0
      %809 = vmatpush1.bf16.msra.mxu0 0
      %810 = vmatprep.subr.bf16.mxu0 0
      %811 = vmatpush1.bf16.msra.mxu0 0
      %812 = vmatprep.subr.bf16.mxu0 0
      %813 = vmatpush1.bf16.msra.mxu0 0
      %814 = vmatprep.subr.bf16.mxu0 0
      %815 = vmatpush1.bf16.msra.mxu0 0
      %816 = vmatprep.subr.bf16.mxu0 0
      %817 = vmatpush1.bf16.msra.mxu0 0
      %818 = vmatprep.subr.bf16.mxu0 0
      %819 = vmatpush1.bf16.msra.mxu0 0
      %820 = vmatprep.subr.bf16.mxu0 0
      %821 = vmatpush1.bf16.msra.mxu0 0
      %822 = vmatprep.subr.bf16.mxu0 0
      %823 = vmatpush1.bf16.msra.mxu0 0
      %824 = vmatprep.subr.bf16.mxu0 0
      %825 = vmatpush1.bf16.msra.mxu0 0
      %826 = vmatprep.subr.bf16.mxu0 0
      %827 = vmatpush1.bf16.msra.mxu0 0
      %828 = vmatprep.subr.bf16.mxu0 0
      %829 = vmatpush1.bf16.msra.mxu0 0
      %830 = vmatprep.subr.bf16.mxu0 0
      %831 = vmatpush1.bf16.msra.mxu0 0
      %832 = vmatprep.subr.bf16.mxu0 0
      %833 = vmatpush1.bf16.msra.mxu0 0
      %834 = vmatprep.mubr.bf16.mxu0 0
      %835 = vmatmul.mubr.bf16.gmra.mrb[0].mxu0 %v797
      %v836 = vpop.f32.mrb[0].mxu0
      %v837 = vadd.f32 0.0, %v836
      %v838 = vpop.f32.mrb[0].mxu0
      %v839 = vpop.f32.mrb[0].mxu0
      %v840 = vpop.f32.mrb[0].mxu0
      %841 = vdwg.mxu0
      %842 = vrot.lane.b32.xlu0 %v510, 104
      %v843 = vpop.permute.xlu0 %842
      %844 = vrot.lane.b32.xlu0 %v511, 104
      %v845 = vpop.permute.xlu0 %844
      %v847 = vsel %vm512, %v843, 0
      %v850 = vsel %vm512, %v845, 0
      %852 = vmatprep.subr.bf16.mxu0 0
      %853 = vmatpush1.bf16.xpose.msra.mxu0 %v850
      %854 = vmatprep.subr.bf16.mxu0 0
      %855 = vmatpush1.bf16.xpose.msra.mxu0 0
      %856 = vmatprep.subr.bf16.mxu0 0
      %857 = vmatpush1.bf16.xpose.msra.mxu0 0
      %858 = vmatprep.subr.bf16.mxu0 0
      %859 = vmatpush1.bf16.xpose.msra.mxu0 0
      %860 = vmatprep.subr.bf16.mxu0 0
      %861 = vmatpush1.bf16.xpose.msra.mxu0 0
      %862 = vmatprep.subr.bf16.mxu0 0
      %863 = vmatpush1.bf16.xpose.msra.mxu0 0
      %864 = vmatprep.subr.bf16.mxu0 0
      %865 = vmatpush1.bf16.xpose.msra.mxu0 0
      %866 = vmatprep.subr.bf16.mxu0 0
      %867 = vmatpush1.bf16.xpose.msra.mxu0 0
      %868 = vmatprep.subr.bf16.mxu0 0
      %869 = vmatpush1.bf16.xpose.msra.mxu0 0
      %870 = vmatprep.subr.bf16.mxu0 0
      %871 = vmatpush1.bf16.xpose.msra.mxu0 0
      %872 = vmatprep.subr.bf16.mxu0 0
      %873 = vmatpush1.bf16.xpose.msra.mxu0 0
      %874 = vmatprep.subr.bf16.mxu0 0
      %875 = vmatpush1.bf16.xpose.msra.mxu0 0
      %876 = vmatprep.subr.bf16.mxu0 0
      %877 = vmatpush1.bf16.xpose.msra.mxu0 0
      %878 = vmatprep.subr.bf16.mxu0 0
      %879 = vmatpush1.bf16.xpose.msra.mxu0 0
      %880 = vmatprep.subr.bf16.mxu0 0
      %881 = vmatpush1.bf16.xpose.msra.mxu0 0
      %882 = vmatprep.subr.bf16.mxu0 0
      %883 = vmatpush1.bf16.xpose.msra.mxu0 0
      %884 = vmatprep.mubr.bf16.mxu0 0
      %885 = vmatmul.mubr.bf16.gmra.mrb[0].mxu0 %v847
      %v886 = vpop.f32.mrb[0].mxu0
      %v887 = vadd.f32 0.0, %v886
      %v888 = vpop.f32.mrb[0].mxu0
      %v889 = vpop.f32.mrb[0].mxu0
      %v890 = vpop.f32.mrb[0].mxu0
      %891 = vdwg.mxu0
      %v892 = vsel %vm512, %v887, -inf
      %893 = vmax.xlane.f32.xlu0 %v892
      %v894 = vpop.xlane.xlu0 %893
      %v895 = vsub.f32 %v887, %v894
      %v896 = vmul.f32 %v895, 1.442695
      %v897 = vpow.pop %v896
      %v898 = vsel %vm512, %v897, 0.0
      %899 = vadd.xlane.f32.xlu0 %v898
      %v900 = vpop.xlane.xlu0 %899
      %v901 = vrcp.pop %v900
      %v902 = vmul.f32 %v897, %v901
      %v903 = vpack.c.bf16 %v902, %v902
      %904 = vrot.lane.b32.xlu0 %v511, 72
      %v905 = vpop.permute.xlu0 %904
      %v907 = vsel %vm512, %v903, 0
      %v910 = vsel %vm577, %v905, 0
      %912 = vmatprep.subr.bf16.mxu0 0
      %913 = vmatpush1.bf16.msra.mxu0 %v910
      %914 = vmatprep.subr.bf16.mxu0 0
      %915 = vmatpush1.bf16.msra.mxu0 0
      %916 = vmatprep.subr.bf16.mxu0 0
      %917 = vmatpush1.bf16.msra.mxu0 0
      %918 = vmatprep.subr.bf16.mxu0 0
      %919 = vmatpush1.bf16.msra.mxu0 0
      %920 = vmatprep.subr.bf16.mxu0 0
      %921 = vmatpush1.bf16.msra.mxu0 0
      %922 = vmatprep.subr.bf16.mxu0 0
      %923 = vmatpush1.bf16.msra.mxu0 0
      %924 = vmatprep.subr.bf16.mxu0 0
      %925 = vmatpush1.bf16.msra.mxu0 0
      %926 = vmatprep.subr.bf16.mxu0 0
      %927 = vmatpush1.bf16.msra.mxu0 0
      %928 = vmatprep.subr.bf16.mxu0 0
      %929 = vmatpush1.bf16.msra.mxu0 0
      %930 = vmatprep.subr.bf16.mxu0 0
      %931 = vmatpush1.bf16.msra.mxu0 0
      %932 = vmatprep.subr.bf16.mxu0 0
      %933 = vmatpush1.bf16.msra.mxu0 0
      %934 = vmatprep.subr.bf16.mxu0 0
      %935 = vmatpush1.bf16.msra.mxu0 0
      %936 = vmatprep.subr.bf16.mxu0 0
      %937 = vmatpush1.bf16.msra.mxu0 0
      %938 = vmatprep.subr.bf16.mxu0 0
      %939 = vmatpush1.bf16.msra.mxu0 0
      %940 = vmatprep.subr.bf16.mxu0 0
      %941 = vmatpush1.bf16.msra.mxu0 0
      %942 = vmatprep.subr.bf16.mxu0 0
      %943 = vmatpush1.bf16.msra.mxu0 0
      %944 = vmatprep.mubr.bf16.mxu0 0
      %945 = vmatmul.mubr.bf16.gmra.mrb[0].mxu0 %v907
      %v946 = vpop.f32.mrb[0].mxu0
      %v947 = vadd.f32 0.0, %v946
      %v948 = vpop.f32.mrb[0].mxu0
      %v949 = vpop.f32.mrb[0].mxu0
      %v950 = vpop.f32.mrb[0].mxu0
      %951 = vdwg.mxu0
      %953 = vrot.lane.b32.xlu0 %v727, 8
      %v954 = vpop.permute.xlu0 %953
      %957 = vrot.lane.b32.xlu0 %v837, 16
      %v958 = vpop.permute.xlu0 %957
      %961 = vrot.lane.b32.xlu0 %v947, 24
      %v962 = vpop.permute.xlu0 %961
      %v964 = vsel %vm512, %v616, %v954
      %vm965 = vcmask 130048
      %v966 = vsel %vm965, %v964, %v958
      %vm967 = vcmask 195584
      %v968 = vsel %vm967, %v966, %v962
      %v969 = vld [vmem:[%s6] sm:$0xf]
      %v970 = vld [vmem:[%s6 + $0x4] sm:$0xf]
      %v971 = vld [vmem:[%s6 + $0x8] sm:$0xf]
      %v972 = vld [vmem:[%s6 + $0xc] sm:$0xf]
      %v973 = vpack.c.bf16 %v968, %v968
      %v978 = vunpack.c.l.b16 %v969
      %v979 = vunpack.c.l.b16 %v970
      %v980 = vunpack.c.l.b16 %v971
      %v981 = vunpack.c.l.b16 %v972
      %v982 = vpack.c.b16 %v979, %v978
      %v983 = vpack.c.b16 %v981, %v980
      %v987 = vsel %vm399, %v973, 0
      %989 = vmatprep.subr.bf16.mxu0 0
      %990 = vmatpush1.bf16.msra.mxu0 %v982
      %991 = vmatprep.subr.bf16.mxu0 0
      %992 = vmatpush1.bf16.msra.mxu0 %v983
      %993 = vmatprep.subr.bf16.mxu0 0
      %994 = vmatpush1.bf16.msra.mxu0 0
      %995 = vmatprep.subr.bf16.mxu0 0
      %996 = vmatpush1.bf16.msra.mxu0 0
      %997 = vmatprep.subr.bf16.mxu0 0
      %998 = vmatpush1.bf16.msra.mxu0 0
      %999 = vmatprep.subr.bf16.mxu0 0
      %1000 = vmatpush1.bf16.msra.mxu0 0
      %1001 = vmatprep.subr.bf16.mxu0 0
      %1002 = vmatpush1.bf16.msra.mxu0 0
      %1003 = vmatprep.subr.bf16.mxu0 0
      %1004 = vmatpush1.bf16.msra.mxu0 0
      %1005 = vmatprep.subr.bf16.mxu0 0
      %1006 = vmatpush1.bf16.msra.mxu0 0
      %1007 = vmatprep.subr.bf16.mxu0 0
      %1008 = vmatpush1.bf16.msra.mxu0 0
      %1009 = vmatprep.subr.bf16.mxu0 0
      %1010 = vmatpush1.bf16.msra.mxu0 0
      %1011 = vmatprep.subr.bf16.mxu0 0
      %1012 = vmatpush1.bf16.msra.mxu0 0
      %1013 = vmatprep.subr.bf16.mxu0 0
      %1014 = vmatpush1.bf16.msra.mxu0 0
      %1015 = vmatprep.subr.bf16.mxu0 0
      %1016 = vmatpush1.bf16.msra.mxu0 0
      %1017 = vmatprep.subr.bf16.mxu0 0
      %1018 = vmatpush1.bf16.msra.mxu0 0
      %1019 = vmatprep.subr.bf16.mxu0 0
      %1020 = vmatpush1.bf16.msra.mxu0 0
      %1021 = vmatprep.mubr.bf16.mxu0 0
      %1022 = vmatmul.mubr.bf16.gmra.mrb[0].mxu0 %v987
      %v1023 = vpop.f32.mrb[0].mxu0
      %v1024 = vadd.f32 0.0, %v1023
      %v1025 = vpop.f32.mrb[0].mxu0
      %v1026 = vpop.f32.mrb[0].mxu0
      %v1027 = vpop.f32.mrb[0].mxu0
      %1028 = vdwg.mxu0
      %v1029 = vadd.f32 %v373, %v1024
      %v1030 = vld [vmem:[%s7] sm:$0x1]
      %v1032 = vlaneseq
      %v1033 = vshrl.u32 %v1032, 7
      %v1034 = vsub.s32 0, %v1033
      %v1035 = vrot.slane %v1030, %v1034
      %v1037 = vadd.f32 %v1029, %v1035
      %v1038 = vld [vmem:[%s8] sm:$0x1]
      %v1039 = vld [vmem:[%s9] sm:$0x1]
      %v1040 = vsel %vm399, %v1037, 0.0
      %1041 = vadd.xlane.f32.xlu0 %v1040
      %v1042 = vpop.xlane.xlu0 %1041
      %v1043 = vrcp.pop 32.0
      %v1044 = vmul.f32 %v1042, %v1043
      %v1045 = vsub.f32 %v1037, %v1044
      %v1046 = vmul.f32 %v1045, %v1045
      %v1047 = vsel %vm399, %v1046, 0.0
      %1048 = vadd.xlane.f32.xlu0 %v1047
      %v1049 = vpop.xlane.xlu0 %1048
      %v1050 = vmul.f32 %v1049, %v1043
      %v1051 = vadd.f32 %v1050, 1e-05
      %v1052 = vrsqrt.pop %v1051
      %v1053 = vmul.f32 %v1045, %v1052
      %v1055 = vlaneseq
      %v1056 = vshrl.u32 %v1055, 7
      %v1057 = vsub.s32 0, %v1056
      %v1058 = vrot.slane %v1038, %v1057
      %v1060 = vmul.f32 %v1053, %v1058
      %v1062 = vlaneseq
      %v1063 = vshrl.u32 %v1062, 7
      %v1064 = vsub.s32 0, %v1063
      %v1065 = vrot.slane %v1039, %v1064
      %v1067 = vadd.f32 %v1060, %v1065
      %1068 = vst.msk [vmem:[%s371] sm:$0xff] %vm399, %v1067
      %p1069 = scmp.lt.s32.totalorder %s21, 1
      %s1070 = scalar_select %p1069, %s21, 1
      %s1071 = smul.addr %s1070, 8
      %s1072 = scalar_lea.vmem %s10, %s1071
      // Predicated region
      $region61: #{transformer_model_forward.20} parent=59 // pred_check
        %p1073 = pneg %p259
      $region62: #{transformer_model_forward.20} parent=59 // pred_check_branch
        %1075 = sbr.rel (%p1073) target = $region64
      $region63: #{transformer_model_forward.20} parent=59 // pred_region
        _
      $region64: #{transformer_model_forward.20} parent=59 // pred_fallthru
        _
    $region60: #{transformer_model_forward.20} parent=5 // pred_fallthru
      _
    %p1076 = scmp.le.s32.totalorder 2, %s16
    // Predicated region
    $region65: #{transformer_model_forward.20} parent=5 // pred_check
      %p1077 = pneg %p1076
    $region66: #{transformer_model_forward.20} parent=5 // pred_check_branch
      %1079 = sbr.rel (%p1077) target = $region68
    $region67: #{transformer_model_forward.20} parent=5 // pred_region
      %s1080 = ssub.s32 %s16, 2
      // Predicated region
      $region69: #{transformer_model_forward.20} parent=67 // pred_check
        %p1081 = pneg %p265
      $region70: #{transformer_model_forward.20} parent=67 // pred_check_branch
        %1083 = sbr.rel (%p1081) target = $region72
      $region71: #{transformer_model_forward.20} parent=67 // pred_region
        %p1084 = scmp.lt.s32.totalorder %s22, 1
        %s1085 = scalar_select %p1084, %s22, 1
        %s1086 = smul.addr %s1085, 8
        %s1087 = scalar_lea.vmem %s10, %s1086
      $region72: #{transformer_model_forward.20} parent=67 // pred_fallthru
        _
    $region68: #{transformer_model_forward.20} parent=5 // pred_fallthru
      _
  $region6: #{transformer_model_forward.20} parent=0 // loop_footer
    %s20 = sadd.s32 1, %s16
  $region7: #{transformer_model_forward.20} parent=0 // loop_footer_branch
    %15 = sbr.rel target = $region3
  $region8: #{transformer_model_forward.20} parent=0 // loop_exit
    _

</llo_original>
